<compile_context>
chip_gen: v5e
topology: v5e:2x2
jax: 0.10.0
libtpu: 0.0.40
codegen_flags: <defaults>
</compile_context>

<pallas_src>
import functools
import math

import jax
import jax.numpy as jnp
from jax import lax
from jax.experimental import pallas as pl
from jax.experimental.pallas import tpu as pltpu

_LANE = 128
_MIB = 1024 * 1024
_VMEM_BUDGET = 40 * _MIB  # conservative: leaves headroom on v7x's 64 MiB VMEM


def _round_up(x, m):
    return ((x + m - 1) // m) * m


def _divisor_tiles(n_pad, cap):
    """Multiples of 128 that divide n_pad, largest first, capped at `cap`."""
    cap = max(_LANE, min(cap, n_pad))
    cap -= cap % _LANE
    return [t for t in range(cap, 0, -_LANE) if n_pad % t == 0]


def _vmem_limit(need_bytes):
    return int(min(max(need_bytes + 8 * _MIB, 32 * _MIB), 56 * _MIB))


# --------------------------------------------------------------------------
# Kernel 1: row-tiled MLP + classifier.  Produces log_softmax logits and the
# row-normalized features zn (both lane-padded; zn optionally bf16).
# --------------------------------------------------------------------------
def _gmlp_row_kernel(x_ref, w1_ref, b1_ref, g_ref, beta_ref, w2_ref, b2_ref,
                     wc_ref, bc_ref, hmask_ref, cneg_ref,
                     logits_ref, zn_ref, *, nhid):
    f32 = jnp.float32
    x = x_ref[...]

    # ---- fc1 + exact (erf) GELU ----
    h = jnp.dot(x, w1_ref[...], preferred_element_type=f32) + b1_ref[...]
    h = 0.5 * h * (1.0 + lax.erf(h * f32(1.0 / math.sqrt(2.0))))
    # Padded hidden columns of h are exactly zero (zero W1 cols, zero b1 pad).

    # ---- LayerNorm over the *real* nhid features (eps = 1e-6) ----
    inv_n = f32(1.0 / nhid)
    mean = jnp.sum(h, axis=-1, keepdims=True) * inv_n          # pads are zero
    centered = (h - mean) * hmask_ref[...]                     # zero the pads
    var = jnp.sum(centered * centered, axis=-1, keepdims=True) * inv_n
    h = centered * lax.rsqrt(var + f32(1e-6)) * g_ref[...] + beta_ref[...]
    # Padded hidden columns are zero again (beta pad = 0).

    # ---- dropout(p = 0) == identity ----

    # ---- fc2 ----
    z = jnp.dot(h.astype(w2_ref.dtype), w2_ref[...],
                preferred_element_type=f32) + b2_ref[...]
    # Padded columns of z are zero (zero W2 rows/cols, zero b2 pad).

    # ---- F.normalize(dim=1), eps = 1e-12 ----
    sumsq = jnp.sum(z * z, axis=-1, keepdims=True)
    zn = z * lax.rsqrt(jnp.maximum(sumsq, f32(1e-24)))
    zn_ref[...] = zn.astype(zn_ref.dtype)

    # ---- classifier + masked log_softmax over the real nclass columns ----
    logits = jnp.dot(z.astype(wc_ref.dtype), wc_ref[...],
                     preferred_element_type=f32) + bc_ref[...]
    logits = logits + cneg_ref[...]          # 0 on valid cols, -1e30 on pads
    m = jnp.max(logits, axis=-1, keepdims=True)
    shifted = logits - m
    sumexp = jnp.sum(jnp.exp(shifted), axis=-1, keepdims=True)
    logits_ref[...] = shifted - jnp.log(sumexp)   # padded cols junk, sliced off


# --------------------------------------------------------------------------
# Kernel 2: tiled Gram matrix  x_dis = zn @ zn.T  (NT contraction, no transpose)
# --------------------------------------------------------------------------
def _gram_kernel(a_ref, b_ref, out_ref):
    out_ref[...] = lax.dot_general(
        a_ref[...], b_ref[...], dimension_numbers=(((1,), (1,)), ((), ())),
        preferred_element_type=jnp.float32)


# --------------------------------------------------------------------------
# Tile selection (VMEM-budget driven)
# --------------------------------------------------------------------------
def _pick_row_tile(n_pad, per_row_bytes, budget):
    cap = n_pad // 2 if n_pad >= 2 * _LANE else n_pad   # >=2 grid steps (v7x 2 TCs)
    cap = min(cap, 1024)
    for t in _divisor_tiles(n_pad, cap):
        if t * per_row_bytes <= budget:
            return t
    return _LANE


def _pick_gram_tile(n_pad, nhid_p, zn_bytes):
    for t in _divisor_tiles(n_pad, 1024):
        need = 2 * t * t * 4 + 4 * t * nhid_p * zn_bytes
        if need <= _VMEM_BUDGET:
            return t
    return _LANE


# --------------------------------------------------------------------------
# Wrapper
# --------------------------------------------------------------------------
def gmlp_forward(x, params, *, bf16_gram=True, bf16_matmul=False):
    """x: [N, nfeat] float32. Returns (class_logits [N, nclass], x_dis [N, N])."""
    w1, b1, ln_g, ln_b, w2, b2, wc, bc = params
    n, nfeat = x.shape
    nhid = w1.shape[1]
    nclass = wc.shape[1]

    nfeat_p = _round_up(nfeat, _LANE)
    nhid_p = _round_up(nhid, _LANE)
    nclass_p = _round_up(nclass, _LANE)
    n_pad = _round_up(n, _LANE)          # pad N to 128 only (not to the tile)

    f32 = jnp.float32
    w_dt = jnp.bfloat16 if bf16_matmul else f32
    zn_dt = jnp.bfloat16 if bf16_gram else f32
    x_bytes = 2 if bf16_matmul else 4
    w_bytes = 2 if bf16_matmul else 4
    zn_bytes = 2 if bf16_gram else 4

    # ---- VMEM budgeting / tile choice ----
    resident_bytes = (w_bytes * (nfeat_p * nhid_p + nhid_p * nhid_p
                                 + nhid_p * nclass_p)
                      + 4 * (5 * nhid_p + 2 * nclass_p))
    per_row = (2 * (nfeat_p * x_bytes + 4 * nclass_p + zn_bytes * nhid_p)  # streams, x2 buf
               + 3 * 4 * nhid_p)                                           # live intermediates
    row_budget = max(_VMEM_BUDGET - resident_bytes, per_row * _LANE)
    tile_r = _pick_row_tile(n_pad, per_row, row_budget)
    tile_g = _pick_gram_tile(n_pad, nhid_p, zn_bytes)
    row_vmem = _vmem_limit(2 * resident_bytes + tile_r * per_row)
    gram_vmem = _vmem_limit(2 * tile_g * tile_g * 4 + 4 * tile_g * nhid_p * zn_bytes)

    # ---- pad inputs / parameters (jnp.pad: no extra scatter copy) ----
    def pad2(a, rows, cols, dt):
        return jnp.pad(a.astype(dt), ((0, rows - a.shape[0]), (0, cols - a.shape[1])))

    xp = pad2(x, n_pad, nfeat_p, w_dt)
    w1p = pad2(w1, nfeat_p, nhid_p, w_dt)
    w2p = pad2(w2, nhid_p, nhid_p, w_dt)
    wcp = pad2(wc, nhid_p, nclass_p, w_dt)
    b1p = pad2(b1, 1, nhid_p, f32)
    gp = pad2(ln_g, 1, nhid_p, f32)
    betap = pad2(ln_b, 1, nhid_p, f32)
    b2p = pad2(b2, 1, nhid_p, f32)
    bcp = pad2(bc, 1, nclass_p, f32)
    hmask = (jnp.arange(nhid_p) < nhid).astype(f32).reshape(1, nhid_p)
    cneg = jnp.where(jnp.arange(nclass_p) < nclass,
                     f32(0.0), f32(-1e30)).reshape(1, nclass_p)

    resident = lambda i: (0, 0)  # same block every grid step -> never re-DMA'd

    def _row_call(single_buffer_weights):
        if single_buffer_weights:
            rspec = lambda shape: pl.BlockSpec(shape, resident,
                                               pipeline_mode=pl.Buffered(1))
        else:
            rspec = lambda shape: pl.BlockSpec(shape, resident)
        return pl.pallas_call(
            functools.partial(_gmlp_row_kernel, nhid=nhid),
            out_shape=(
                jax.ShapeDtypeStruct((n_pad, nclass_p), f32),
                jax.ShapeDtypeStruct((n_pad, nhid_p), zn_dt),
            ),
            grid=(n_pad // tile_r,),
            in_specs=[
                pl.BlockSpec((tile_r, nfeat_p), lambda i: (i, 0)),
                rspec((nfeat_p, nhid_p)),
                rspec((1, nhid_p)),
                rspec((1, nhid_p)),
                rspec((1, nhid_p)),
                rspec((nhid_p, nhid_p)),
                rspec((1, nhid_p)),
                rspec((nhid_p, nclass_p)),
                rspec((1, nclass_p)),
                rspec((1, nhid_p)),
                rspec((1, nclass_p)),
            ],
            out_specs=(
                pl.BlockSpec((tile_r, nclass_p), lambda i: (i, 0)),
                pl.BlockSpec((tile_r, nhid_p), lambda i: (i, 0)),
            ),
            compiler_params=pltpu.CompilerParams(
                dimension_semantics=("parallel",),
                vmem_limit_bytes=row_vmem),
        )(xp, w1p, b1p, gp, betap, w2p, b2p, wcp, bcp, hmask, cneg)

    try:
        logits_p, zn = _row_call(True)
    except Exception:
        # pl.Buffered(1) not supported on this jax version -> default buffering.
        logits_p, zn = _row_call(False)

    x_dis_p = pl.pallas_call(
        _gram_kernel,
        out_shape=jax.ShapeDtypeStruct((n_pad, n_pad), f32),
        grid=(n_pad // tile_g, n_pad // tile_g),   # j innermost: i-block of zn reused
        in_specs=[
            pl.BlockSpec((tile_g, nhid_p), lambda i, j: (i, 0)),
            pl.BlockSpec((tile_g, nhid_p), lambda i, j: (j, 0)),
        ],
        out_specs=pl.BlockSpec((tile_g, tile_g), lambda i, j: (i, j)),
        compiler_params=pltpu.CompilerParams(
            dimension_semantics=("parallel", "parallel"),
            vmem_limit_bytes=gram_vmem),
    )(zn, zn)

    class_logits = logits_p[:n, :nclass]
    x_dis = x_dis_p[:n, :n]
    return class_logits, x_dis


# --------------------------------------------------------------------------
# Parameter init mirroring the PyTorch module (weights stored as [in, out]).
# --------------------------------------------------------------------------
def init_params(key, nfeat, nhid, nclass):
    k1, k2, k3, k4, k5, k6 = jax.random.split(key, 6)

    def xavier_uniform(k, fan_in, fan_out):
        bound = math.sqrt(6.0 / (fan_in + fan_out))
        return jax.random.uniform(k, (fan_in, fan_out), jnp.float32, -bound, bound)

    w1 = xavier_uniform(k1, nfeat, nhid)
    b1 = (1e-6 * jax.random.normal(k2, (1, nhid))).astype(jnp.float32)
    ln_g = jnp.ones((1, nhid), jnp.float32)     # LayerNorm defaults at init
    ln_b = jnp.zeros((1, nhid), jnp.float32)
    w2 = xavier_uniform(k3, nhid, nhid)
    b2 = (1e-6 * jax.random.normal(k4, (1, nhid))).astype(jnp.float32)

    cbound = 1.0 / math.sqrt(nhid)
    wc = jax.random.uniform(k5, (nhid, nclass), jnp.float32, -cbound, cbound)
    bc = jax.random.uniform(k6, (1, nclass), jnp.float32, -cbound, cbound)
    return (w1, b1, ln_g, ln_b, w2, b2, wc, bc)


if __name__ == "__main__":
    # Small, deliberately non-aligned shapes to exercise padding + tiling.
    N, NFEAT, NHID, NCLASS = 300, 96, 64, 7

    key = jax.random.PRNGKey(0)
    kx, kp = jax.random.split(key)
    x = jax.random.normal(kx, (N, NFEAT), jnp.float32)
    params = init_params(kp, NFEAT, NHID, NCLASS)

    class_logits, x_dis = gmlp_forward(x, params)   # bf16 Gram by default
    jax.block_until_ready((class_logits, x_dis))

    assert class_logits.shape == (N, NCLASS)
    assert x_dis.shape == (N, N)
    assert bool(jnp.all(jnp.isfinite(class_logits)))
    assert bool(jnp.all(jnp.isfinite(x_dis)))
    # log_softmax rows sum to 1 in prob space (f32 path, tight tolerance).
    assert bool(jnp.allclose(jnp.sum(jnp.exp(class_logits), axis=1), 1.0, atol=1e-4))
    # Gram diagonal of unit-norm rows is 1; bf16 operands give ~3 digits.
    assert bool(jnp.allclose(jnp.diagonal(x_dis), 1.0, atol=5e-3))
    print("KERNEL_OK")
</pallas_src>

<mosaic_0001>
module attributes {stable_mosaic.version = 11 : i64} {
  func.func @_gmlp_row_kernel(%arg0: i32, %arg1: memref<128x128xf32, #tpu.memory_space<vmem>>, %arg2: memref<128x128xf32, #tpu.memory_space<vmem>>, %arg3: memref<1x128xf32, #tpu.memory_space<vmem>>, %arg4: memref<1x128xf32, #tpu.memory_space<vmem>>, %arg5: memref<1x128xf32, #tpu.memory_space<vmem>>, %arg6: memref<128x128xf32, #tpu.memory_space<vmem>>, %arg7: memref<1x128xf32, #tpu.memory_space<vmem>>, %arg8: memref<128x128xf32, #tpu.memory_space<vmem>>, %arg9: memref<1x128xf32, #tpu.memory_space<vmem>>, %arg10: memref<1x128xf32, #tpu.memory_space<vmem>>, %arg11: memref<1x128xf32, #tpu.memory_space<vmem>>, %arg12: memref<128x128xf32, #tpu.memory_space<vmem>>, %arg13: memref<128x128xbf16, #tpu.memory_space<vmem>>) attributes {dimension_semantics = [#tpu.dimension_semantics<parallel>], iteration_bounds = array<i64: 3>, scalar_prefetch = 0 : i64, scratch_operands = 0 : i64, tpu.core_type = #tpu.core_type<tc>, window_params = [{transform_indices = @transform_0, window_bounds = array<i64: 128, 128>}, {pipeline_mode = #tpu.pipeline_mode<synchronous>, transform_indices = @transform_1, window_bounds = array<i64: 128, 128>}, {pipeline_mode = #tpu.pipeline_mode<synchronous>, transform_indices = @transform_2, window_bounds = array<i64: 1, 128>}, {pipeline_mode = #tpu.pipeline_mode<synchronous>, transform_indices = @transform_3, window_bounds = array<i64: 1, 128>}, {pipeline_mode = #tpu.pipeline_mode<synchronous>, transform_indices = @transform_4, window_bounds = array<i64: 1, 128>}, {pipeline_mode = #tpu.pipeline_mode<synchronous>, transform_indices = @transform_5, window_bounds = array<i64: 128, 128>}, {pipeline_mode = #tpu.pipeline_mode<synchronous>, transform_indices = @transform_6, window_bounds = array<i64: 1, 128>}, {pipeline_mode = #tpu.pipeline_mode<synchronous>, transform_indices = @transform_7, window_bounds = array<i64: 128, 128>}, {pipeline_mode = #tpu.pipeline_mode<synchronous>, transform_indices = @transform_8, window_bounds = array<i64: 1, 128>}, {pipeline_mode = #tpu.pipeline_mode<synchronous>, transform_indices = @transform_9, window_bounds = array<i64: 1, 128>}, {pipeline_mode = #tpu.pipeline_mode<synchronous>, transform_indices = @transform_10, window_bounds = array<i64: 1, 128>}, {transform_indices = @transform_11, window_bounds = array<i64: 128, 128>}, {transform_indices = @transform_12, window_bounds = array<i64: 128, 128>}]} {
    %c0 = arith.constant 0 : index
    %c0_0 = arith.constant 0 : index
    %0 = vector.load %arg1[%c0, %c0_0] : memref<128x128xf32, #tpu.memory_space<vmem>>, vector<128x128xf32>
    %c0_1 = arith.constant 0 : index
    %c0_2 = arith.constant 0 : index
    %1 = vector.load %arg2[%c0_1, %c0_2] : memref<128x128xf32, #tpu.memory_space<vmem>>, vector<128x128xf32>
    %cst = arith.constant dense<0.000000e+00> : vector<128x128xf32>
    %2 = tpu.matmul %0, %1, %cst {dimension_numbers = #tpu.dot_dimension_numbers<[1], [0], [0], [1], [0, 0, 1, 1], [], []>} : vector<128x128xf32>, vector<128x128xf32>, vector<128x128xf32> -> vector<128x128xf32>
    %c0_3 = arith.constant 0 : index
    %c0_4 = arith.constant 0 : index
    %3 = vector.load %arg3[%c0_3, %c0_4] : memref<1x128xf32, #tpu.memory_space<vmem>>, vector<1x128xf32>
    %4 = vector.broadcast %3 : vector<1x128xf32> to vector<128x128xf32>
    %5 = arith.addf %2, %4 : vector<128x128xf32>
    %cst_5 = arith.constant 5.000000e-01 : f32
    %6 = vector.broadcast %cst_5 : f32 to vector<128x128xf32>
    %7 = arith.mulf %6, %5 : vector<128x128xf32>
    %cst_6 = arith.constant 0.707106769 : f32
    %8 = vector.broadcast %cst_6 : f32 to vector<128x128xf32>
    %9 = arith.mulf %5, %8 : vector<128x128xf32>
    %10 = math.erf %9 : vector<128x128xf32>
    %cst_7 = arith.constant 1.000000e+00 : f32
    %11 = vector.broadcast %cst_7 : f32 to vector<128x128xf32>
    %12 = arith.addf %11, %10 : vector<128x128xf32>
    %13 = arith.mulf %7, %12 : vector<128x128xf32>
    %cst_8 = arith.constant dense<0.000000e+00> : vector<128xf32>
    %14 = vector.multi_reduction <add>, %13, %cst_8 [1] : vector<128x128xf32> to vector<128xf32>
    %15 = vector.shape_cast %14 : vector<128xf32> to vector<128x1xf32>
    %cst_9 = arith.constant 1.562500e-02 : f32
    %16 = vector.broadcast %cst_9 : f32 to vector<128x1xf32>
    %17 = arith.mulf %15, %16 : vector<128x1xf32>
    %18 = vector.broadcast %17 : vector<128x1xf32> to vector<128x128xf32>
    %19 = arith.subf %13, %18 : vector<128x128xf32>
    %c0_10 = arith.constant 0 : index
    %c0_11 = arith.constant 0 : index
    %20 = vector.load %arg10[%c0_10, %c0_11] : memref<1x128xf32, #tpu.memory_space<vmem>>, vector<1x128xf32>
    %21 = vector.broadcast %20 : vector<1x128xf32> to vector<128x128xf32>
    %22 = arith.mulf %19, %21 : vector<128x128xf32>
    %23 = arith.mulf %22, %22 : vector<128x128xf32>
    %cst_12 = arith.constant dense<0.000000e+00> : vector<128xf32>
    %24 = vector.multi_reduction <add>, %23, %cst_12 [1] : vector<128x128xf32> to vector<128xf32>
    %25 = vector.shape_cast %24 : vector<128xf32> to vector<128x1xf32>
    %cst_13 = arith.constant 1.562500e-02 : f32
    %26 = vector.broadcast %cst_13 : f32 to vector<128x1xf32>
    %27 = arith.mulf %25, %26 : vector<128x1xf32>
    %cst_14 = arith.constant 9.99999997E-7 : f32
    %28 = vector.broadcast %cst_14 : f32 to vector<128x1xf32>
    %29 = arith.addf %27, %28 : vector<128x1xf32>
    %30 = math.rsqrt %29 : vector<128x1xf32>
    %31 = vector.broadcast %30 : vector<128x1xf32> to vector<128x128xf32>
    %32 = arith.mulf %22, %31 : vector<128x128xf32>
    %c0_15 = arith.constant 0 : index
    %c0_16 = arith.constant 0 : index
    %33 = vector.load %arg4[%c0_15, %c0_16] : memref<1x128xf32, #tpu.memory_space<vmem>>, vector<1x128xf32>
    %34 = vector.broadcast %33 : vector<1x128xf32> to vector<128x128xf32>
    %35 = arith.mulf %32, %34 : vector<128x128xf32>
    %c0_17 = arith.constant 0 : index
    %c0_18 = arith.constant 0 : index
    %36 = vector.load %arg5[%c0_17, %c0_18] : memref<1x128xf32, #tpu.memory_space<vmem>>, vector<1x128xf32>
    %37 = vector.broadcast %36 : vector<1x128xf32> to vector<128x128xf32>
    %38 = arith.addf %35, %37 : vector<128x128xf32>
    %c0_19 = arith.constant 0 : index
    %c0_20 = arith.constant 0 : index
    %39 = vector.load %arg6[%c0_19, %c0_20] : memref<128x128xf32, #tpu.memory_space<vmem>>, vector<128x128xf32>
    %cst_21 = arith.constant dense<0.000000e+00> : vector<128x128xf32>
    %40 = tpu.matmul %38, %39, %cst_21 {dimension_numbers = #tpu.dot_dimension_numbers<[1], [0], [0], [1], [0, 0, 1, 1], [], []>} : vector<128x128xf32>, vector<128x128xf32>, vector<128x128xf32> -> vector<128x128xf32>
    %c0_22 = arith.constant 0 : index
    %c0_23 = arith.constant 0 : index
    %41 = vector.load %arg7[%c0_22, %c0_23] : memref<1x128xf32, #tpu.memory_space<vmem>>, vector<1x128xf32>
    %42 = vector.broadcast %41 : vector<1x128xf32> to vector<128x128xf32>
    %43 = arith.addf %40, %42 : vector<128x128xf32>
    %44 = arith.mulf %43, %43 : vector<128x128xf32>
    %cst_24 = arith.constant dense<0.000000e+00> : vector<128xf32>
    %45 = vector.multi_reduction <add>, %44, %cst_24 [1] : vector<128x128xf32> to vector<128xf32>
    %46 = vector.shape_cast %45 : vector<128xf32> to vector<128x1xf32>
    %cst_25 = arith.constant 1.000000e-24 : f32
    %47 = vector.broadcast %cst_25 : f32 to vector<128x1xf32>
    %48 = arith.maximumf %46, %47 : vector<128x1xf32>
    %49 = math.rsqrt %48 : vector<128x1xf32>
    %50 = vector.broadcast %49 : vector<128x1xf32> to vector<128x128xf32>
    %51 = arith.mulf %43, %50 : vector<128x128xf32>
    %52 = arith.truncf %51 : vector<128x128xf32> to vector<128x128xbf16>
    %c0_26 = arith.constant 0 : index
    %c0_27 = arith.constant 0 : index
    %53 = vector.load %arg13[%c0_26, %c0_27] : memref<128x128xbf16, #tpu.memory_space<vmem>>, vector<128x128xbf16>
    tpu.vector_store %arg13[%c0_26, %c0_27], %52 {strides = array<i32>} : memref<128x128xbf16, #tpu.memory_space<vmem>>, vector<128x128xbf16>,
    %c0_28 = arith.constant 0 : index
    %c0_29 = arith.constant 0 : index
    %54 = vector.load %arg8[%c0_28, %c0_29] : memref<128x128xf32, #tpu.memory_space<vmem>>, vector<128x128xf32>
    %cst_30 = arith.constant dense<0.000000e+00> : vector<128x128xf32>
    %55 = tpu.matmul %43, %54, %cst_30 {dimension_numbers = #tpu.dot_dimension_numbers<[1], [0], [0], [1], [0, 0, 1, 1], [], []>} : vector<128x128xf32>, vector<128x128xf32>, vector<128x128xf32> -> vector<128x128xf32>
    %c0_31 = arith.constant 0 : index
    %c0_32 = arith.constant 0 : index
    %56 = vector.load %arg9[%c0_31, %c0_32] : memref<1x128xf32, #tpu.memory_space<vmem>>, vector<1x128xf32>
    %57 = vector.broadcast %56 : vector<1x128xf32> to vector<128x128xf32>
    %58 = arith.addf %55, %57 : vector<128x128xf32>
    %c0_33 = arith.constant 0 : index
    %c0_34 = arith.constant 0 : index
    %59 = vector.load %arg11[%c0_33, %c0_34] : memref<1x128xf32, #tpu.memory_space<vmem>>, vector<1x128xf32>
    %60 = vector.broadcast %59 : vector<1x128xf32> to vector<128x128xf32>
    %61 = arith.addf %58, %60 : vector<128x128xf32>
    %cst_35 = arith.constant dense<0xFF800000> : vector<128xf32>
    %62 = vector.multi_reduction <maximumf>, %61, %cst_35 [1] : vector<128x128xf32> to vector<128xf32>
    %63 = vector.shape_cast %62 : vector<128xf32> to vector<128x1xf32>
    %64 = vector.broadcast %63 : vector<128x1xf32> to vector<128x128xf32>
    %65 = arith.subf %61, %64 : vector<128x128xf32>
    %66 = math.exp %65 : vector<128x128xf32>
    %cst_36 = arith.constant dense<0.000000e+00> : vector<128xf32>
    %67 = vector.multi_reduction <add>, %66, %cst_36 [1] : vector<128x128xf32> to vector<128xf32>
    %68 = vector.shape_cast %67 : vector<128xf32> to vector<128x1xf32>
    %69 = math.log %68 : vector<128x1xf32>
    %70 = vector.broadcast %69 : vector<128x1xf32> to vector<128x128xf32>
    %71 = arith.subf %65, %70 : vector<128x128xf32>
    %c0_37 = arith.constant 0 : index
    %c0_38 = arith.constant 0 : index
    %72 = vector.load %arg12[%c0_37, %c0_38] : memref<128x128xf32, #tpu.memory_space<vmem>>, vector<128x128xf32>
    tpu.vector_store %arg12[%c0_37, %c0_38], %71 {strides = array<i32>} : memref<128x128xf32, #tpu.memory_space<vmem>>, vector<128x128xf32>,
    return
  }
  func.func @transform_0(%arg0: i32) -> (i32, i32) {
    %c0_i32 = arith.constant 0 : i32
    %c0_i32_0 = arith.constant 0 : i32
    return %arg0, %c0_i32 : i32, i32
  }
  func.func @transform_1(%arg0: i32) -> (i32, i32) {
    %c0_i32 = arith.constant 0 : i32
    %c0_i32_0 = arith.constant 0 : i32
    %c0_i32_1 = arith.constant 0 : i32
    return %c0_i32, %c0_i32_0 : i32, i32
  }
  func.func @transform_2(%arg0: i32) -> (i32, i32) {
    %c0_i32 = arith.constant 0 : i32
    %c0_i32_0 = arith.constant 0 : i32
    %c0_i32_1 = arith.constant 0 : i32
    return %c0_i32, %c0_i32_0 : i32, i32
  }
  func.func @transform_3(%arg0: i32) -> (i32, i32) {
    %c0_i32 = arith.constant 0 : i32
    %c0_i32_0 = arith.constant 0 : i32
    %c0_i32_1 = arith.constant 0 : i32
    return %c0_i32, %c0_i32_0 : i32, i32
  }
  func.func @transform_4(%arg0: i32) -> (i32, i32) {
    %c0_i32 = arith.constant 0 : i32
    %c0_i32_0 = arith.constant 0 : i32
    %c0_i32_1 = arith.constant 0 : i32
    return %c0_i32, %c0_i32_0 : i32, i32
  }
  func.func @transform_5(%arg0: i32) -> (i32, i32) {
    %c0_i32 = arith.constant 0 : i32
    %c0_i32_0 = arith.constant 0 : i32
    %c0_i32_1 = arith.constant 0 : i32
    return %c0_i32, %c0_i32_0 : i32, i32
  }
  func.func @transform_6(%arg0: i32) -> (i32, i32) {
    %c0_i32 = arith.constant 0 : i32
    %c0_i32_0 = arith.constant 0 : i32
    %c0_i32_1 = arith.constant 0 : i32
    return %c0_i32, %c0_i32_0 : i32, i32
  }
  func.func @transform_7(%arg0: i32) -> (i32, i32) {
    %c0_i32 = arith.constant 0 : i32
    %c0_i32_0 = arith.constant 0 : i32
    %c0_i32_1 = arith.constant 0 : i32
    return %c0_i32, %c0_i32_0 : i32, i32
  }
  func.func @transform_8(%arg0: i32) -> (i32, i32) {
    %c0_i32 = arith.constant 0 : i32
    %c0_i32_0 = arith.constant 0 : i32
    %c0_i32_1 = arith.constant 0 : i32
    return %c0_i32, %c0_i32_0 : i32, i32
  }
  func.func @transform_9(%arg0: i32) -> (i32, i32) {
    %c0_i32 = arith.constant 0 : i32
    %c0_i32_0 = arith.constant 0 : i32
    %c0_i32_1 = arith.constant 0 : i32
    return %c0_i32, %c0_i32_0 : i32, i32
  }
  func.func @transform_10(%arg0: i32) -> (i32, i32) {
    %c0_i32 = arith.constant 0 : i32
    %c0_i32_0 = arith.constant 0 : i32
    %c0_i32_1 = arith.constant 0 : i32
    return %c0_i32, %c0_i32_0 : i32, i32
  }
  func.func @transform_11(%arg0: i32) -> (i32, i32) {
    %c0_i32 = arith.constant 0 : i32
    %c0_i32_0 = arith.constant 0 : i32
    return %arg0, %c0_i32 : i32, i32
  }
  func.func @transform_12(%arg0: i32) -> (i32, i32) {
    %c0_i32 = arith.constant 0 : i32
    %c0_i32_0 = arith.constant 0 : i32
    return %arg0, %c0_i32 : i32, i32
  }
}

module attributes {stable_mosaic.version = 11 : i64} {
  func.func @_gmlp_row_kernel(%arg0: i32, %arg1: memref<128x128xf32, #tpu.memory_space<vmem>>, %arg2: memref<128x128xf32, #tpu.memory_space<vmem>>, %arg3: memref<1x128xf32, #tpu.memory_space<vmem>>, %arg4: memref<1x128xf32, #tpu.memory_space<vmem>>, %arg5: memref<1x128xf32, #tpu.memory_space<vmem>>, %arg6: memref<128x128xf32, #tpu.memory_space<vmem>>, %arg7: memref<1x128xf32, #tpu.memory_space<vmem>>, %arg8: memref<128x128xf32, #tpu.memory_space<vmem>>, %arg9: memref<1x128xf32, #tpu.memory_space<vmem>>, %arg10: memref<1x128xf32, #tpu.memory_space<vmem>>, %arg11: memref<1x128xf32, #tpu.memory_space<vmem>>, %arg12: memref<128x128xf32, #tpu.memory_space<vmem>>, %arg13: memref<128x128xbf16, #tpu.memory_space<vmem>>) attributes {dimension_semantics = [#tpu.dimension_semantics<parallel>], iteration_bounds = array<i64: 3>, scalar_prefetch = 0 : i64, scratch_operands = 0 : i64, tpu.core_type = #tpu.core_type<tc>, window_params = [{transform_indices = @transform_0, window_bounds = array<i64: 128, 128>}, {pipeline_mode = #tpu.pipeline_mode<synchronous>, transform_indices = @transform_1, window_bounds = array<i64: 128, 128>}, {pipeline_mode = #tpu.pipeline_mode<synchronous>, transform_indices = @transform_2, window_bounds = array<i64: 1, 128>}, {pipeline_mode = #tpu.pipeline_mode<synchronous>, transform_indices = @transform_3, window_bounds = array<i64: 1, 128>}, {pipeline_mode = #tpu.pipeline_mode<synchronous>, transform_indices = @transform_4, window_bounds = array<i64: 1, 128>}, {pipeline_mode = #tpu.pipeline_mode<synchronous>, transform_indices = @transform_5, window_bounds = array<i64: 128, 128>}, {pipeline_mode = #tpu.pipeline_mode<synchronous>, transform_indices = @transform_6, window_bounds = array<i64: 1, 128>}, {pipeline_mode = #tpu.pipeline_mode<synchronous>, transform_indices = @transform_7, window_bounds = array<i64: 128, 128>}, {pipeline_mode = #tpu.pipeline_mode<synchronous>, transform_indices = @transform_8, window_bounds = array<i64: 1, 128>}, {pipeline_mode = #tpu.pipeline_mode<synchronous>, transform_indices = @transform_9, window_bounds = array<i64: 1, 128>}, {pipeline_mode = #tpu.pipeline_mode<synchronous>, transform_indices = @transform_10, window_bounds = array<i64: 1, 128>}, {transform_indices = @transform_11, window_bounds = array<i64: 128, 128>}, {transform_indices = @transform_12, window_bounds = array<i64: 128, 128>}]} {
    %c0 = arith.constant 0 : index
    %c0_0 = arith.constant 0 : index
    %0 = vector.load %arg1[%c0, %c0_0] : memref<128x128xf32, #tpu.memory_space<vmem>>, vector<128x128xf32>
    %c0_1 = arith.constant 0 : index
    %c0_2 = arith.constant 0 : index
    %1 = vector.load %arg2[%c0_1, %c0_2] : memref<128x128xf32, #tpu.memory_space<vmem>>, vector<128x128xf32>
    %cst = arith.constant dense<0.000000e+00> : vector<128x128xf32>
    %2 = tpu.matmul %0, %1, %cst {dimension_numbers = #tpu.dot_dimension_numbers<[1], [0], [0], [1], [0, 0, 1, 1], [], []>} : vector<128x128xf32>, vector<128x128xf32>, vector<128x128xf32> -> vector<128x128xf32>
    %c0_3 = arith.constant 0 : index
    %c0_4 = arith.constant 0 : index
    %3 = vector.load %arg3[%c0_3, %c0_4] : memref<1x128xf32, #tpu.memory_space<vmem>>, vector<1x128xf32>
    %4 = vector.broadcast %3 : vector<1x128xf32> to vector<128x128xf32>
    %5 = arith.addf %2, %4 : vector<128x128xf32>
    %cst_5 = arith.constant 5.000000e-01 : f32
    %6 = vector.broadcast %cst_5 : f32 to vector<128x128xf32>
    %7 = arith.mulf %6, %5 : vector<128x128xf32>
    %cst_6 = arith.constant 0.707106769 : f32
    %8 = vector.broadcast %cst_6 : f32 to vector<128x128xf32>
    %9 = arith.mulf %5, %8 : vector<128x128xf32>
    %10 = math.erf %9 : vector<128x128xf32>
    %cst_7 = arith.constant 1.000000e+00 : f32
    %11 = vector.broadcast %cst_7 : f32 to vector<128x128xf32>
    %12 = arith.addf %11, %10 : vector<128x128xf32>
    %13 = arith.mulf %7, %12 : vector<128x128xf32>
    %cst_8 = arith.constant dense<0.000000e+00> : vector<128xf32>
    %14 = vector.multi_reduction <add>, %13, %cst_8 [1] : vector<128x128xf32> to vector<128xf32>
    %15 = vector.shape_cast %14 : vector<128xf32> to vector<128x1xf32>
    %cst_9 = arith.constant 1.562500e-02 : f32
    %16 = vector.broadcast %cst_9 : f32 to vector<128x1xf32>
    %17 = arith.mulf %15, %16 : vector<128x1xf32>
    %18 = vector.broadcast %17 : vector<128x1xf32> to vector<128x128xf32>
    %19 = arith.subf %13, %18 : vector<128x128xf32>
    %c0_10 = arith.constant 0 : index
    %c0_11 = arith.constant 0 : index
    %20 = vector.load %arg10[%c0_10, %c0_11] : memref<1x128xf32, #tpu.memory_space<vmem>>, vector<1x128xf32>
    %21 = vector.broadcast %20 : vector<1x128xf32> to vector<128x128xf32>
    %22 = arith.mulf %19, %21 : vector<128x128xf32>
    %23 = arith.mulf %22, %22 : vector<128x128xf32>
    %cst_12 = arith.constant dense<0.000000e+00> : vector<128xf32>
    %24 = vector.multi_reduction <add>, %23, %cst_12 [1] : vector<128x128xf32> to vector<128xf32>
    %25 = vector.shape_cast %24 : vector<128xf32> to vector<128x1xf32>
    %cst_13 = arith.constant 1.562500e-02 : f32
    %26 = vector.broadcast %cst_13 : f32 to vector<128x1xf32>
    %27 = arith.mulf %25, %26 : vector<128x1xf32>
    %cst_14 = arith.constant 9.99999997E-7 : f32
    %28 = vector.broadcast %cst_14 : f32 to vector<128x1xf32>
    %29 = arith.addf %27, %28 : vector<128x1xf32>
    %30 = math.rsqrt %29 : vector<128x1xf32>
    %31 = vector.broadcast %30 : vector<128x1xf32> to vector<128x128xf32>
    %32 = arith.mulf %22, %31 : vector<128x128xf32>
    %c0_15 = arith.constant 0 : index
    %c0_16 = arith.constant 0 : index
    %33 = vector.load %arg4[%c0_15, %c0_16] : memref<1x128xf32, #tpu.memory_space<vmem>>, vector<1x128xf32>
    %34 = vector.broadcast %33 : vector<1x128xf32> to vector<128x128xf32>
    %35 = arith.mulf %32, %34 : vector<128x128xf32>
    %c0_17 = arith.constant 0 : index
    %c0_18 = arith.constant 0 : index
    %36 = vector.load %arg5[%c0_17, %c0_18] : memref<1x128xf32, #tpu.memory_space<vmem>>, vector<1x128xf32>
    %37 = vector.broadcast %36 : vector<1x128xf32> to vector<128x128xf32>
    %38 = arith.addf %35, %37 : vector<128x128xf32>
    %c0_19 = arith.constant 0 : index
    %c0_20 = arith.constant 0 : index
    %39 = vector.load %arg6[%c0_19, %c0_20] : memref<128x128xf32, #tpu.memory_space<vmem>>, vector<128x128xf32>
    %cst_21 = arith.constant dense<0.000000e+00> : vector<128x128xf32>
    %40 = tpu.matmul %38, %39, %cst_21 {dimension_numbers = #tpu.dot_dimension_numbers<[1], [0], [0], [1], [0, 0, 1, 1], [], []>} : vector<128x128xf32>, vector<128x128xf32>, vector<128x128xf32> -> vector<128x128xf32>
    %c0_22 = arith.constant 0 : index
    %c0_23 = arith.constant 0 : index
    %41 = vector.load %arg7[%c0_22, %c0_23] : memref<1x128xf32, #tpu.memory_space<vmem>>, vector<1x128xf32>
    %42 = vector.broadcast %41 : vector<1x128xf32> to vector<128x128xf32>
    %43 = arith.addf %40, %42 : vector<128x128xf32>
    %44 = arith.mulf %43, %43 : vector<128x128xf32>
    %cst_24 = arith.constant dense<0.000000e+00> : vector<128xf32>
    %45 = vector.multi_reduction <add>, %44, %cst_24 [1] : vector<128x128xf32> to vector<128xf32>
    %46 = vector.shape_cast %45 : vector<128xf32> to vector<128x1xf32>
    %cst_25 = arith.constant 1.000000e-24 : f32
    %47 = vector.broadcast %cst_25 : f32 to vector<128x1xf32>
    %48 = arith.maximumf %46, %47 : vector<128x1xf32>
    %49 = math.rsqrt %48 : vector<128x1xf32>
    %50 = vector.broadcast %49 : vector<128x1xf32> to vector<128x128xf32>
    %51 = arith.mulf %43, %50 : vector<128x128xf32>
    %52 = arith.truncf %51 : vector<128x128xf32> to vector<128x128xbf16>
    %c0_26 = arith.constant 0 : index
    %c0_27 = arith.constant 0 : index
    %53 = vector.load %arg13[%c0_26, %c0_27] : memref<128x128xbf16, #tpu.memory_space<vmem>>, vector<128x128xbf16>
    tpu.vector_store %arg13[%c0_26, %c0_27], %52 {strides = array<i32>} : memref<128x128xbf16, #tpu.memory_space<vmem>>, vector<128x128xbf16>,
    %c0_28 = arith.constant 0 : index
    %c0_29 = arith.constant 0 : index
    %54 = vector.load %arg8[%c0_28, %c0_29] : memref<128x128xf32, #tpu.memory_space<vmem>>, vector<128x128xf32>
    %cst_30 = arith.constant dense<0.000000e+00> : vector<128x128xf32>
    %55 = tpu.matmul %43, %54, %cst_30 {dimension_numbers = #tpu.dot_dimension_numbers<[1], [0], [0], [1], [0, 0, 1, 1], [], []>} : vector<128x128xf32>, vector<128x128xf32>, vector<128x128xf32> -> vector<128x128xf32>
    %c0_31 = arith.constant 0 : index
    %c0_32 = arith.constant 0 : index
    %56 = vector.load %arg9[%c0_31, %c0_32] : memref<1x128xf32, #tpu.memory_space<vmem>>, vector<1x128xf32>
    %57 = vector.broadcast %56 : vector<1x128xf32> to vector<128x128xf32>
    %58 = arith.addf %55, %57 : vector<128x128xf32>
    %c0_33 = arith.constant 0 : index
    %c0_34 = arith.constant 0 : index
    %59 = vector.load %arg11[%c0_33, %c0_34] : memref<1x128xf32, #tpu.memory_space<vmem>>, vector<1x128xf32>
    %60 = vector.broadcast %59 : vector<1x128xf32> to vector<128x128xf32>
    %61 = arith.addf %58, %60 : vector<128x128xf32>
    %cst_35 = arith.constant dense<0xFF800000> : vector<128xf32>
    %62 = vector.multi_reduction <maximumf>, %61, %cst_35 [1] : vector<128x128xf32> to vector<128xf32>
    %63 = vector.shape_cast %62 : vector<128xf32> to vector<128x1xf32>
    %64 = vector.broadcast %63 : vector<128x1xf32> to vector<128x128xf32>
    %65 = arith.subf %61, %64 : vector<128x128xf32>
    %66 = math.exp %65 : vector<128x128xf32>
    %cst_36 = arith.constant dense<0.000000e+00> : vector<128xf32>
    %67 = vector.multi_reduction <add>, %66, %cst_36 [1] : vector<128x128xf32> to vector<128xf32>
    %68 = vector.shape_cast %67 : vector<128xf32> to vector<128x1xf32>
    %69 = math.log %68 : vector<128x1xf32>
    %70 = vector.broadcast %69 : vector<128x1xf32> to vector<128x128xf32>
    %71 = arith.subf %65, %70 : vector<128x128xf32>
    %c0_37 = arith.constant 0 : index
    %c0_38 = arith.constant 0 : index
    %72 = vector.load %arg12[%c0_37, %c0_38] : memref<128x128xf32, #tpu.memory_space<vmem>>, vector<128x128xf32>
    tpu.vector_store %arg12[%c0_37, %c0_38], %71 {strides = array<i32>} : memref<128x128xf32, #tpu.memory_space<vmem>>, vector<128x128xf32>,
    return
  }
  func.func @transform_0(%arg0: i32) -> (i32, i32) {
    %c0_i32 = arith.constant 0 : i32
    %c0_i32_0 = arith.constant 0 : i32
    return %arg0, %c0_i32 : i32, i32
  }
  func.func @transform_1(%arg0: i32) -> (i32, i32) {
    %c0_i32 = arith.constant 0 : i32
    %c0_i32_0 = arith.constant 0 : i32
    %c0_i32_1 = arith.constant 0 : i32
    return %c0_i32, %c0_i32_0 : i32, i32
  }
  func.func @transform_2(%arg0: i32) -> (i32, i32) {
    %c0_i32 = arith.constant 0 : i32
    %c0_i32_0 = arith.constant 0 : i32
    %c0_i32_1 = arith.constant 0 : i32
    return %c0_i32, %c0_i32_0 : i32, i32
  }
  func.func @transform_3(%arg0: i32) -> (i32, i32) {
    %c0_i32 = arith.constant 0 : i32
    %c0_i32_0 = arith.constant 0 : i32
    %c0_i32_1 = arith.constant 0 : i32
    return %c0_i32, %c0_i32_0 : i32, i32
  }
  func.func @transform_4(%arg0: i32) -> (i32, i32) {
    %c0_i32 = arith.constant 0 : i32
    %c0_i32_0 = arith.constant 0 : i32
    %c0_i32_1 = arith.constant 0 : i32
    return %c0_i32, %c0_i32_0 : i32, i32
  }
  func.func @transform_5(%arg0: i32) -> (i32, i32) {
    %c0_i32 = arith.constant 0 : i32
    %c0_i32_0 = arith.constant 0 : i32
    %c0_i32_1 = arith.constant 0 : i32
    return %c0_i32, %c0_i32_0 : i32, i32
  }
  func.func @transform_6(%arg0: i32) -> (i32, i32) {
    %c0_i32 = arith.constant 0 : i32
    %c0_i32_0 = arith.constant 0 : i32
    %c0_i32_1 = arith.constant 0 : i32
    return %c0_i32, %c0_i32_0 : i32, i32
  }
  func.func @transform_7(%arg0: i32) -> (i32, i32) {
    %c0_i32 = arith.constant 0 : i32
    %c0_i32_0 = arith.constant 0 : i32
    %c0_i32_1 = arith.constant 0 : i32
    return %c0_i32, %c0_i32_0 : i32, i32
  }
  func.func @transform_8(%arg0: i32) -> (i32, i32) {
    %c0_i32 = arith.constant 0 : i32
    %c0_i32_0 = arith.constant 0 : i32
    %c0_i32_1 = arith.constant 0 : i32
    return %c0_i32, %c0_i32_0 : i32, i32
  }
  func.func @transform_9(%arg0: i32) -> (i32, i32) {
    %c0_i32 = arith.constant 0 : i32
    %c0_i32_0 = arith.constant 0 : i32
    %c0_i32_1 = arith.constant 0 : i32
    return %c0_i32, %c0_i32_0 : i32, i32
  }
  func.func @transform_10(%arg0: i32) -> (i32, i32) {
    %c0_i32 = arith.constant 0 : i32
    %c0_i32_0 = arith.constant 0 : i32
    %c0_i32_1 = arith.constant 0 : i32
    return %c0_i32, %c0_i32_0 : i32, i32
  }
  func.func @transform_11(%arg0: i32) -> (i32, i32) {
    %c0_i32 = arith.constant 0 : i32
    %c0_i32_0 = arith.constant 0 : i32
    return %arg0, %c0_i32 : i32, i32
  }
  func.func @transform_12(%arg0: i32) -> (i32, i32) {
    %c0_i32 = arith.constant 0 : i32
    %c0_i32_0 = arith.constant 0 : i32
    return %arg0, %c0_i32 : i32, i32
  }
}

</mosaic_0001>

<llo_original>
// kernel: tpu_custom_call.1
$region0: #{tpu_custom_call.1}
  #allocation0 [shape = 'u32[]', space=smem, size = 0x4, offset = 0x4, fixed_abs, tag = 'smem constant byte address 0x4 - core index']
  #allocation1 [shape = 'u32[72,128]{1,0:T(1,128)}', space=vmem, size = 0x9000, scoped, tag = 'internal scratch']
  %s0 = inlined_call_operand.hbm [shape: f32[384,128], index: 0, kind: input, shape index: {}]
  %s1 = inlined_call_operand.hbm [shape: f32[128,128], index: 1, kind: input, shape index: {}]
  %s2 = inlined_call_operand.vmem [shape: f32[1,128], index: 2, kind: input, shape index: {}]
  %s3 = inlined_call_operand.vmem [shape: f32[1,128], index: 3, kind: input, shape index: {}]
  %s4 = inlined_call_operand.vmem [shape: f32[1,128], index: 4, kind: input, shape index: {}]
  %s5 = inlined_call_operand.hbm [shape: f32[128,128], index: 5, kind: input, shape index: {}]
  %s6 = inlined_call_operand.vmem [shape: f32[1,128], index: 6, kind: input, shape index: {}]
  %s7 = inlined_call_operand.hbm [shape: f32[128,128], index: 7, kind: input, shape index: {}]
  %s8 = inlined_call_operand.vmem [shape: f32[1,128], index: 8, kind: input, shape index: {}]
  %s9 = inlined_call_operand.vmem [shape: f32[1,128], index: 9, kind: input, shape index: {}]
  %s10 = inlined_call_operand.vmem [shape: f32[1,128], index: 10, kind: input, shape index: {}]
  %s11 = inlined_call_operand.hbm [shape: f32[384,128], index: 11, kind: output, shape index: {0}]
  %s12 = inlined_call_operand.hbm [shape: bf16[384,128], index: 12, kind: output, shape index: {1}]
  %13 = xla_tuple %s11, %s12
  %s14 = sld [smem:[#allocation0]]
  $region101: #{tpu_custom_call.1} parent=0
    _
  %s16 = ssub.s32 1, %s14
  %s17 = scalar_select 0, %s16, %s14
  $region1: #{tpu_custom_call.1} parent=0
    #allocation2 [shape = 'u8[131072]{0}', space=vmem, size = 0x20000, scoped, tag = 'input window, operand 0']
    #allocation3 [shape = 's32[2]{0}', space=sflag, size = 0x8, scoped, tag = 'scoped memory for tpu_custom_call.1']
    #allocation4 [shape = 's32[2]{0}', space=sflag, size = 0x8, scoped, tag = 'scoped memory for tpu_custom_call.1']
    #allocation5 [shape = 'u8[65536]{0}', space=vmem, size = 0x10000, scoped, tag = 'input window, operand 1, single buffered']
    #allocation6 [shape = 's32[1]{0}', space=sflag, size = 0x4, scoped, tag = 'scoped memory for tpu_custom_call.1']
    #allocation7 [shape = 'u8[65536]{0}', space=vmem, size = 0x10000, scoped, tag = 'input window, operand 5, single buffered']
    #allocation8 [shape = 'u8[65536]{0}', space=vmem, size = 0x10000, scoped, tag = 'input window, operand 7, single buffered']
    #allocation9 [shape = 's32[1]{0}', space=sflag, size = 0x4, scoped, tag = 'scoped memory for tpu_custom_call.1']
    #allocation10 [shape = 'u8[131072]{0}', space=vmem, size = 0x20000, scoped, tag = 'output window, operand 0']
    #allocation11 [shape = 'u8[65536]{0}', space=vmem, size = 0x10000, scoped, tag = 'output window, operand 1']
    #allocation12 [shape = 's32[2]{0}', space=sflag, size = 0x8, scoped, tag = 'scoped memory for tpu_custom_call.1']
    %18 = vsyncpa [#allocation3], 0
    %s19 = scalar_lea.sflag [#allocation3], 1
    %20 = vsyncpa %s19, 0
    %21 = vsyncpa [#allocation6], 0
    %22 = vsyncpa [#allocation9], 0
    %23 = vsyncpa [#allocation4], 0
    %s24 = scalar_lea.sflag [#allocation4], 1
    %25 = vsyncpa %s24, 0
    %26 = vsyncpa [#allocation12], 0
    %s27 = scalar_lea.sflag [#allocation12], 1
    %28 = vsyncpa %s27, 0
    loop: start=0, step=1, limit=5
    $region2: #{tpu_custom_call.1} parent=1 // loop_pre_header
      _
    $region3: #{tpu_custom_call.1} parent=1 // loop_header
      %s30 = sphi 0, %s34
      %p31 = scmp.ge.s32.totalorder %s30, 5
      %s40 = sphi 0, %s42
      %s43 = sphi 0, %s40
      %s44 = sphi 0, %s43
      %s60 = sphi 0, %s44
      %s64 = sphi 0, %s64
      %s66 = sphi 0, %s64
      %s67 = sphi 0, %s66
      %s81 = sphi 0, %s67
      %s85 = sphi 0, %s85
      %s87 = sphi 0, %s85
      %s88 = sphi 0, %s87
      %s102 = sphi 0, %s88
      %s106 = sphi 0, %s106
      %s108 = sphi 0, %s106
      %s109 = sphi 0, %s108
      %s123 = sphi 0, %s109
      %s127 = sphi 0, %s127
      %s129 = sphi 0, %s127
      %s130 = sphi 0, %s129
      %s144 = sphi 0, %s130
      %s148 = sphi 0, %s148
      %s150 = sphi 0, %s148
      %s151 = sphi 0, %s150
      %s165 = sphi 0, %s151
      %s169 = sphi 0, %s169
      %s171 = sphi 0, %s169
      %s172 = sphi 0, %s171
      %s186 = sphi 0, %s172
      %s190 = sphi 0, %s190
      %s192 = sphi 0, %s190
      %s193 = sphi 0, %s192
      %s207 = sphi 0, %s193
      %s211 = sphi 0, %s211
      %s213 = sphi 0, %s211
      %s214 = sphi 0, %s213
      %s228 = sphi 0, %s214
      %s232 = sphi 0, %s232
      %s234 = sphi 0, %s232
      %s235 = sphi 0, %s234
      %s249 = sphi 0, %s235
      %s253 = sphi 0, %s253
      %s255 = sphi 0, %s253
      %s256 = sphi 0, %s255
      %s270 = sphi 0, %s256
      %s276 = sphi 0, %s278
      %s279 = sphi 0, %s276
      %s280 = sphi 0, %s279
      %s296 = sphi 0, %s280
      %s302 = sphi 0, %s304
      %s305 = sphi 0, %s302
      %s306 = sphi 0, %s305
      %s322 = sphi 0, %s306
    $region4: #{tpu_custom_call.1} parent=1 // loop_header_branch
      %33 = sbr.rel (%p31) target = $region8
    $region5: #{tpu_custom_call.1} parent=1 // loop_body
      %s35 = ssub.s32 %s30, 1
      %s36 = ssub.s32 %s30, 2
      %s37 = sadd.s32 %s30, 1
      %s38 = ssub.s32 %s30, %s37
      %p39 = scmp.eq.s32.totalorder %s38, 0
      %s41 = sadd.s32 %s40, 1
      %s42 = scalar_select %p39, %s40, %s41
      %p45 = pneg %p39
      %p46 = scmp.eq.s32.totalorder %s30, 2
      %p47 = por %p45, %p46
      %p48 = scmp.ne.s32.totalorder %s40, %s43
      %p49 = scmp.eq.s32.totalorder %s30, 0
      %p50 = por %p48, %p49
      %p51 = scmp.ne.s32.totalorder %s40, %s43
      %p52 = scmp.eq.s32.totalorder %s35, 2
      %p53 = por %p51, %p52
      %p54 = scmp.ne.s32.totalorder %s43, %s44
      %p55 = scmp.eq.s32.totalorder %s35, 0
      %p56 = por %p54, %p55
      %p57 = scmp.ne.s32.totalorder %s43, %s44
      %p58 = scmp.eq.s32.totalorder %s36, 2
      %p59 = por %p57, %p58
      %p61 = scmp.ne.s32.totalorder %s44, %s60
      %p62 = scmp.eq.s32.totalorder %s36, 0
      %p63 = por %p61, %p62
      %s65 = sadd.s32 %s64, 1
      %p68 = scmp.eq.s32.totalorder %s30, 2
      %p69 = scmp.ne.s32.totalorder %s64, %s66
      %p70 = scmp.eq.s32.totalorder %s30, 0
      %p71 = por %p69, %p70
      %p72 = scmp.ne.s32.totalorder %s64, %s66
      %p73 = scmp.eq.s32.totalorder %s35, 2
      %p74 = por %p72, %p73
      %p75 = scmp.ne.s32.totalorder %s66, %s67
      %p76 = scmp.eq.s32.totalorder %s35, 0
      %p77 = por %p75, %p76
      %p78 = scmp.ne.s32.totalorder %s66, %s67
      %p79 = scmp.eq.s32.totalorder %s36, 2
      %p80 = por %p78, %p79
      %p82 = scmp.ne.s32.totalorder %s67, %s81
      %p83 = scmp.eq.s32.totalorder %s36, 0
      %p84 = por %p82, %p83
      %s86 = sadd.s32 %s85, 1
      %p89 = scmp.eq.s32.totalorder %s30, 2
      %p90 = scmp.ne.s32.totalorder %s85, %s87
      %p91 = scmp.eq.s32.totalorder %s30, 0
      %p92 = por %p90, %p91
      %p93 = scmp.ne.s32.totalorder %s85, %s87
      %p94 = scmp.eq.s32.totalorder %s35, 2
      %p95 = por %p93, %p94
      %p96 = scmp.ne.s32.totalorder %s87, %s88
      %p97 = scmp.eq.s32.totalorder %s35, 0
      %p98 = por %p96, %p97
      %p99 = scmp.ne.s32.totalorder %s87, %s88
      %p100 = scmp.eq.s32.totalorder %s36, 2
      %p101 = por %p99, %p100
      %p103 = scmp.ne.s32.totalorder %s88, %s102
      %p104 = scmp.eq.s32.totalorder %s36, 0
      %p105 = por %p103, %p104
      %s107 = sadd.s32 %s106, 1
      %p110 = scmp.eq.s32.totalorder %s30, 2
      %p111 = scmp.ne.s32.totalorder %s106, %s108
      %p112 = scmp.eq.s32.totalorder %s30, 0
      %p113 = por %p111, %p112
      %p114 = scmp.ne.s32.totalorder %s106, %s108
      %p115 = scmp.eq.s32.totalorder %s35, 2
      %p116 = por %p114, %p115
      %p117 = scmp.ne.s32.totalorder %s108, %s109
      %p118 = scmp.eq.s32.totalorder %s35, 0
      %p119 = por %p117, %p118
      %p120 = scmp.ne.s32.totalorder %s108, %s109
      %p121 = scmp.eq.s32.totalorder %s36, 2
      %p122 = por %p120, %p121
      %p124 = scmp.ne.s32.totalorder %s109, %s123
      %p125 = scmp.eq.s32.totalorder %s36, 0
      %p126 = por %p124, %p125
      %s128 = sadd.s32 %s127, 1
      %p131 = scmp.eq.s32.totalorder %s30, 2
      %p132 = scmp.ne.s32.totalorder %s127, %s129
      %p133 = scmp.eq.s32.totalorder %s30, 0
      %p134 = por %p132, %p133
      %p135 = scmp.ne.s32.totalorder %s127, %s129
      %p136 = scmp.eq.s32.totalorder %s35, 2
      %p137 = por %p135, %p136
      %p138 = scmp.ne.s32.totalorder %s129, %s130
      %p139 = scmp.eq.s32.totalorder %s35, 0
      %p140 = por %p138, %p139
      %p141 = scmp.ne.s32.totalorder %s129, %s130
      %p142 = scmp.eq.s32.totalorder %s36, 2
      %p143 = por %p141, %p142
      %p145 = scmp.ne.s32.totalorder %s130, %s144
      %p146 = scmp.eq.s32.totalorder %s36, 0
      %p147 = por %p145, %p146
      %s149 = sadd.s32 %s148, 1
      %p152 = scmp.eq.s32.totalorder %s30, 2
      %p153 = scmp.ne.s32.totalorder %s148, %s150
      %p154 = scmp.eq.s32.totalorder %s30, 0
      %p155 = por %p153, %p154
      %p156 = scmp.ne.s32.totalorder %s148, %s150
      %p157 = scmp.eq.s32.totalorder %s35, 2
      %p158 = por %p156, %p157
      %p159 = scmp.ne.s32.totalorder %s150, %s151
      %p160 = scmp.eq.s32.totalorder %s35, 0
      %p161 = por %p159, %p160
      %p162 = scmp.ne.s32.totalorder %s150, %s151
      %p163 = scmp.eq.s32.totalorder %s36, 2
      %p164 = por %p162, %p163
      %p166 = scmp.ne.s32.totalorder %s151, %s165
      %p167 = scmp.eq.s32.totalorder %s36, 0
      %p168 = por %p166, %p167
      %s170 = sadd.s32 %s169, 1
      %p173 = scmp.eq.s32.totalorder %s30, 2
      %p174 = scmp.ne.s32.totalorder %s169, %s171
      %p175 = scmp.eq.s32.totalorder %s30, 0
      %p176 = por %p174, %p175
      %p177 = scmp.ne.s32.totalorder %s169, %s171
      %p178 = scmp.eq.s32.totalorder %s35, 2
      %p179 = por %p177, %p178
      %p180 = scmp.ne.s32.totalorder %s171, %s172
      %p181 = scmp.eq.s32.totalorder %s35, 0
      %p182 = por %p180, %p181
      %p183 = scmp.ne.s32.totalorder %s171, %s172
      %p184 = scmp.eq.s32.totalorder %s36, 2
      %p185 = por %p183, %p184
      %p187 = scmp.ne.s32.totalorder %s172, %s186
      %p188 = scmp.eq.s32.totalorder %s36, 0
      %p189 = por %p187, %p188
      %s191 = sadd.s32 %s190, 1
      %p194 = scmp.eq.s32.totalorder %s30, 2
      %p195 = scmp.ne.s32.totalorder %s190, %s192
      %p196 = scmp.eq.s32.totalorder %s30, 0
      %p197 = por %p195, %p196
      %p198 = scmp.ne.s32.totalorder %s190, %s192
      %p199 = scmp.eq.s32.totalorder %s35, 2
      %p200 = por %p198, %p199
      %p201 = scmp.ne.s32.totalorder %s192, %s193
      %p202 = scmp.eq.s32.totalorder %s35, 0
      %p203 = por %p201, %p202
      %p204 = scmp.ne.s32.totalorder %s192, %s193
      %p205 = scmp.eq.s32.totalorder %s36, 2
      %p206 = por %p204, %p205
      %p208 = scmp.ne.s32.totalorder %s193, %s207
      %p209 = scmp.eq.s32.totalorder %s36, 0
      %p210 = por %p208, %p209
      %s212 = sadd.s32 %s211, 1
      %p215 = scmp.eq.s32.totalorder %s30, 2
      %p216 = scmp.ne.s32.totalorder %s211, %s213
      %p217 = scmp.eq.s32.totalorder %s30, 0
      %p218 = por %p216, %p217
      %p219 = scmp.ne.s32.totalorder %s211, %s213
      %p220 = scmp.eq.s32.totalorder %s35, 2
      %p221 = por %p219, %p220
      %p222 = scmp.ne.s32.totalorder %s213, %s214
      %p223 = scmp.eq.s32.totalorder %s35, 0
      %p224 = por %p222, %p223
      %p225 = scmp.ne.s32.totalorder %s213, %s214
      %p226 = scmp.eq.s32.totalorder %s36, 2
      %p227 = por %p225, %p226
      %p229 = scmp.ne.s32.totalorder %s214, %s228
      %p230 = scmp.eq.s32.totalorder %s36, 0
      %p231 = por %p229, %p230
      %s233 = sadd.s32 %s232, 1
      %p236 = scmp.eq.s32.totalorder %s30, 2
      %p237 = scmp.ne.s32.totalorder %s232, %s234
      %p238 = scmp.eq.s32.totalorder %s30, 0
      %p239 = por %p237, %p238
      %p240 = scmp.ne.s32.totalorder %s232, %s234
      %p241 = scmp.eq.s32.totalorder %s35, 2
      %p242 = por %p240, %p241
      %p243 = scmp.ne.s32.totalorder %s234, %s235
      %p244 = scmp.eq.s32.totalorder %s35, 0
      %p245 = por %p243, %p244
      %p246 = scmp.ne.s32.totalorder %s234, %s235
      %p247 = scmp.eq.s32.totalorder %s36, 2
      %p248 = por %p246, %p247
      %p250 = scmp.ne.s32.totalorder %s235, %s249
      %p251 = scmp.eq.s32.totalorder %s36, 0
      %p252 = por %p250, %p251
      %s254 = sadd.s32 %s253, 1
      %p257 = scmp.eq.s32.totalorder %s30, 2
      %p258 = scmp.ne.s32.totalorder %s253, %s255
      %p259 = scmp.eq.s32.totalorder %s30, 0
      %p260 = por %p258, %p259
      %p261 = scmp.ne.s32.totalorder %s253, %s255
      %p262 = scmp.eq.s32.totalorder %s35, 2
      %p263 = por %p261, %p262
      %p264 = scmp.ne.s32.totalorder %s255, %s256
      %p265 = scmp.eq.s32.totalorder %s35, 0
      %p266 = por %p264, %p265
      %p267 = scmp.ne.s32.totalorder %s255, %s256
      %p268 = scmp.eq.s32.totalorder %s36, 2
      %p269 = por %p267, %p268
      %p271 = scmp.ne.s32.totalorder %s256, %s270
      %p272 = scmp.eq.s32.totalorder %s36, 0
      %p273 = por %p271, %p272
      %s274 = ssub.s32 %s30, %s37
      %p275 = scmp.eq.s32.totalorder %s274, 0
      %s277 = sadd.s32 %s276, 1
      %s278 = scalar_select %p275, %s276, %s277
      %p281 = pneg %p275
      %p282 = scmp.eq.s32.totalorder %s30, 2
      %p283 = por %p281, %p282
      %p284 = scmp.ne.s32.totalorder %s276, %s279
      %p285 = scmp.eq.s32.totalorder %s30, 0
      %p286 = por %p284, %p285
      %p287 = scmp.ne.s32.totalorder %s276, %s279
      %p288 = scmp.eq.s32.totalorder %s35, 2
      %p289 = por %p287, %p288
      %p290 = scmp.ne.s32.totalorder %s279, %s280
      %p291 = scmp.eq.s32.totalorder %s35, 0
      %p292 = por %p290, %p291
      %p293 = scmp.ne.s32.totalorder %s279, %s280
      %p294 = scmp.eq.s32.totalorder %s36, 2
      %p295 = por %p293, %p294
      %p297 = scmp.ne.s32.totalorder %s280, %s296
      %p298 = scmp.eq.s32.totalorder %s36, 0
      %p299 = por %p297, %p298
      %s300 = ssub.s32 %s30, %s37
      %p301 = scmp.eq.s32.totalorder %s300, 0
      %s303 = sadd.s32 %s302, 1
      %s304 = scalar_select %p301, %s302, %s303
      %p307 = pneg %p301
      %p308 = scmp.eq.s32.totalorder %s30, 2
      %p309 = por %p307, %p308
      %p310 = scmp.ne.s32.totalorder %s302, %s305
      %p311 = scmp.eq.s32.totalorder %s30, 0
      %p312 = por %p310, %p311
      %p313 = scmp.ne.s32.totalorder %s302, %s305
      %p314 = scmp.eq.s32.totalorder %s35, 2
      %p315 = por %p313, %p314
      %p316 = scmp.ne.s32.totalorder %s305, %s306
      %p317 = scmp.eq.s32.totalorder %s35, 0
      %p318 = por %p316, %p317
      %p319 = scmp.ne.s32.totalorder %s305, %s306
      %p320 = scmp.eq.s32.totalorder %s36, 2
      %p321 = por %p319, %p320
      %p323 = scmp.ne.s32.totalorder %s306, %s322
      %p324 = scmp.eq.s32.totalorder %s36, 0
      %p325 = por %p323, %p324
      %p326 = scmp.le.s32.totalorder 1, %s30
      %p327 = scmp.lt.s32.totalorder %s30, 4
      %p328 = pnand %p326, %p327
      %p329 = pneg %p328
      // Predicated region
      $region9: #{tpu_custom_call.1} parent=5 // pred_check
        _
      $region10: #{tpu_custom_call.1} parent=5 // pred_check_branch
        %331 = sbr.rel (%p328) target = $region12
      $region11: #{tpu_custom_call.1} parent=5 // pred_region
        %s332 = ssub.s32 %s30, 1
        // Predicated region
        $region13: #{tpu_custom_call.1} parent=11 // pred_check
          %p333 = pneg %p77
        $region14: #{tpu_custom_call.1} parent=11 // pred_check_branch
          %335 = sbr.rel (%p333) target = $region16
        $region15: #{tpu_custom_call.1} parent=11 // pred_region
          %337 = vsyncadd [#allocation6], 0
          %s338 = sshll.u32 %s1, 4
          %s339 = int_to_ptr.hbm [resolvable:$true] %s338
          %s340 = sshll.u32 [#allocation5], 4
          %s341 = int_to_ptr.vmem [resolvable:$true] %s340
          %346 = dma.hbm_to_vmem [thread:$0]  %s339, 2048, %s341, [#allocation6], 128, 128, 8
        $region16: #{tpu_custom_call.1} parent=11 // pred_fallthru
          _
        // Predicated region
        $region17: #{tpu_custom_call.1} parent=11 // pred_check
          %p347 = pneg %p98
        $region18: #{tpu_custom_call.1} parent=11 // pred_check_branch
          %349 = sbr.rel (%p347) target = $region20
        $region19: #{tpu_custom_call.1} parent=11 // pred_region
          _
        $region20: #{tpu_custom_call.1} parent=11 // pred_fallthru
          _
        // Predicated region
        $region21: #{tpu_custom_call.1} parent=11 // pred_check
          %p350 = pneg %p119
        $region22: #{tpu_custom_call.1} parent=11 // pred_check_branch
          %352 = sbr.rel (%p350) target = $region24
        $region23: #{tpu_custom_call.1} parent=11 // pred_region
          _
        $region24: #{tpu_custom_call.1} parent=11 // pred_fallthru
          _
        // Predicated region
        $region25: #{tpu_custom_call.1} parent=11 // pred_check
          %p353 = pneg %p140
        $region26: #{tpu_custom_call.1} parent=11 // pred_check_branch
          %355 = sbr.rel (%p353) target = $region28
        $region27: #{tpu_custom_call.1} parent=11 // pred_region
          _
        $region28: #{tpu_custom_call.1} parent=11 // pred_fallthru
          _
        // Predicated region
        $region29: #{tpu_custom_call.1} parent=11 // pred_check
          %p356 = pneg %p161
        $region30: #{tpu_custom_call.1} parent=11 // pred_check_branch
          %358 = sbr.rel (%p356) target = $region32
        $region31: #{tpu_custom_call.1} parent=11 // pred_region
          %360 = vsyncadd [#allocation6], 0
          %s361 = sshll.u32 %s5, 4
          %s362 = int_to_ptr.hbm [resolvable:$true] %s361
          %s363 = sshll.u32 [#allocation7], 4
          %s364 = int_to_ptr.vmem [resolvable:$true] %s363
          %369 = dma.hbm_to_vmem [thread:$0]  %s362, 2048, %s364, [#allocation6], 128, 128, 8
        $region32: #{tpu_custom_call.1} parent=11 // pred_fallthru
          _
        // Predicated region
        $region33: #{tpu_custom_call.1} parent=11 // pred_check
          %p370 = pneg %p182
        $region34: #{tpu_custom_call.1} parent=11 // pred_check_branch
          %372 = sbr.rel (%p370) target = $region36
        $region35: #{tpu_custom_call.1} parent=11 // pred_region
          _
        $region36: #{tpu_custom_call.1} parent=11 // pred_fallthru
          _
        // Predicated region
        $region37: #{tpu_custom_call.1} parent=11 // pred_check
          %p373 = pneg %p203
        $region38: #{tpu_custom_call.1} parent=11 // pred_check_branch
          %375 = sbr.rel (%p373) target = $region40
        $region39: #{tpu_custom_call.1} parent=11 // pred_region
          %377 = vsyncadd [#allocation9], 0
          %s378 = sshll.u32 %s7, 4
          %s379 = int_to_ptr.hbm [resolvable:$true] %s378
          %s380 = sshll.u32 [#allocation8], 4
          %s381 = int_to_ptr.vmem [resolvable:$true] %s380
          %386 = dma.hbm_to_vmem [thread:$0]  %s379, 2048, %s381, [#allocation9], 128, 128, 8
        $region40: #{tpu_custom_call.1} parent=11 // pred_fallthru
          _
        // Predicated region
        $region41: #{tpu_custom_call.1} parent=11 // pred_check
          %p387 = pneg %p224
        $region42: #{tpu_custom_call.1} parent=11 // pred_check_branch
          %389 = sbr.rel (%p387) target = $region44
        $region43: #{tpu_custom_call.1} parent=11 // pred_region
          _
        $region44: #{tpu_custom_call.1} parent=11 // pred_fallthru
          _
        // Predicated region
        $region45: #{tpu_custom_call.1} parent=11 // pred_check
          %p390 = pneg %p245
        $region46: #{tpu_custom_call.1} parent=11 // pred_check_branch
          %392 = sbr.rel (%p390) target = $region48
        $region47: #{tpu_custom_call.1} parent=11 // pred_region
          _
        $region48: #{tpu_custom_call.1} parent=11 // pred_fallthru
          _
        // Predicated region
        $region49: #{tpu_custom_call.1} parent=11 // pred_check
          %p393 = pneg %p266
        $region50: #{tpu_custom_call.1} parent=11 // pred_check_branch
          %395 = sbr.rel (%p393) target = $region52
        $region51: #{tpu_custom_call.1} parent=11 // pred_region
          _
        $region52: #{tpu_custom_call.1} parent=11 // pred_fallthru
          _
      $region12: #{tpu_custom_call.1} parent=5 // pred_fallthru
        _
      %p396 = scmp.lt.s32.totalorder %s30, 3
      // Predicated region
      $region53: #{tpu_custom_call.1} parent=5 // pred_check
        %p397 = pneg %p396
      $region54: #{tpu_custom_call.1} parent=5 // pred_check_branch
        %399 = sbr.rel (%p397) target = $region56
      $region55: #{tpu_custom_call.1} parent=5 // pred_region
        // Predicated region
        $region57: #{tpu_custom_call.1} parent=55 // pred_check
          %p400 = pneg %p50
        $region58: #{tpu_custom_call.1} parent=55 // pred_check_branch
          %402 = sbr.rel (%p400) target = $region60
        $region59: #{tpu_custom_call.1} parent=55 // pred_region
          %s403 = sand.u32 %s40, 1
          %s404 = scalar_lea.sflag [#allocation3], %s403
          %s405 = sand.u32 %s40, 1
          %s406 = smul.addr %s405, 128
          %s407 = scalar_lea.vmem [#allocation2], %s406
          %s408 = smul.u32 16, %s30
          %410 = vsyncadd %s404, 0
          %s411 = smul.addr %s408, 8
          %s412 = scalar_lea.hbm %s0, %s411
          %s413 = sshll.u32 %s412, 4
          %s414 = int_to_ptr.hbm [resolvable:$true] %s413
          %s415 = sshll.u32 %s407, 4
          %s416 = int_to_ptr.vmem [resolvable:$true] %s415
          %421 = dma.hbm_to_vmem [thread:$0]  %s414, 2048, %s416, %s404, 128, 128, 8
        $region60: #{tpu_custom_call.1} parent=55 // pred_fallthru
          _
      $region56: #{tpu_custom_call.1} parent=5 // pred_fallthru
        _
      %p422 = scmp.le.s32.totalorder 1, %s30
      %p423 = scmp.lt.s32.totalorder %s30, 4
      %p424 = pnand %p422, %p423
      %p425 = pneg %p424
      // Predicated region
      $region61: #{tpu_custom_call.1} parent=5 // pred_check
        _
      $region62: #{tpu_custom_call.1} parent=5 // pred_check_branch
        %427 = sbr.rel (%p424) target = $region64
      $region63: #{tpu_custom_call.1} parent=5 // pred_region
        %s428 = ssub.s32 %s30, 1
        %s429 = sand.u32 %s43, 1
        %s430 = scalar_lea.sflag [#allocation3], %s429
        %s431 = sand.u32 %s43, 1
        %s432 = smul.addr %s431, 128
        %s433 = scalar_lea.vmem [#allocation2], %s432
        // Predicated region
        $region65: #{tpu_custom_call.1} parent=63 // pred_check
          %p434 = pneg %p56
        $region66: #{tpu_custom_call.1} parent=63 // pred_check_branch
          %436 = sbr.rel (%p434) target = $region68
        $region67: #{tpu_custom_call.1} parent=63 // pred_region
          %438 = dma.done %s430, 2048
        $region68: #{tpu_custom_call.1} parent=63 // pred_fallthru
          _
        // Predicated region
        $region69: #{tpu_custom_call.1} parent=63 // pred_check
          %p439 = pneg %p77
        $region70: #{tpu_custom_call.1} parent=63 // pred_check_branch
          %441 = sbr.rel (%p439) target = $region72
        $region71: #{tpu_custom_call.1} parent=63 // pred_region
          %443 = dma.done [#allocation6], 2048
        $region72: #{tpu_custom_call.1} parent=63 // pred_fallthru
          _
        // Predicated region
        $region73: #{tpu_custom_call.1} parent=63 // pred_check
          %p444 = pneg %p161
        $region74: #{tpu_custom_call.1} parent=63 // pred_check_branch
          %446 = sbr.rel (%p444) target = $region76
        $region75: #{tpu_custom_call.1} parent=63 // pred_region
          %448 = dma.done [#allocation6], 2048
        $region76: #{tpu_custom_call.1} parent=63 // pred_fallthru
          _
        // Predicated region
        $region77: #{tpu_custom_call.1} parent=63 // pred_check
          %p449 = pneg %p203
        $region78: #{tpu_custom_call.1} parent=63 // pred_check_branch
          %451 = sbr.rel (%p449) target = $region80
        $region79: #{tpu_custom_call.1} parent=63 // pred_region
          %453 = dma.done [#allocation9], 2048
        $region80: #{tpu_custom_call.1} parent=63 // pred_fallthru
          _
        %s454 = sand.u32 %s43, 1
        %s455 = scalar_lea.sflag [#allocation3], %s454
        %s456 = sand.u32 %s43, 1
        %s457 = smul.addr %s456, 128
        %s458 = scalar_lea.vmem [#allocation2], %s457
        %p459 = pneg %p56
        %p460 = pneg %p53
        %p461 = pneg %p77
        %p462 = pneg %p74
        %p463 = pneg %p98
        %p464 = pneg %p95
        %p465 = pneg %p119
        %p466 = pneg %p116
        %p467 = pneg %p140
        %p468 = pneg %p137
        %p469 = pneg %p161
        %p470 = pneg %p158
        %p471 = pneg %p182
        %p472 = pneg %p179
        %p473 = pneg %p203
        %p474 = pneg %p200
        %p475 = pneg %p224
        %p476 = pneg %p221
        %p477 = pneg %p245
        %p478 = pneg %p242
        %p479 = pneg %p266
        %p480 = pneg %p263
        %p481 = pneg %p292
        %p482 = pneg %p289
        %s483 = sand.u32 %s279, 1
        %s484 = scalar_lea.sflag [#allocation4], %s483
        %s485 = sand.u32 %s279, 1
        %s486 = smul.addr %s485, 128
        %s487 = scalar_lea.vmem [#allocation10], %s486
        %p488 = pneg %p318
        %p489 = pneg %p315
        %s490 = sand.u32 %s305, 1
        %s491 = scalar_lea.sflag [#allocation12], %s490
        %s492 = sand.u32 %s305, 1
        %s493 = smul.addr %s492, 64
        %s494 = scalar_lea.vmem [#allocation11], %s493
        %s495 = smul.u32 16, %s35
        %s496 = smul.u32 16, %s35
        %s497 = smul.u32 16, %s35
        %v498 = vld [vmem:[%s433] sm:$0xff]
        %v499 = vld [vmem:[%s433 + $0x8] sm:$0xff]
        %v500 = vld [vmem:[%s433 + $0x10] sm:$0xff]
        %v501 = vld [vmem:[%s433 + $0x18] sm:$0xff]
        %v502 = vld [vmem:[%s433 + $0x20] sm:$0xff]
        %v503 = vld [vmem:[%s433 + $0x28] sm:$0xff]
        %v504 = vld [vmem:[%s433 + $0x30] sm:$0xff]
        %v505 = vld [vmem:[%s433 + $0x38] sm:$0xff]
        %v506 = vld [vmem:[%s433 + $0x40] sm:$0xff]
        %v507 = vld [vmem:[%s433 + $0x48] sm:$0xff]
        %v508 = vld [vmem:[%s433 + $0x50] sm:$0xff]
        %v509 = vld [vmem:[%s433 + $0x58] sm:$0xff]
        %v510 = vld [vmem:[%s433 + $0x60] sm:$0xff]
        %v511 = vld [vmem:[%s433 + $0x68] sm:$0xff]
        %v512 = vld [vmem:[%s433 + $0x70] sm:$0xff]
        %v513 = vld [vmem:[%s433 + $0x78] sm:$0xff]
        %v514 = vld [vmem:[#allocation5] sm:$0xff]
        %v515 = vld [vmem:[#allocation5 + $0x8] sm:$0xff]
        %v516 = vld [vmem:[#allocation5 + $0x10] sm:$0xff]
        %v517 = vld [vmem:[#allocation5 + $0x18] sm:$0xff]
        %v518 = vld [vmem:[#allocation5 + $0x20] sm:$0xff]
        %v519 = vld [vmem:[#allocation5 + $0x28] sm:$0xff]
        %v520 = vld [vmem:[#allocation5 + $0x30] sm:$0xff]
        %v521 = vld [vmem:[#allocation5 + $0x38] sm:$0xff]
        %v522 = vld [vmem:[#allocation5 + $0x40] sm:$0xff]
        %v523 = vld [vmem:[#allocation5 + $0x48] sm:$0xff]
        %v524 = vld [vmem:[#allocation5 + $0x50] sm:$0xff]
        %v525 = vld [vmem:[#allocation5 + $0x58] sm:$0xff]
        %v526 = vld [vmem:[#allocation5 + $0x60] sm:$0xff]
        %v527 = vld [vmem:[#allocation5 + $0x68] sm:$0xff]
        %v528 = vld [vmem:[#allocation5 + $0x70] sm:$0xff]
        %v529 = vld [vmem:[#allocation5 + $0x78] sm:$0xff]
        %v530 = vld [vmem:[%s2] sm:$0x1]
        %v532 = vperm.slane %v530, 0
        %534 = vmatpush.msra.mxu0 %v529
        %535 = vmatpush.msra.mxu0 %v528
        %536 = vmatpush.msra.mxu0 %v527
        %537 = vmatpush.msra.mxu0 %v526
        %538 = vmatpush.msra.mxu0 %v525
        %539 = vmatpush.msra.mxu0 %v524
        %540 = vmatpush.msra.mxu0 %v523
        %541 = vmatpush.msra.mxu0 %v522
        %542 = vmatpush.msra.mxu0 %v521
        %543 = vmatpush.msra.mxu0 %v520
        %544 = vmatpush.msra.mxu0 %v519
        %545 = vmatpush.msra.mxu0 %v518
        %546 = vmatpush.msra.mxu0 %v517
        %547 = vmatpush.msra.mxu0 %v516
        %548 = vmatpush.msra.mxu0 %v515
        %549 = vmatpush.msra.mxu0 %v514
        %550 = vmatmul.f32.gmra.mxu0 %v498
        %v551 = vpop.f32.mrf.mxu0
        %v552 = vadd.f32 %v532, %v551
        %553 = vmatmul.f32.gmra.mxu0 %v499
        %v554 = vpop.f32.mrf.mxu0
        %v555 = vadd.f32 %v532, %v554
        %556 = vmatmul.f32.gmra.mxu0 %v500
        %v557 = vpop.f32.mrf.mxu0
        %v558 = vadd.f32 %v532, %v557
        %559 = vmatmul.f32.gmra.mxu0 %v501
        %v560 = vpop.f32.mrf.mxu0
        %v561 = vadd.f32 %v532, %v560
        %562 = vmatmul.f32.gmra.mxu0 %v502
        %v563 = vpop.f32.mrf.mxu0
        %v564 = vadd.f32 %v532, %v563
        %565 = vmatmul.f32.gmra.mxu0 %v503
        %v566 = vpop.f32.mrf.mxu0
        %v567 = vadd.f32 %v532, %v566
        %568 = vmatmul.f32.gmra.mxu0 %v504
        %v569 = vpop.f32.mrf.mxu0
        %v570 = vadd.f32 %v532, %v569
        %571 = vmatmul.f32.gmra.mxu0 %v505
        %v572 = vpop.f32.mrf.mxu0
        %v573 = vadd.f32 %v532, %v572
        %574 = vmatmul.f32.gmra.mxu0 %v506
        %v575 = vpop.f32.mrf.mxu0
        %v576 = vadd.f32 %v532, %v575
        %577 = vmatmul.f32.gmra.mxu0 %v507
        %v578 = vpop.f32.mrf.mxu0
        %v579 = vadd.f32 %v532, %v578
        %580 = vmatmul.f32.gmra.mxu0 %v508
        %v581 = vpop.f32.mrf.mxu0
        %v582 = vadd.f32 %v532, %v581
        %583 = vmatmul.f32.gmra.mxu0 %v509
        %v584 = vpop.f32.mrf.mxu0
        %v585 = vadd.f32 %v532, %v584
        %586 = vmatmul.f32.gmra.mxu0 %v510
        %v587 = vpop.f32.mrf.mxu0
        %v588 = vadd.f32 %v532, %v587
        %589 = vmatmul.f32.gmra.mxu0 %v511
        %v590 = vpop.f32.mrf.mxu0
        %v591 = vadd.f32 %v532, %v590
        %592 = vmatmul.f32.gmra.mxu0 %v512
        %v593 = vpop.f32.mrf.mxu0
        %v594 = vadd.f32 %v532, %v593
        %595 = vmatmul.f32.gmra.mxu0 %v513
        %v596 = vpop.f32.mrf.mxu0
        %v597 = vadd.f32 %v532, %v596
        %598 = vdwg.mxu0
        %v599 = vmul.f32 %v552, 0.5
        %v600 = vmul.f32 %v555, 0.5
        %v601 = vmul.f32 %v558, 0.5
        %v602 = vmul.f32 %v561, 0.5
        %v603 = vmul.f32 %v564, 0.5
        %v604 = vmul.f32 %v567, 0.5
        %v605 = vmul.f32 %v570, 0.5
        %v606 = vmul.f32 %v573, 0.5
        %v607 = vmul.f32 %v576, 0.5
        %v608 = vmul.f32 %v579, 0.5
        %v609 = vmul.f32 %v582, 0.5
        %v610 = vmul.f32 %v585, 0.5
        %v611 = vmul.f32 %v588, 0.5
        %v612 = vmul.f32 %v591, 0.5
        %v613 = vmul.f32 %v594, 0.5
        %v614 = vmul.f32 %v597, 0.5
        %v615 = vmul.f32 %v552, 0.70710677
        %v616 = vmul.f32 %v555, 0.70710677
        %v617 = vmul.f32 %v558, 0.70710677
        %v618 = vmul.f32 %v561, 0.70710677
        %v619 = vmul.f32 %v564, 0.70710677
        %v620 = vmul.f32 %v567, 0.70710677
        %v621 = vmul.f32 %v570, 0.70710677
        %v622 = vmul.f32 %v573, 0.70710677
        %v623 = vmul.f32 %v576, 0.70710677
        %v624 = vmul.f32 %v579, 0.70710677
        %v625 = vmul.f32 %v582, 0.70710677
        %v626 = vmul.f32 %v585, 0.70710677
        %v627 = vmul.f32 %v588, 0.70710677
        %v628 = vmul.f32 %v591, 0.70710677
        %v629 = vmul.f32 %v594, 0.70710677
        %v630 = vmul.f32 %v597, 0.70710677
        %v631 = vmul.f32 %v615, %v615
        %v632 = vmin.f32 16.0, %v631
        %v633 = vmul.f32 %v632, 2.1237322e-06
        %v634 = vadd.f32 %v633, 0.00028619796
        %v635 = vmul.f32 %v632, %v634
        %v636 = vadd.f32 %v635, 0.0036580483
        %v637 = vmul.f32 %v632, %v636
        %v638 = vadd.f32 %v637, 0.05243302
        %v639 = vmul.f32 %v632, %v638
        %v640 = vadd.f32 %v639, 0.18741608
        %v641 = vmul.f32 %v632, %v640
        %v642 = vadd.f32 %v641, 1.1283791
        %v643 = vmul.f32 %v615, %v642
        %v644 = vmul.f32 %v632, 3.8918573e-05
        %v645 = vadd.f32 %v644, 0.001143296
        %v646 = vmul.f32 %v632, %v645
        %v647 = vadd.f32 %v646, 0.014752088
        %v648 = vmul.f32 %v632, %v647
        %v649 = vadd.f32 %v648, 0.112945676
        %v650 = vmul.f32 %v632, %v649
        %v651 = vadd.f32 %v650, 0.4994258
        %v652 = vmul.f32 %v632, %v651
        %v653 = vadd.f32 %v652, 1.0
        %v654 = vrcp.pop %v653
        %v655 = vmul.f32 %v653, %v654
        %v656 = vsub.f32 1.0, %v655
        %v657 = vmul.f32 %v654, %v656
        %v658 = vadd.f32 %v654, %v657
        %vm659 = vweird.f32 %v653
        %vm660 = vweird.f32 %v654
        %vm661 = vmor %vm659, %vm660
        %v662 = vsel %vm661, %v654, %v658
        %v663 = vand.u32 2147483647, %v653
        %vm664 = vcmp.eq.f32.partialorder %v663, 8.507059e+37
        %v665 = vand.u32 %v653, 2147483648
        %v666 = vor.u32 1.1754944e-38, %v665
        %v667 = vsel %vm664, %v666, %v662
        %v668 = vmul.f32 %v643, %v667
        %v669 = vmin.f32 %v668, 1.0
        %v670 = vmax.f32 %v669, -1.0
        %v671 = vmul.f32 %v616, %v616
        %v672 = vmin.f32 16.0, %v671
        %v673 = vmul.f32 %v672, 2.1237322e-06
        %v674 = vadd.f32 %v673, 0.00028619796
        %v675 = vmul.f32 %v672, %v674
        %v676 = vadd.f32 %v675, 0.0036580483
        %v677 = vmul.f32 %v672, %v676
        %v678 = vadd.f32 %v677, 0.05243302
        %v679 = vmul.f32 %v672, %v678
        %v680 = vadd.f32 %v679, 0.18741608
        %v681 = vmul.f32 %v672, %v680
        %v682 = vadd.f32 %v681, 1.1283791
        %v683 = vmul.f32 %v616, %v682
        %v684 = vmul.f32 %v672, 3.8918573e-05
        %v685 = vadd.f32 %v684, 0.001143296
        %v686 = vmul.f32 %v672, %v685
        %v687 = vadd.f32 %v686, 0.014752088
        %v688 = vmul.f32 %v672, %v687
        %v689 = vadd.f32 %v688, 0.112945676
        %v690 = vmul.f32 %v672, %v689
        %v691 = vadd.f32 %v690, 0.4994258
        %v692 = vmul.f32 %v672, %v691
        %v693 = vadd.f32 %v692, 1.0
        %v694 = vrcp.pop %v693
        %v695 = vmul.f32 %v693, %v694
        %v696 = vsub.f32 1.0, %v695
        %v697 = vmul.f32 %v694, %v696
        %v698 = vadd.f32 %v694, %v697
        %vm699 = vweird.f32 %v693
        %vm700 = vweird.f32 %v694
        %vm701 = vmor %vm699, %vm700
        %v702 = vsel %vm701, %v694, %v698
        %v703 = vand.u32 2147483647, %v693
        %vm704 = vcmp.eq.f32.partialorder %v703, 8.507059e+37
        %v705 = vand.u32 %v693, 2147483648
        %v706 = vor.u32 1.1754944e-38, %v705
        %v707 = vsel %vm704, %v706, %v702
        %v708 = vmul.f32 %v683, %v707
        %v709 = vmin.f32 %v708, 1.0
        %v710 = vmax.f32 %v709, -1.0
        %v711 = vmul.f32 %v617, %v617
        %v712 = vmin.f32 16.0, %v711
        %v713 = vmul.f32 %v712, 2.1237322e-06
        %v714 = vadd.f32 %v713, 0.00028619796
        %v715 = vmul.f32 %v712, %v714
        %v716 = vadd.f32 %v715, 0.0036580483
        %v717 = vmul.f32 %v712, %v716
        %v718 = vadd.f32 %v717, 0.05243302
        %v719 = vmul.f32 %v712, %v718
        %v720 = vadd.f32 %v719, 0.18741608
        %v721 = vmul.f32 %v712, %v720
        %v722 = vadd.f32 %v721, 1.1283791
        %v723 = vmul.f32 %v617, %v722
        %v724 = vmul.f32 %v712, 3.8918573e-05
        %v725 = vadd.f32 %v724, 0.001143296
        %v726 = vmul.f32 %v712, %v725
        %v727 = vadd.f32 %v726, 0.014752088
        %v728 = vmul.f32 %v712, %v727
        %v729 = vadd.f32 %v728, 0.112945676
        %v730 = vmul.f32 %v712, %v729
        %v731 = vadd.f32 %v730, 0.4994258
        %v732 = vmul.f32 %v712, %v731
        %v733 = vadd.f32 %v732, 1.0
        %v734 = vrcp.pop %v733
        %v735 = vmul.f32 %v733, %v734
        %v736 = vsub.f32 1.0, %v735
        %v737 = vmul.f32 %v734, %v736
        %v738 = vadd.f32 %v734, %v737
        %vm739 = vweird.f32 %v733
        %vm740 = vweird.f32 %v734
        %vm741 = vmor %vm739, %vm740
        %v742 = vsel %vm741, %v734, %v738
        %v743 = vand.u32 2147483647, %v733
        %vm744 = vcmp.eq.f32.partialorder %v743, 8.507059e+37
        %v745 = vand.u32 %v733, 2147483648
        %v746 = vor.u32 1.1754944e-38, %v745
        %v747 = vsel %vm744, %v746, %v742
        %v748 = vmul.f32 %v723, %v747
        %v749 = vmin.f32 %v748, 1.0
        %v750 = vmax.f32 %v749, -1.0
        %v751 = vmul.f32 %v618, %v618
        %v752 = vmin.f32 16.0, %v751
        %v753 = vmul.f32 %v752, 2.1237322e-06
        %v754 = vadd.f32 %v753, 0.00028619796
        %v755 = vmul.f32 %v752, %v754
        %v756 = vadd.f32 %v755, 0.0036580483
        %v757 = vmul.f32 %v752, %v756
        %v758 = vadd.f32 %v757, 0.05243302
        %v759 = vmul.f32 %v752, %v758
        %v760 = vadd.f32 %v759, 0.18741608
        %v761 = vmul.f32 %v752, %v760
        %v762 = vadd.f32 %v761, 1.1283791
        %v763 = vmul.f32 %v618, %v762
        %v764 = vmul.f32 %v752, 3.8918573e-05
        %v765 = vadd.f32 %v764, 0.001143296
        %v766 = vmul.f32 %v752, %v765
        %v767 = vadd.f32 %v766, 0.014752088
        %v768 = vmul.f32 %v752, %v767
        %v769 = vadd.f32 %v768, 0.112945676
        %v770 = vmul.f32 %v752, %v769
        %v771 = vadd.f32 %v770, 0.4994258
        %v772 = vmul.f32 %v752, %v771
        %v773 = vadd.f32 %v772, 1.0
        %v774 = vrcp.pop %v773
        %v775 = vmul.f32 %v773, %v774
        %v776 = vsub.f32 1.0, %v775
        %v777 = vmul.f32 %v774, %v776
        %v778 = vadd.f32 %v774, %v777
        %vm779 = vweird.f32 %v773
        %vm780 = vweird.f32 %v774
        %vm781 = vmor %vm779, %vm780
        %v782 = vsel %vm781, %v774, %v778
        %v783 = vand.u32 2147483647, %v773
        %vm784 = vcmp.eq.f32.partialorder %v783, 8.507059e+37
        %v785 = vand.u32 %v773, 2147483648
        %v786 = vor.u32 1.1754944e-38, %v785
        %v787 = vsel %vm784, %v786, %v782
        %v788 = vmul.f32 %v763, %v787
        %v789 = vmin.f32 %v788, 1.0
        %v790 = vmax.f32 %v789, -1.0
        %v791 = vmul.f32 %v619, %v619
        %v792 = vmin.f32 16.0, %v791
        %v793 = vmul.f32 %v792, 2.1237322e-06
        %v794 = vadd.f32 %v793, 0.00028619796
        %v795 = vmul.f32 %v792, %v794
        %v796 = vadd.f32 %v795, 0.0036580483
        %v797 = vmul.f32 %v792, %v796
        %v798 = vadd.f32 %v797, 0.05243302
        %v799 = vmul.f32 %v792, %v798
        %v800 = vadd.f32 %v799, 0.18741608
        %v801 = vmul.f32 %v792, %v800
        %v802 = vadd.f32 %v801, 1.1283791
        %v803 = vmul.f32 %v619, %v802
        %v804 = vmul.f32 %v792, 3.8918573e-05
        %v805 = vadd.f32 %v804, 0.001143296
        %v806 = vmul.f32 %v792, %v805
        %v807 = vadd.f32 %v806, 0.014752088
        %v808 = vmul.f32 %v792, %v807
        %v809 = vadd.f32 %v808, 0.112945676
        %v810 = vmul.f32 %v792, %v809
        %v811 = vadd.f32 %v810, 0.4994258
        %v812 = vmul.f32 %v792, %v811
        %v813 = vadd.f32 %v812, 1.0
        %v814 = vrcp.pop %v813
        %v815 = vmul.f32 %v813, %v814
        %v816 = vsub.f32 1.0, %v815
        %v817 = vmul.f32 %v814, %v816
        %v818 = vadd.f32 %v814, %v817
        %vm819 = vweird.f32 %v813
        %vm820 = vweird.f32 %v814
        %vm821 = vmor %vm819, %vm820
        %v822 = vsel %vm821, %v814, %v818
        %v823 = vand.u32 2147483647, %v813
        %vm824 = vcmp.eq.f32.partialorder %v823, 8.507059e+37
        %v825 = vand.u32 %v813, 2147483648
        %v826 = vor.u32 1.1754944e-38, %v825
        %v827 = vsel %vm824, %v826, %v822
        %v828 = vmul.f32 %v803, %v827
        %v829 = vmin.f32 %v828, 1.0
        %v830 = vmax.f32 %v829, -1.0
        %v831 = vmul.f32 %v620, %v620
        %v832 = vmin.f32 16.0, %v831
        %v833 = vmul.f32 %v832, 2.1237322e-06
        %v834 = vadd.f32 %v833, 0.00028619796
        %v835 = vmul.f32 %v832, %v834
        %v836 = vadd.f32 %v835, 0.0036580483
        %v837 = vmul.f32 %v832, %v836
        %v838 = vadd.f32 %v837, 0.05243302
        %v839 = vmul.f32 %v832, %v838
        %v840 = vadd.f32 %v839, 0.18741608
        %v841 = vmul.f32 %v832, %v840
        %v842 = vadd.f32 %v841, 1.1283791
        %v843 = vmul.f32 %v620, %v842
        %v844 = vmul.f32 %v832, 3.8918573e-05
        %v845 = vadd.f32 %v844, 0.001143296
        %v846 = vmul.f32 %v832, %v845
        %v847 = vadd.f32 %v846, 0.014752088
        %v848 = vmul.f32 %v832, %v847
        %v849 = vadd.f32 %v848, 0.112945676
        %v850 = vmul.f32 %v832, %v849
        %v851 = vadd.f32 %v850, 0.4994258
        %v852 = vmul.f32 %v832, %v851
        %v853 = vadd.f32 %v852, 1.0
        %v854 = vrcp.pop %v853
        %v855 = vmul.f32 %v853, %v854
        %v856 = vsub.f32 1.0, %v855
        %v857 = vmul.f32 %v854, %v856
        %v858 = vadd.f32 %v854, %v857
        %vm859 = vweird.f32 %v853
        %vm860 = vweird.f32 %v854
        %vm861 = vmor %vm859, %vm860
        %v862 = vsel %vm861, %v854, %v858
        %v863 = vand.u32 2147483647, %v853
        %vm864 = vcmp.eq.f32.partialorder %v863, 8.507059e+37
        %v865 = vand.u32 %v853, 2147483648
        %v866 = vor.u32 1.1754944e-38, %v865
        %v867 = vsel %vm864, %v866, %v862
        %v868 = vmul.f32 %v843, %v867
        %v869 = vmin.f32 %v868, 1.0
        %v870 = vmax.f32 %v869, -1.0
        %v871 = vmul.f32 %v621, %v621
        %v872 = vmin.f32 16.0, %v871
        %v873 = vmul.f32 %v872, 2.1237322e-06
        %v874 = vadd.f32 %v873, 0.00028619796
        %v875 = vmul.f32 %v872, %v874
        %v876 = vadd.f32 %v875, 0.0036580483
        %v877 = vmul.f32 %v872, %v876
        %v878 = vadd.f32 %v877, 0.05243302
        %v879 = vmul.f32 %v872, %v878
        %v880 = vadd.f32 %v879, 0.18741608
        %v881 = vmul.f32 %v872, %v880
        %v882 = vadd.f32 %v881, 1.1283791
        %v883 = vmul.f32 %v621, %v882
        %v884 = vmul.f32 %v872, 3.8918573e-05
        %v885 = vadd.f32 %v884, 0.001143296
        %v886 = vmul.f32 %v872, %v885
        %v887 = vadd.f32 %v886, 0.014752088
        %v888 = vmul.f32 %v872, %v887
        %v889 = vadd.f32 %v888, 0.112945676
        %v890 = vmul.f32 %v872, %v889
        %v891 = vadd.f32 %v890, 0.4994258
        %v892 = vmul.f32 %v872, %v891
        %v893 = vadd.f32 %v892, 1.0
        %v894 = vrcp.pop %v893
        %v895 = vmul.f32 %v893, %v894
        %v896 = vsub.f32 1.0, %v895
        %v897 = vmul.f32 %v894, %v896
        %v898 = vadd.f32 %v894, %v897
        %vm899 = vweird.f32 %v893
        %vm900 = vweird.f32 %v894
        %vm901 = vmor %vm899, %vm900
        %v902 = vsel %vm901, %v894, %v898
        %v903 = vand.u32 2147483647, %v893
        %vm904 = vcmp.eq.f32.partialorder %v903, 8.507059e+37
        %v905 = vand.u32 %v893, 2147483648
        %v906 = vor.u32 1.1754944e-38, %v905
        %v907 = vsel %vm904, %v906, %v902
        %v908 = vmul.f32 %v883, %v907
        %v909 = vmin.f32 %v908, 1.0
        %v910 = vmax.f32 %v909, -1.0
        %v911 = vmul.f32 %v622, %v622
        %v912 = vmin.f32 16.0, %v911
        %v913 = vmul.f32 %v912, 2.1237322e-06
        %v914 = vadd.f32 %v913, 0.00028619796
        %v915 = vmul.f32 %v912, %v914
        %v916 = vadd.f32 %v915, 0.0036580483
        %v917 = vmul.f32 %v912, %v916
        %v918 = vadd.f32 %v917, 0.05243302
        %v919 = vmul.f32 %v912, %v918
        %v920 = vadd.f32 %v919, 0.18741608
        %v921 = vmul.f32 %v912, %v920
        %v922 = vadd.f32 %v921, 1.1283791
        %v923 = vmul.f32 %v622, %v922
        %v924 = vmul.f32 %v912, 3.8918573e-05
        %v925 = vadd.f32 %v924, 0.001143296
        %v926 = vmul.f32 %v912, %v925
        %v927 = vadd.f32 %v926, 0.014752088
        %v928 = vmul.f32 %v912, %v927
        %v929 = vadd.f32 %v928, 0.112945676
        %v930 = vmul.f32 %v912, %v929
        %v931 = vadd.f32 %v930, 0.4994258
        %v932 = vmul.f32 %v912, %v931
        %v933 = vadd.f32 %v932, 1.0
        %v934 = vrcp.pop %v933
        %v935 = vmul.f32 %v933, %v934
        %v936 = vsub.f32 1.0, %v935
        %v937 = vmul.f32 %v934, %v936
        %v938 = vadd.f32 %v934, %v937
        %vm939 = vweird.f32 %v933
        %vm940 = vweird.f32 %v934
        %vm941 = vmor %vm939, %vm940
        %v942 = vsel %vm941, %v934, %v938
        %v943 = vand.u32 2147483647, %v933
        %vm944 = vcmp.eq.f32.partialorder %v943, 8.507059e+37
        %v945 = vand.u32 %v933, 2147483648
        %v946 = vor.u32 1.1754944e-38, %v945
        %v947 = vsel %vm944, %v946, %v942
        %v948 = vmul.f32 %v923, %v947
        %v949 = vmin.f32 %v948, 1.0
        %v950 = vmax.f32 %v949, -1.0
        %v951 = vmul.f32 %v623, %v623
        %v952 = vmin.f32 16.0, %v951
        %v953 = vmul.f32 %v952, 2.1237322e-06
        %v954 = vadd.f32 %v953, 0.00028619796
        %v955 = vmul.f32 %v952, %v954
        %v956 = vadd.f32 %v955, 0.0036580483
        %v957 = vmul.f32 %v952, %v956
        %v958 = vadd.f32 %v957, 0.05243302
        %v959 = vmul.f32 %v952, %v958
        %v960 = vadd.f32 %v959, 0.18741608
        %v961 = vmul.f32 %v952, %v960
        %v962 = vadd.f32 %v961, 1.1283791
        %v963 = vmul.f32 %v623, %v962
        %v964 = vmul.f32 %v952, 3.8918573e-05
        %v965 = vadd.f32 %v964, 0.001143296
        %v966 = vmul.f32 %v952, %v965
        %v967 = vadd.f32 %v966, 0.014752088
        %v968 = vmul.f32 %v952, %v967
        %v969 = vadd.f32 %v968, 0.112945676
        %v970 = vmul.f32 %v952, %v969
        %v971 = vadd.f32 %v970, 0.4994258
        %v972 = vmul.f32 %v952, %v971
        %v973 = vadd.f32 %v972, 1.0
        %v974 = vrcp.pop %v973
        %v975 = vmul.f32 %v973, %v974
        %v976 = vsub.f32 1.0, %v975
        %v977 = vmul.f32 %v974, %v976
        %v978 = vadd.f32 %v974, %v977
        %vm979 = vweird.f32 %v973
        %vm980 = vweird.f32 %v974
        %vm981 = vmor %vm979, %vm980
        %v982 = vsel %vm981, %v974, %v978
        %v983 = vand.u32 2147483647, %v973
        %vm984 = vcmp.eq.f32.partialorder %v983, 8.507059e+37
        %v985 = vand.u32 %v973, 2147483648
        %v986 = vor.u32 1.1754944e-38, %v985
        %v987 = vsel %vm984, %v986, %v982
        %v988 = vmul.f32 %v963, %v987
        %v989 = vmin.f32 %v988, 1.0
        %v990 = vmax.f32 %v989, -1.0
        %v991 = vmul.f32 %v624, %v624
        %v992 = vmin.f32 16.0, %v991
        %v993 = vmul.f32 %v992, 2.1237322e-06
        %v994 = vadd.f32 %v993, 0.00028619796
        %v995 = vmul.f32 %v992, %v994
        %v996 = vadd.f32 %v995, 0.0036580483
        %v997 = vmul.f32 %v992, %v996
        %v998 = vadd.f32 %v997, 0.05243302
        %v999 = vmul.f32 %v992, %v998
        %v1000 = vadd.f32 %v999, 0.18741608
        %v1001 = vmul.f32 %v992, %v1000
        %v1002 = vadd.f32 %v1001, 1.1283791
        %v1003 = vmul.f32 %v624, %v1002
        %v1004 = vmul.f32 %v992, 3.8918573e-05
        %v1005 = vadd.f32 %v1004, 0.001143296
        %v1006 = vmul.f32 %v992, %v1005
        %v1007 = vadd.f32 %v1006, 0.014752088
        %v1008 = vmul.f32 %v992, %v1007
        %v1009 = vadd.f32 %v1008, 0.112945676
        %v1010 = vmul.f32 %v992, %v1009
        %v1011 = vadd.f32 %v1010, 0.4994258
        %v1012 = vmul.f32 %v992, %v1011
        %v1013 = vadd.f32 %v1012, 1.0
        %v1014 = vrcp.pop %v1013
        %v1015 = vmul.f32 %v1013, %v1014
        %v1016 = vsub.f32 1.0, %v1015
        %v1017 = vmul.f32 %v1014, %v1016
        %v1018 = vadd.f32 %v1014, %v1017
        %vm1019 = vweird.f32 %v1013
        %vm1020 = vweird.f32 %v1014
        %vm1021 = vmor %vm1019, %vm1020
        %v1022 = vsel %vm1021, %v1014, %v1018
        %v1023 = vand.u32 2147483647, %v1013
        %vm1024 = vcmp.eq.f32.partialorder %v1023, 8.507059e+37
        %v1025 = vand.u32 %v1013, 2147483648
        %v1026 = vor.u32 1.1754944e-38, %v1025
        %v1027 = vsel %vm1024, %v1026, %v1022
        %v1028 = vmul.f32 %v1003, %v1027
        %v1029 = vmin.f32 %v1028, 1.0
        %v1030 = vmax.f32 %v1029, -1.0
        %v1031 = vmul.f32 %v625, %v625
        %v1032 = vmin.f32 16.0, %v1031
        %v1033 = vmul.f32 %v1032, 2.1237322e-06
        %v1034 = vadd.f32 %v1033, 0.00028619796
        %v1035 = vmul.f32 %v1032, %v1034
        %v1036 = vadd.f32 %v1035, 0.0036580483
        %v1037 = vmul.f32 %v1032, %v1036
        %v1038 = vadd.f32 %v1037, 0.05243302
        %v1039 = vmul.f32 %v1032, %v1038
        %v1040 = vadd.f32 %v1039, 0.18741608
        %v1041 = vmul.f32 %v1032, %v1040
        %v1042 = vadd.f32 %v1041, 1.1283791
        %v1043 = vmul.f32 %v625, %v1042
        %v1044 = vmul.f32 %v1032, 3.8918573e-05
        %v1045 = vadd.f32 %v1044, 0.001143296
        %v1046 = vmul.f32 %v1032, %v1045
        %v1047 = vadd.f32 %v1046, 0.014752088
        %v1048 = vmul.f32 %v1032, %v1047
        %v1049 = vadd.f32 %v1048, 0.112945676
        %v1050 = vmul.f32 %v1032, %v1049
        %v1051 = vadd.f32 %v1050, 0.4994258
        %v1052 = vmul.f32 %v1032, %v1051
        %v1053 = vadd.f32 %v1052, 1.0
        %v1054 = vrcp.pop %v1053
        %v1055 = vmul.f32 %v1053, %v1054
        %v1056 = vsub.f32 1.0, %v1055
        %v1057 = vmul.f32 %v1054, %v1056
        %v1058 = vadd.f32 %v1054, %v1057
        %vm1059 = vweird.f32 %v1053
        %vm1060 = vweird.f32 %v1054
        %vm1061 = vmor %vm1059, %vm1060
        %v1062 = vsel %vm1061, %v1054, %v1058
        %v1063 = vand.u32 2147483647, %v1053
        %vm1064 = vcmp.eq.f32.partialorder %v1063, 8.507059e+37
        %v1065 = vand.u32 %v1053, 2147483648
        %v1066 = vor.u32 1.1754944e-38, %v1065
        %v1067 = vsel %vm1064, %v1066, %v1062
        %v1068 = vmul.f32 %v1043, %v1067
        %v1069 = vmin.f32 %v1068, 1.0
        %v1070 = vmax.f32 %v1069, -1.0
        %v1071 = vmul.f32 %v626, %v626
        %v1072 = vmin.f32 16.0, %v1071
        %v1073 = vmul.f32 %v1072, 2.1237322e-06
        %v1074 = vadd.f32 %v1073, 0.00028619796
        %v1075 = vmul.f32 %v1072, %v1074
        %v1076 = vadd.f32 %v1075, 0.0036580483
        %v1077 = vmul.f32 %v1072, %v1076
        %v1078 = vadd.f32 %v1077, 0.05243302
        %v1079 = vmul.f32 %v1072, %v1078
        %v1080 = vadd.f32 %v1079, 0.18741608
        %v1081 = vmul.f32 %v1072, %v1080
        %v1082 = vadd.f32 %v1081, 1.1283791
        %v1083 = vmul.f32 %v626, %v1082
        %v1084 = vmul.f32 %v1072, 3.8918573e-05
        %v1085 = vadd.f32 %v1084, 0.001143296
        %v1086 = vmul.f32 %v1072, %v1085
        %v1087 = vadd.f32 %v1086, 0.014752088
        %v1088 = vmul.f32 %v1072, %v1087
        %v1089 = vadd.f32 %v1088, 0.112945676
        %v1090 = vmul.f32 %v1072, %v1089
        %v1091 = vadd.f32 %v1090, 0.4994258
        %v1092 = vmul.f32 %v1072, %v1091
        %v1093 = vadd.f32 %v1092, 1.0
        %v1094 = vrcp.pop %v1093
        %v1095 = vmul.f32 %v1093, %v1094
        %v1096 = vsub.f32 1.0, %v1095
        %v1097 = vmul.f32 %v1094, %v1096
        %v1098 = vadd.f32 %v1094, %v1097
        %vm1099 = vweird.f32 %v1093
        %vm1100 = vweird.f32 %v1094
        %vm1101 = vmor %vm1099, %vm1100
        %v1102 = vsel %vm1101, %v1094, %v1098
        %v1103 = vand.u32 2147483647, %v1093
        %vm1104 = vcmp.eq.f32.partialorder %v1103, 8.507059e+37
        %v1105 = vand.u32 %v1093, 2147483648
        %v1106 = vor.u32 1.1754944e-38, %v1105
        %v1107 = vsel %vm1104, %v1106, %v1102
        %v1108 = vmul.f32 %v1083, %v1107
        %v1109 = vmin.f32 %v1108, 1.0
        %v1110 = vmax.f32 %v1109, -1.0
        %v1111 = vmul.f32 %v627, %v627
        %v1112 = vmin.f32 16.0, %v1111
        %v1113 = vmul.f32 %v1112, 2.1237322e-06
        %v1114 = vadd.f32 %v1113, 0.00028619796
        %v1115 = vmul.f32 %v1112, %v1114
        %v1116 = vadd.f32 %v1115, 0.0036580483
        %v1117 = vmul.f32 %v1112, %v1116
        %v1118 = vadd.f32 %v1117, 0.05243302
        %v1119 = vmul.f32 %v1112, %v1118
        %v1120 = vadd.f32 %v1119, 0.18741608
        %v1121 = vmul.f32 %v1112, %v1120
        %v1122 = vadd.f32 %v1121, 1.1283791
        %v1123 = vmul.f32 %v627, %v1122
        %v1124 = vmul.f32 %v1112, 3.8918573e-05
        %v1125 = vadd.f32 %v1124, 0.001143296
        %v1126 = vmul.f32 %v1112, %v1125
        %v1127 = vadd.f32 %v1126, 0.014752088
        %v1128 = vmul.f32 %v1112, %v1127
        %v1129 = vadd.f32 %v1128, 0.112945676
        %v1130 = vmul.f32 %v1112, %v1129
        %v1131 = vadd.f32 %v1130, 0.4994258
        %v1132 = vmul.f32 %v1112, %v1131
        %v1133 = vadd.f32 %v1132, 1.0
        %v1134 = vrcp.pop %v1133
        %v1135 = vmul.f32 %v1133, %v1134
        %v1136 = vsub.f32 1.0, %v1135
        %v1137 = vmul.f32 %v1134, %v1136
        %v1138 = vadd.f32 %v1134, %v1137
        %vm1139 = vweird.f32 %v1133
        %vm1140 = vweird.f32 %v1134
        %vm1141 = vmor %vm1139, %vm1140
        %v1142 = vsel %vm1141, %v1134, %v1138
        %v1143 = vand.u32 2147483647, %v1133
        %vm1144 = vcmp.eq.f32.partialorder %v1143, 8.507059e+37
        %v1145 = vand.u32 %v1133, 2147483648
        %v1146 = vor.u32 1.1754944e-38, %v1145
        %v1147 = vsel %vm1144, %v1146, %v1142
        %v1148 = vmul.f32 %v1123, %v1147
        %v1149 = vmin.f32 %v1148, 1.0
        %v1150 = vmax.f32 %v1149, -1.0
        %v1151 = vmul.f32 %v628, %v628
        %v1152 = vmin.f32 16.0, %v1151
        %v1153 = vmul.f32 %v1152, 2.1237322e-06
        %v1154 = vadd.f32 %v1153, 0.00028619796
        %v1155 = vmul.f32 %v1152, %v1154
        %v1156 = vadd.f32 %v1155, 0.0036580483
        %v1157 = vmul.f32 %v1152, %v1156
        %v1158 = vadd.f32 %v1157, 0.05243302
        %v1159 = vmul.f32 %v1152, %v1158
        %v1160 = vadd.f32 %v1159, 0.18741608
        %v1161 = vmul.f32 %v1152, %v1160
        %v1162 = vadd.f32 %v1161, 1.1283791
        %v1163 = vmul.f32 %v628, %v1162
        %v1164 = vmul.f32 %v1152, 3.8918573e-05
        %v1165 = vadd.f32 %v1164, 0.001143296
        %v1166 = vmul.f32 %v1152, %v1165
        %v1167 = vadd.f32 %v1166, 0.014752088
        %v1168 = vmul.f32 %v1152, %v1167
        %v1169 = vadd.f32 %v1168, 0.112945676
        %v1170 = vmul.f32 %v1152, %v1169
        %v1171 = vadd.f32 %v1170, 0.4994258
        %v1172 = vmul.f32 %v1152, %v1171
        %v1173 = vadd.f32 %v1172, 1.0
        %v1174 = vrcp.pop %v1173
        %v1175 = vmul.f32 %v1173, %v1174
        %v1176 = vsub.f32 1.0, %v1175
        %v1177 = vmul.f32 %v1174, %v1176
        %v1178 = vadd.f32 %v1174, %v1177
        %vm1179 = vweird.f32 %v1173
        %vm1180 = vweird.f32 %v1174
        %vm1181 = vmor %vm1179, %vm1180
        %v1182 = vsel %vm1181, %v1174, %v1178
        %v1183 = vand.u32 2147483647, %v1173
        %vm1184 = vcmp.eq.f32.partialorder %v1183, 8.507059e+37
        %v1185 = vand.u32 %v1173, 2147483648
        %v1186 = vor.u32 1.1754944e-38, %v1185
        %v1187 = vsel %vm1184, %v1186, %v1182
        %v1188 = vmul.f32 %v1163, %v1187
        %v1189 = vmin.f32 %v1188, 1.0
        %v1190 = vmax.f32 %v1189, -1.0
        %v1191 = vmul.f32 %v629, %v629
        %v1192 = vmin.f32 16.0, %v1191
        %v1193 = vmul.f32 %v1192, 2.1237322e-06
        %v1194 = vadd.f32 %v1193, 0.00028619796
        %v1195 = vmul.f32 %v1192, %v1194
        %v1196 = vadd.f32 %v1195, 0.0036580483
        %v1197 = vmul.f32 %v1192, %v1196
        %v1198 = vadd.f32 %v1197, 0.05243302
        %v1199 = vmul.f32 %v1192, %v1198
        %v1200 = vadd.f32 %v1199, 0.18741608
        %v1201 = vmul.f32 %v1192, %v1200
        %v1202 = vadd.f32 %v1201, 1.1283791
        %v1203 = vmul.f32 %v629, %v1202
        %v1204 = vmul.f32 %v1192, 3.8918573e-05
        %v1205 = vadd.f32 %v1204, 0.001143296
        %v1206 = vmul.f32 %v1192, %v1205
        %v1207 = vadd.f32 %v1206, 0.014752088
        %v1208 = vmul.f32 %v1192, %v1207
        %v1209 = vadd.f32 %v1208, 0.112945676
        %v1210 = vmul.f32 %v1192, %v1209
        %v1211 = vadd.f32 %v1210, 0.4994258
        %v1212 = vmul.f32 %v1192, %v1211
        %v1213 = vadd.f32 %v1212, 1.0
        %v1214 = vrcp.pop %v1213
        %v1215 = vmul.f32 %v1213, %v1214
        %v1216 = vsub.f32 1.0, %v1215
        %v1217 = vmul.f32 %v1214, %v1216
        %v1218 = vadd.f32 %v1214, %v1217
        %vm1219 = vweird.f32 %v1213
        %vm1220 = vweird.f32 %v1214
        %vm1221 = vmor %vm1219, %vm1220
        %v1222 = vsel %vm1221, %v1214, %v1218
        %v1223 = vand.u32 2147483647, %v1213
        %vm1224 = vcmp.eq.f32.partialorder %v1223, 8.507059e+37
        %v1225 = vand.u32 %v1213, 2147483648
        %v1226 = vor.u32 1.1754944e-38, %v1225
        %v1227 = vsel %vm1224, %v1226, %v1222
        %v1228 = vmul.f32 %v1203, %v1227
        %v1229 = vmin.f32 %v1228, 1.0
        %v1230 = vmax.f32 %v1229, -1.0
        %v1231 = vmul.f32 %v630, %v630
        %v1232 = vmin.f32 16.0, %v1231
        %v1233 = vmul.f32 %v1232, 2.1237322e-06
        %v1234 = vadd.f32 %v1233, 0.00028619796
        %v1235 = vmul.f32 %v1232, %v1234
        %v1236 = vadd.f32 %v1235, 0.0036580483
        %v1237 = vmul.f32 %v1232, %v1236
        %v1238 = vadd.f32 %v1237, 0.05243302
        %v1239 = vmul.f32 %v1232, %v1238
        %v1240 = vadd.f32 %v1239, 0.18741608
        %v1241 = vmul.f32 %v1232, %v1240
        %v1242 = vadd.f32 %v1241, 1.1283791
        %v1243 = vmul.f32 %v630, %v1242
        %v1244 = vmul.f32 %v1232, 3.8918573e-05
        %v1245 = vadd.f32 %v1244, 0.001143296
        %v1246 = vmul.f32 %v1232, %v1245
        %v1247 = vadd.f32 %v1246, 0.014752088
        %v1248 = vmul.f32 %v1232, %v1247
        %v1249 = vadd.f32 %v1248, 0.112945676
        %v1250 = vmul.f32 %v1232, %v1249
        %v1251 = vadd.f32 %v1250, 0.4994258
        %v1252 = vmul.f32 %v1232, %v1251
        %v1253 = vadd.f32 %v1252, 1.0
        %v1254 = vrcp.pop %v1253
        %v1255 = vmul.f32 %v1253, %v1254
        %v1256 = vsub.f32 1.0, %v1255
        %v1257 = vmul.f32 %v1254, %v1256
        %v1258 = vadd.f32 %v1254, %v1257
        %vm1259 = vweird.f32 %v1253
        %vm1260 = vweird.f32 %v1254
        %vm1261 = vmor %vm1259, %vm1260
        %v1262 = vsel %vm1261, %v1254, %v1258
        %v1263 = vand.u32 2147483647, %v1253
        %vm1264 = vcmp.eq.f32.partialorder %v1263, 8.507059e+37
        %v1265 = vand.u32 %v1253, 2147483648
        %v1266 = vor.u32 1.1754944e-38, %v1265
        %v1267 = vsel %vm1264, %v1266, %v1262
        %v1268 = vmul.f32 %v1243, %v1267
        %v1269 = vmin.f32 %v1268, 1.0
        %v1270 = vmax.f32 %v1269, -1.0
        %v1271 = vadd.f32 %v670, 1.0
        %v1272 = vadd.f32 %v710, 1.0
        %v1273 = vadd.f32 %v750, 1.0
        %v1274 = vadd.f32 %v790, 1.0
        %v1275 = vadd.f32 %v830, 1.0
        %v1276 = vadd.f32 %v870, 1.0
        %v1277 = vadd.f32 %v910, 1.0
        %v1278 = vadd.f32 %v950, 1.0
        %v1279 = vadd.f32 %v990, 1.0
        %v1280 = vadd.f32 %v1030, 1.0
        %v1281 = vadd.f32 %v1070, 1.0
        %v1282 = vadd.f32 %v1110, 1.0
        %v1283 = vadd.f32 %v1150, 1.0
        %v1284 = vadd.f32 %v1190, 1.0
        %v1285 = vadd.f32 %v1230, 1.0
        %v1286 = vadd.f32 %v1270, 1.0
        %v1287 = vmul.f32 %v599, %v1271
        %v1288 = vmul.f32 %v600, %v1272
        %v1289 = vmul.f32 %v601, %v1273
        %v1290 = vmul.f32 %v602, %v1274
        %v1291 = vmul.f32 %v603, %v1275
        %v1292 = vmul.f32 %v604, %v1276
        %v1293 = vmul.f32 %v605, %v1277
        %v1294 = vmul.f32 %v606, %v1278
        %v1295 = vmul.f32 %v607, %v1279
        %v1296 = vmul.f32 %v608, %v1280
        %v1297 = vmul.f32 %v609, %v1281
        %v1298 = vmul.f32 %v610, %v1282
        %v1299 = vmul.f32 %v611, %v1283
        %v1300 = vmul.f32 %v612, %v1284
        %v1301 = vmul.f32 %v613, %v1285
        %v1302 = vmul.f32 %v614, %v1286
        %1303 = vadd.xlane.f32.xlu0 %v1287
        %v1304 = vpop.xlane.xlu0 %1303
        %1305 = vadd.xlane.f32.xlu0 %v1288
        %v1306 = vpop.xlane.xlu0 %1305
        %1307 = vadd.xlane.f32.xlu0 %v1289
        %v1308 = vpop.xlane.xlu0 %1307
        %1309 = vadd.xlane.f32.xlu0 %v1290
        %v1310 = vpop.xlane.xlu0 %1309
        %1311 = vadd.xlane.f32.xlu0 %v1291
        %v1312 = vpop.xlane.xlu0 %1311
        %1313 = vadd.xlane.f32.xlu0 %v1292
        %v1314 = vpop.xlane.xlu0 %1313
        %1315 = vadd.xlane.f32.xlu0 %v1293
        %v1316 = vpop.xlane.xlu0 %1315
        %1317 = vadd.xlane.f32.xlu0 %v1294
        %v1318 = vpop.xlane.xlu0 %1317
        %1319 = vadd.xlane.f32.xlu0 %v1295
        %v1320 = vpop.xlane.xlu0 %1319
        %1321 = vadd.xlane.f32.xlu0 %v1296
        %v1322 = vpop.xlane.xlu0 %1321
        %1323 = vadd.xlane.f32.xlu0 %v1297
        %v1324 = vpop.xlane.xlu0 %1323
        %1325 = vadd.xlane.f32.xlu0 %v1298
        %v1326 = vpop.xlane.xlu0 %1325
        %1327 = vadd.xlane.f32.xlu0 %v1299
        %v1328 = vpop.xlane.xlu0 %1327
        %1329 = vadd.xlane.f32.xlu0 %v1300
        %v1330 = vpop.xlane.xlu0 %1329
        %1331 = vadd.xlane.f32.xlu0 %v1301
        %v1332 = vpop.xlane.xlu0 %1331
        %1333 = vadd.xlane.f32.xlu0 %v1302
        %v1334 = vpop.xlane.xlu0 %1333
        %v1335 = vmul.f32 %v1304, 0.015625
        %v1336 = vmul.f32 %v1306, 0.015625
        %v1337 = vmul.f32 %v1308, 0.015625
        %v1338 = vmul.f32 %v1310, 0.015625
        %v1339 = vmul.f32 %v1312, 0.015625
        %v1340 = vmul.f32 %v1314, 0.015625
        %v1341 = vmul.f32 %v1316, 0.015625
        %v1342 = vmul.f32 %v1318, 0.015625
        %v1343 = vmul.f32 %v1320, 0.015625
        %v1344 = vmul.f32 %v1322, 0.015625
        %v1345 = vmul.f32 %v1324, 0.015625
        %v1346 = vmul.f32 %v1326, 0.015625
        %v1347 = vmul.f32 %v1328, 0.015625
        %v1348 = vmul.f32 %v1330, 0.015625
        %v1349 = vmul.f32 %v1332, 0.015625
        %v1350 = vmul.f32 %v1334, 0.015625
        %v1351 = vsub.f32 %v1287, %v1335
        %v1352 = vsub.f32 %v1288, %v1336
        %v1353 = vsub.f32 %v1289, %v1337
        %v1354 = vsub.f32 %v1290, %v1338
        %v1355 = vsub.f32 %v1291, %v1339
        %v1356 = vsub.f32 %v1292, %v1340
        %v1357 = vsub.f32 %v1293, %v1341
        %v1358 = vsub.f32 %v1294, %v1342
        %v1359 = vsub.f32 %v1295, %v1343
        %v1360 = vsub.f32 %v1296, %v1344
        %v1361 = vsub.f32 %v1297, %v1345
        %v1362 = vsub.f32 %v1298, %v1346
        %v1363 = vsub.f32 %v1299, %v1347
        %v1364 = vsub.f32 %v1300, %v1348
        %v1365 = vsub.f32 %v1301, %v1349
        %v1366 = vsub.f32 %v1302, %v1350
        %v1367 = vld [vmem:[%s9] sm:$0x1]
        %v1369 = vperm.slane %v1367, 0
        %v1371 = vmul.f32 %v1351, %v1369
        %v1372 = vmul.f32 %v1352, %v1369
        %v1373 = vmul.f32 %v1353, %v1369
        %v1374 = vmul.f32 %v1354, %v1369
        %v1375 = vmul.f32 %v1355, %v1369
        %v1376 = vmul.f32 %v1356, %v1369
        %v1377 = vmul.f32 %v1357, %v1369
        %v1378 = vmul.f32 %v1358, %v1369
        %v1379 = vmul.f32 %v1359, %v1369
        %v1380 = vmul.f32 %v1360, %v1369
        %v1381 = vmul.f32 %v1361, %v1369
        %v1382 = vmul.f32 %v1362, %v1369
        %v1383 = vmul.f32 %v1363, %v1369
        %v1384 = vmul.f32 %v1364, %v1369
        %v1385 = vmul.f32 %v1365, %v1369
        %v1386 = vmul.f32 %v1366, %v1369
        %v1387 = vmul.f32 %v1371, %v1371
        %v1388 = vmul.f32 %v1372, %v1372
        %v1389 = vmul.f32 %v1373, %v1373
        %v1390 = vmul.f32 %v1374, %v1374
        %v1391 = vmul.f32 %v1375, %v1375
        %v1392 = vmul.f32 %v1376, %v1376
        %v1393 = vmul.f32 %v1377, %v1377
        %v1394 = vmul.f32 %v1378, %v1378
        %v1395 = vmul.f32 %v1379, %v1379
        %v1396 = vmul.f32 %v1380, %v1380
        %v1397 = vmul.f32 %v1381, %v1381
        %v1398 = vmul.f32 %v1382, %v1382
        %v1399 = vmul.f32 %v1383, %v1383
        %v1400 = vmul.f32 %v1384, %v1384
        %v1401 = vmul.f32 %v1385, %v1385
        %v1402 = vmul.f32 %v1386, %v1386
        %1403 = vadd.xlane.f32.xlu0 %v1387
        %v1404 = vpop.xlane.xlu0 %1403
        %1405 = vadd.xlane.f32.xlu0 %v1388
        %v1406 = vpop.xlane.xlu0 %1405
        %1407 = vadd.xlane.f32.xlu0 %v1389
        %v1408 = vpop.xlane.xlu0 %1407
        %1409 = vadd.xlane.f32.xlu0 %v1390
        %v1410 = vpop.xlane.xlu0 %1409
        %1411 = vadd.xlane.f32.xlu0 %v1391
        %v1412 = vpop.xlane.xlu0 %1411
        %1413 = vadd.xlane.f32.xlu0 %v1392
        %v1414 = vpop.xlane.xlu0 %1413
        %1415 = vadd.xlane.f32.xlu0 %v1393
        %v1416 = vpop.xlane.xlu0 %1415
        %1417 = vadd.xlane.f32.xlu0 %v1394
        %v1418 = vpop.xlane.xlu0 %1417
        %1419 = vadd.xlane.f32.xlu0 %v1395
        %v1420 = vpop.xlane.xlu0 %1419
        %1421 = vadd.xlane.f32.xlu0 %v1396
        %v1422 = vpop.xlane.xlu0 %1421
        %1423 = vadd.xlane.f32.xlu0 %v1397
        %v1424 = vpop.xlane.xlu0 %1423
        %1425 = vadd.xlane.f32.xlu0 %v1398
        %v1426 = vpop.xlane.xlu0 %1425
        %1427 = vadd.xlane.f32.xlu0 %v1399
        %v1428 = vpop.xlane.xlu0 %1427
        %1429 = vadd.xlane.f32.xlu0 %v1400
        %v1430 = vpop.xlane.xlu0 %1429
        %1431 = vadd.xlane.f32.xlu0 %v1401
        %v1432 = vpop.xlane.xlu0 %1431
        %1433 = vadd.xlane.f32.xlu0 %v1402
        %v1434 = vpop.xlane.xlu0 %1433
        %v1435 = vmul.f32 %v1404, 0.015625
        %v1436 = vmul.f32 %v1406, 0.015625
        %v1437 = vmul.f32 %v1408, 0.015625
        %v1438 = vmul.f32 %v1410, 0.015625
        %v1439 = vmul.f32 %v1412, 0.015625
        %v1440 = vmul.f32 %v1414, 0.015625
        %v1441 = vmul.f32 %v1416, 0.015625
        %v1442 = vmul.f32 %v1418, 0.015625
        %v1443 = vmul.f32 %v1420, 0.015625
        %v1444 = vmul.f32 %v1422, 0.015625
        %v1445 = vmul.f32 %v1424, 0.015625
        %v1446 = vmul.f32 %v1426, 0.015625
        %v1447 = vmul.f32 %v1428, 0.015625
        %v1448 = vmul.f32 %v1430, 0.015625
        %v1449 = vmul.f32 %v1432, 0.015625
        %v1450 = vmul.f32 %v1434, 0.015625
        %v1451 = vadd.f32 %v1435, 1e-06
        %v1452 = vadd.f32 %v1436, 1e-06
        %v1453 = vadd.f32 %v1437, 1e-06
        %v1454 = vadd.f32 %v1438, 1e-06
        %v1455 = vadd.f32 %v1439, 1e-06
        %v1456 = vadd.f32 %v1440, 1e-06
        %v1457 = vadd.f32 %v1441, 1e-06
        %v1458 = vadd.f32 %v1442, 1e-06
        %v1459 = vadd.f32 %v1443, 1e-06
        %v1460 = vadd.f32 %v1444, 1e-06
        %v1461 = vadd.f32 %v1445, 1e-06
        %v1462 = vadd.f32 %v1446, 1e-06
        %v1463 = vadd.f32 %v1447, 1e-06
        %v1464 = vadd.f32 %v1448, 1e-06
        %v1465 = vadd.f32 %v1449, 1e-06
        %v1466 = vadd.f32 %v1450, 1e-06
        %v1467 = vrsqrt.pop %v1451
        %v1468 = vmul.f32 %v1467, %v1451
        %v1469 = vmul.f32 %v1468, %v1467
        %v1470 = vmul.f32 0.5, %v1469
        %v1471 = vsub.f32 1.5, %v1470
        %v1472 = vmul.f32 %v1467, %v1471
        %vm1473 = vweird.f32 %v1451
        %vm1474 = vweird.f32 %v1467
        %vm1475 = vmor %vm1473, %vm1474
        %v1476 = vsel %vm1475, %v1467, %v1472
        %v1477 = vrsqrt.pop %v1452
        %v1478 = vmul.f32 %v1477, %v1452
        %v1479 = vmul.f32 %v1478, %v1477
        %v1480 = vmul.f32 0.5, %v1479
        %v1481 = vsub.f32 1.5, %v1480
        %v1482 = vmul.f32 %v1477, %v1481
        %vm1483 = vweird.f32 %v1452
        %vm1484 = vweird.f32 %v1477
        %vm1485 = vmor %vm1483, %vm1484
        %v1486 = vsel %vm1485, %v1477, %v1482
        %v1487 = vrsqrt.pop %v1453
        %v1488 = vmul.f32 %v1487, %v1453
        %v1489 = vmul.f32 %v1488, %v1487
        %v1490 = vmul.f32 0.5, %v1489
        %v1491 = vsub.f32 1.5, %v1490
        %v1492 = vmul.f32 %v1487, %v1491
        %vm1493 = vweird.f32 %v1453
        %vm1494 = vweird.f32 %v1487
        %vm1495 = vmor %vm1493, %vm1494
        %v1496 = vsel %vm1495, %v1487, %v1492
        %v1497 = vrsqrt.pop %v1454
        %v1498 = vmul.f32 %v1497, %v1454
        %v1499 = vmul.f32 %v1498, %v1497
        %v1500 = vmul.f32 0.5, %v1499
        %v1501 = vsub.f32 1.5, %v1500
        %v1502 = vmul.f32 %v1497, %v1501
        %vm1503 = vweird.f32 %v1454
        %vm1504 = vweird.f32 %v1497
        %vm1505 = vmor %vm1503, %vm1504
        %v1506 = vsel %vm1505, %v1497, %v1502
        %v1507 = vrsqrt.pop %v1455
        %v1508 = vmul.f32 %v1507, %v1455
        %v1509 = vmul.f32 %v1508, %v1507
        %v1510 = vmul.f32 0.5, %v1509
        %v1511 = vsub.f32 1.5, %v1510
        %v1512 = vmul.f32 %v1507, %v1511
        %vm1513 = vweird.f32 %v1455
        %vm1514 = vweird.f32 %v1507
        %vm1515 = vmor %vm1513, %vm1514
        %v1516 = vsel %vm1515, %v1507, %v1512
        %v1517 = vrsqrt.pop %v1456
        %v1518 = vmul.f32 %v1517, %v1456
        %v1519 = vmul.f32 %v1518, %v1517
        %v1520 = vmul.f32 0.5, %v1519
        %v1521 = vsub.f32 1.5, %v1520
        %v1522 = vmul.f32 %v1517, %v1521
        %vm1523 = vweird.f32 %v1456
        %vm1524 = vweird.f32 %v1517
        %vm1525 = vmor %vm1523, %vm1524
        %v1526 = vsel %vm1525, %v1517, %v1522
        %v1527 = vrsqrt.pop %v1457
        %v1528 = vmul.f32 %v1527, %v1457
        %v1529 = vmul.f32 %v1528, %v1527
        %v1530 = vmul.f32 0.5, %v1529
        %v1531 = vsub.f32 1.5, %v1530
        %v1532 = vmul.f32 %v1527, %v1531
        %vm1533 = vweird.f32 %v1457
        %vm1534 = vweird.f32 %v1527
        %vm1535 = vmor %vm1533, %vm1534
        %v1536 = vsel %vm1535, %v1527, %v1532
        %v1537 = vrsqrt.pop %v1458
        %v1538 = vmul.f32 %v1537, %v1458
        %v1539 = vmul.f32 %v1538, %v1537
        %v1540 = vmul.f32 0.5, %v1539
        %v1541 = vsub.f32 1.5, %v1540
        %v1542 = vmul.f32 %v1537, %v1541
        %vm1543 = vweird.f32 %v1458
        %vm1544 = vweird.f32 %v1537
        %vm1545 = vmor %vm1543, %vm1544
        %v1546 = vsel %vm1545, %v1537, %v1542
        %v1547 = vrsqrt.pop %v1459
        %v1548 = vmul.f32 %v1547, %v1459
        %v1549 = vmul.f32 %v1548, %v1547
        %v1550 = vmul.f32 0.5, %v1549
        %v1551 = vsub.f32 1.5, %v1550
        %v1552 = vmul.f32 %v1547, %v1551
        %vm1553 = vweird.f32 %v1459
        %vm1554 = vweird.f32 %v1547
        %vm1555 = vmor %vm1553, %vm1554
        %v1556 = vsel %vm1555, %v1547, %v1552
        %v1557 = vrsqrt.pop %v1460
        %v1558 = vmul.f32 %v1557, %v1460
        %v1559 = vmul.f32 %v1558, %v1557
        %v1560 = vmul.f32 0.5, %v1559
        %v1561 = vsub.f32 1.5, %v1560
        %v1562 = vmul.f32 %v1557, %v1561
        %vm1563 = vweird.f32 %v1460
        %vm1564 = vweird.f32 %v1557
        %vm1565 = vmor %vm1563, %vm1564
        %v1566 = vsel %vm1565, %v1557, %v1562
        %v1567 = vrsqrt.pop %v1461
        %v1568 = vmul.f32 %v1567, %v1461
        %v1569 = vmul.f32 %v1568, %v1567
        %v1570 = vmul.f32 0.5, %v1569
        %v1571 = vsub.f32 1.5, %v1570
        %v1572 = vmul.f32 %v1567, %v1571
        %vm1573 = vweird.f32 %v1461
        %vm1574 = vweird.f32 %v1567
        %vm1575 = vmor %vm1573, %vm1574
        %v1576 = vsel %vm1575, %v1567, %v1572
        %v1577 = vrsqrt.pop %v1462
        %v1578 = vmul.f32 %v1577, %v1462
        %v1579 = vmul.f32 %v1578, %v1577
        %v1580 = vmul.f32 0.5, %v1579
        %v1581 = vsub.f32 1.5, %v1580
        %v1582 = vmul.f32 %v1577, %v1581
        %vm1583 = vweird.f32 %v1462
        %vm1584 = vweird.f32 %v1577
        %vm1585 = vmor %vm1583, %vm1584
        %v1586 = vsel %vm1585, %v1577, %v1582
        %v1587 = vrsqrt.pop %v1463
        %v1588 = vmul.f32 %v1587, %v1463
        %v1589 = vmul.f32 %v1588, %v1587
        %v1590 = vmul.f32 0.5, %v1589
        %v1591 = vsub.f32 1.5, %v1590
        %v1592 = vmul.f32 %v1587, %v1591
        %vm1593 = vweird.f32 %v1463
        %vm1594 = vweird.f32 %v1587
        %vm1595 = vmor %vm1593, %vm1594
        %v1596 = vsel %vm1595, %v1587, %v1592
        %v1597 = vrsqrt.pop %v1464
        %v1598 = vmul.f32 %v1597, %v1464
        %v1599 = vmul.f32 %v1598, %v1597
        %v1600 = vmul.f32 0.5, %v1599
        %v1601 = vsub.f32 1.5, %v1600
        %v1602 = vmul.f32 %v1597, %v1601
        %vm1603 = vweird.f32 %v1464
        %vm1604 = vweird.f32 %v1597
        %vm1605 = vmor %vm1603, %vm1604
        %v1606 = vsel %vm1605, %v1597, %v1602
        %v1607 = vrsqrt.pop %v1465
        %v1608 = vmul.f32 %v1607, %v1465
        %v1609 = vmul.f32 %v1608, %v1607
        %v1610 = vmul.f32 0.5, %v1609
        %v1611 = vsub.f32 1.5, %v1610
        %v1612 = vmul.f32 %v1607, %v1611
        %vm1613 = vweird.f32 %v1465
        %vm1614 = vweird.f32 %v1607
        %vm1615 = vmor %vm1613, %vm1614
        %v1616 = vsel %vm1615, %v1607, %v1612
        %v1617 = vrsqrt.pop %v1466
        %v1618 = vmul.f32 %v1617, %v1466
        %v1619 = vmul.f32 %v1618, %v1617
        %v1620 = vmul.f32 0.5, %v1619
        %v1621 = vsub.f32 1.5, %v1620
        %v1622 = vmul.f32 %v1617, %v1621
        %vm1623 = vweird.f32 %v1466
        %vm1624 = vweird.f32 %v1617
        %vm1625 = vmor %vm1623, %vm1624
        %v1626 = vsel %vm1625, %v1617, %v1622
        %v1627 = vmul.f32 %v1371, %v1476
        %v1628 = vmul.f32 %v1372, %v1486
        %v1629 = vmul.f32 %v1373, %v1496
        %v1630 = vmul.f32 %v1374, %v1506
        %v1631 = vmul.f32 %v1375, %v1516
        %v1632 = vmul.f32 %v1376, %v1526
        %v1633 = vmul.f32 %v1377, %v1536
        %v1634 = vmul.f32 %v1378, %v1546
        %v1635 = vmul.f32 %v1379, %v1556
        %v1636 = vmul.f32 %v1380, %v1566
        %v1637 = vmul.f32 %v1381, %v1576
        %v1638 = vmul.f32 %v1382, %v1586
        %v1639 = vmul.f32 %v1383, %v1596
        %v1640 = vmul.f32 %v1384, %v1606
        %v1641 = vmul.f32 %v1385, %v1616
        %v1642 = vmul.f32 %v1386, %v1626
        %v1643 = vld [vmem:[%s3] sm:$0x1]
        %v1645 = vperm.slane %v1643, 0
        %v1647 = vmul.f32 %v1627, %v1645
        %v1648 = vmul.f32 %v1628, %v1645
        %v1649 = vmul.f32 %v1629, %v1645
        %v1650 = vmul.f32 %v1630, %v1645
        %v1651 = vmul.f32 %v1631, %v1645
        %v1652 = vmul.f32 %v1632, %v1645
        %v1653 = vmul.f32 %v1633, %v1645
        %v1654 = vmul.f32 %v1634, %v1645
        %v1655 = vmul.f32 %v1635, %v1645
        %v1656 = vmul.f32 %v1636, %v1645
        %v1657 = vmul.f32 %v1637, %v1645
        %v1658 = vmul.f32 %v1638, %v1645
        %v1659 = vmul.f32 %v1639, %v1645
        %v1660 = vmul.f32 %v1640, %v1645
        %v1661 = vmul.f32 %v1641, %v1645
        %v1662 = vmul.f32 %v1642, %v1645
        %v1663 = vld [vmem:[%s4] sm:$0x1]
        %v1665 = vperm.slane %v1663, 0
        %v1667 = vadd.f32 %v1647, %v1665
        %v1668 = vadd.f32 %v1648, %v1665
        %v1669 = vadd.f32 %v1649, %v1665
        %v1670 = vadd.f32 %v1650, %v1665
        %v1671 = vadd.f32 %v1651, %v1665
        %v1672 = vadd.f32 %v1652, %v1665
        %v1673 = vadd.f32 %v1653, %v1665
        %v1674 = vadd.f32 %v1654, %v1665
        %v1675 = vadd.f32 %v1655, %v1665
        %v1676 = vadd.f32 %v1656, %v1665
        %v1677 = vadd.f32 %v1657, %v1665
        %v1678 = vadd.f32 %v1658, %v1665
        %v1679 = vadd.f32 %v1659, %v1665
        %v1680 = vadd.f32 %v1660, %v1665
        %v1681 = vadd.f32 %v1661, %v1665
        %v1682 = vadd.f32 %v1662, %v1665
        %v1683 = vld [vmem:[#allocation7] sm:$0xff]
        %v1684 = vld [vmem:[#allocation7 + $0x8] sm:$0xff]
        %v1685 = vld [vmem:[#allocation7 + $0x10] sm:$0xff]
        %v1686 = vld [vmem:[#allocation7 + $0x18] sm:$0xff]
        %v1687 = vld [vmem:[#allocation7 + $0x20] sm:$0xff]
        %v1688 = vld [vmem:[#allocation7 + $0x28] sm:$0xff]
        %v1689 = vld [vmem:[#allocation7 + $0x30] sm:$0xff]
        %v1690 = vld [vmem:[#allocation7 + $0x38] sm:$0xff]
        %v1691 = vld [vmem:[#allocation7 + $0x40] sm:$0xff]
        %v1692 = vld [vmem:[#allocation7 + $0x48] sm:$0xff]
        %v1693 = vld [vmem:[#allocation7 + $0x50] sm:$0xff]
        %v1694 = vld [vmem:[#allocation7 + $0x58] sm:$0xff]
        %v1695 = vld [vmem:[#allocation7 + $0x60] sm:$0xff]
        %v1696 = vld [vmem:[#allocation7 + $0x68] sm:$0xff]
        %v1697 = vld [vmem:[#allocation7 + $0x70] sm:$0xff]
        %v1698 = vld [vmem:[#allocation7 + $0x78] sm:$0xff]
        %v1699 = vld [vmem:[%s6] sm:$0x1]
        %v1701 = vperm.slane %v1699, 0
        %1703 = vmatpush.msra.mxu0 %v1698
        %1704 = vmatpush.msra.mxu0 %v1697
        %1705 = vmatpush.msra.mxu0 %v1696
        %1706 = vmatpush.msra.mxu0 %v1695
        %1707 = vmatpush.msra.mxu0 %v1694
        %1708 = vmatpush.msra.mxu0 %v1693
        %1709 = vmatpush.msra.mxu0 %v1692
        %1710 = vmatpush.msra.mxu0 %v1691
        %1711 = vmatpush.msra.mxu0 %v1690
        %1712 = vmatpush.msra.mxu0 %v1689
        %1713 = vmatpush.msra.mxu0 %v1688
        %1714 = vmatpush.msra.mxu0 %v1687
        %1715 = vmatpush.msra.mxu0 %v1686
        %1716 = vmatpush.msra.mxu0 %v1685
        %1717 = vmatpush.msra.mxu0 %v1684
        %1718 = vmatpush.msra.mxu0 %v1683
        %1719 = vmatmul.f32.gmra.mxu0 %v1667
        %v1720 = vpop.f32.mrf.mxu0
        %v1721 = vadd.f32 %v1701, %v1720
        %1722 = vmatmul.f32.gmra.mxu0 %v1668
        %v1723 = vpop.f32.mrf.mxu0
        %v1724 = vadd.f32 %v1701, %v1723
        %1725 = vmatmul.f32.gmra.mxu0 %v1669
        %v1726 = vpop.f32.mrf.mxu0
        %v1727 = vadd.f32 %v1701, %v1726
        %1728 = vmatmul.f32.gmra.mxu0 %v1670
        %v1729 = vpop.f32.mrf.mxu0
        %v1730 = vadd.f32 %v1701, %v1729
        %1731 = vmatmul.f32.gmra.mxu0 %v1671
        %v1732 = vpop.f32.mrf.mxu0
        %v1733 = vadd.f32 %v1701, %v1732
        %1734 = vmatmul.f32.gmra.mxu0 %v1672
        %v1735 = vpop.f32.mrf.mxu0
        %v1736 = vadd.f32 %v1701, %v1735
        %1737 = vmatmul.f32.gmra.mxu0 %v1673
        %v1738 = vpop.f32.mrf.mxu0
        %v1739 = vadd.f32 %v1701, %v1738
        %1740 = vmatmul.f32.gmra.mxu0 %v1674
        %v1741 = vpop.f32.mrf.mxu0
        %v1742 = vadd.f32 %v1701, %v1741
        %1743 = vmatmul.f32.gmra.mxu0 %v1675
        %v1744 = vpop.f32.mrf.mxu0
        %v1745 = vadd.f32 %v1701, %v1744
        %1746 = vmatmul.f32.gmra.mxu0 %v1676
        %v1747 = vpop.f32.mrf.mxu0
        %v1748 = vadd.f32 %v1701, %v1747
        %1749 = vmatmul.f32.gmra.mxu0 %v1677
        %v1750 = vpop.f32.mrf.mxu0
        %v1751 = vadd.f32 %v1701, %v1750
        %1752 = vmatmul.f32.gmra.mxu0 %v1678
        %v1753 = vpop.f32.mrf.mxu0
        %v1754 = vadd.f32 %v1701, %v1753
        %1755 = vmatmul.f32.gmra.mxu0 %v1679
        %v1756 = vpop.f32.mrf.mxu0
        %v1757 = vadd.f32 %v1701, %v1756
        %1758 = vmatmul.f32.gmra.mxu0 %v1680
        %v1759 = vpop.f32.mrf.mxu0
        %v1760 = vadd.f32 %v1701, %v1759
        %1761 = vmatmul.f32.gmra.mxu0 %v1681
        %v1762 = vpop.f32.mrf.mxu0
        %v1763 = vadd.f32 %v1701, %v1762
        %1764 = vmatmul.f32.gmra.mxu0 %v1682
        %v1765 = vpop.f32.mrf.mxu0
        %v1766 = vadd.f32 %v1701, %v1765
        %1767 = vdwg.mxu0
        %v1768 = vmul.f32 %v1721, %v1721
        %v1769 = vmul.f32 %v1724, %v1724
        %v1770 = vmul.f32 %v1727, %v1727
        %v1771 = vmul.f32 %v1730, %v1730
        %v1772 = vmul.f32 %v1733, %v1733
        %v1773 = vmul.f32 %v1736, %v1736
        %v1774 = vmul.f32 %v1739, %v1739
        %v1775 = vmul.f32 %v1742, %v1742
        %v1776 = vmul.f32 %v1745, %v1745
        %v1777 = vmul.f32 %v1748, %v1748
        %v1778 = vmul.f32 %v1751, %v1751
        %v1779 = vmul.f32 %v1754, %v1754
        %v1780 = vmul.f32 %v1757, %v1757
        %v1781 = vmul.f32 %v1760, %v1760
        %v1782 = vmul.f32 %v1763, %v1763
        %v1783 = vmul.f32 %v1766, %v1766
        %1784 = vadd.xlane.f32.xlu0 %v1768
        %v1785 = vpop.xlane.xlu0 %1784
        %1786 = vadd.xlane.f32.xlu0 %v1769
        %v1787 = vpop.xlane.xlu0 %1786
        %1788 = vadd.xlane.f32.xlu0 %v1770
        %v1789 = vpop.xlane.xlu0 %1788
        %1790 = vadd.xlane.f32.xlu0 %v1771
        %v1791 = vpop.xlane.xlu0 %1790
        %1792 = vadd.xlane.f32.xlu0 %v1772
        %v1793 = vpop.xlane.xlu0 %1792
        %1794 = vadd.xlane.f32.xlu0 %v1773
        %v1795 = vpop.xlane.xlu0 %1794
        %1796 = vadd.xlane.f32.xlu0 %v1774
        %v1797 = vpop.xlane.xlu0 %1796
        %1798 = vadd.xlane.f32.xlu0 %v1775
        %v1799 = vpop.xlane.xlu0 %1798
        %1800 = vadd.xlane.f32.xlu0 %v1776
        %v1801 = vpop.xlane.xlu0 %1800
        %1802 = vadd.xlane.f32.xlu0 %v1777
        %v1803 = vpop.xlane.xlu0 %1802
        %1804 = vadd.xlane.f32.xlu0 %v1778
        %v1805 = vpop.xlane.xlu0 %1804
        %1806 = vadd.xlane.f32.xlu0 %v1779
        %v1807 = vpop.xlane.xlu0 %1806
        %1808 = vadd.xlane.f32.xlu0 %v1780
        %v1809 = vpop.xlane.xlu0 %1808
        %1810 = vadd.xlane.f32.xlu0 %v1781
        %v1811 = vpop.xlane.xlu0 %1810
        %1812 = vadd.xlane.f32.xlu0 %v1782
        %v1813 = vpop.xlane.xlu0 %1812
        %1814 = vadd.xlane.f32.xlu0 %v1783
        %v1815 = vpop.xlane.xlu0 %1814
        %v1816 = vmax.f32 %v1785, 1e-24
        %v1817 = vmax.f32 %v1787, 1e-24
        %v1818 = vmax.f32 %v1789, 1e-24
        %v1819 = vmax.f32 %v1791, 1e-24
        %v1820 = vmax.f32 %v1793, 1e-24
        %v1821 = vmax.f32 %v1795, 1e-24
        %v1822 = vmax.f32 %v1797, 1e-24
        %v1823 = vmax.f32 %v1799, 1e-24
        %v1824 = vmax.f32 %v1801, 1e-24
        %v1825 = vmax.f32 %v1803, 1e-24
        %v1826 = vmax.f32 %v1805, 1e-24
        %v1827 = vmax.f32 %v1807, 1e-24
        %v1828 = vmax.f32 %v1809, 1e-24
        %v1829 = vmax.f32 %v1811, 1e-24
        %v1830 = vmax.f32 %v1813, 1e-24
        %v1831 = vmax.f32 %v1815, 1e-24
        %v1832 = vrsqrt.pop %v1816
        %v1833 = vmul.f32 %v1832, %v1816
        %v1834 = vmul.f32 %v1833, %v1832
        %v1835 = vmul.f32 0.5, %v1834
        %v1836 = vsub.f32 1.5, %v1835
        %v1837 = vmul.f32 %v1832, %v1836
        %vm1838 = vweird.f32 %v1816
        %vm1839 = vweird.f32 %v1832
        %vm1840 = vmor %vm1838, %vm1839
        %v1841 = vsel %vm1840, %v1832, %v1837
        %v1842 = vrsqrt.pop %v1817
        %v1843 = vmul.f32 %v1842, %v1817
        %v1844 = vmul.f32 %v1843, %v1842
        %v1845 = vmul.f32 0.5, %v1844
        %v1846 = vsub.f32 1.5, %v1845
        %v1847 = vmul.f32 %v1842, %v1846
        %vm1848 = vweird.f32 %v1817
        %vm1849 = vweird.f32 %v1842
        %vm1850 = vmor %vm1848, %vm1849
        %v1851 = vsel %vm1850, %v1842, %v1847
        %v1852 = vrsqrt.pop %v1818
        %v1853 = vmul.f32 %v1852, %v1818
        %v1854 = vmul.f32 %v1853, %v1852
        %v1855 = vmul.f32 0.5, %v1854
        %v1856 = vsub.f32 1.5, %v1855
        %v1857 = vmul.f32 %v1852, %v1856
        %vm1858 = vweird.f32 %v1818
        %vm1859 = vweird.f32 %v1852
        %vm1860 = vmor %vm1858, %vm1859
        %v1861 = vsel %vm1860, %v1852, %v1857
        %v1862 = vrsqrt.pop %v1819
        %v1863 = vmul.f32 %v1862, %v1819
        %v1864 = vmul.f32 %v1863, %v1862
        %v1865 = vmul.f32 0.5, %v1864
        %v1866 = vsub.f32 1.5, %v1865
        %v1867 = vmul.f32 %v1862, %v1866
        %vm1868 = vweird.f32 %v1819
        %vm1869 = vweird.f32 %v1862
        %vm1870 = vmor %vm1868, %vm1869
        %v1871 = vsel %vm1870, %v1862, %v1867
        %v1872 = vrsqrt.pop %v1820
        %v1873 = vmul.f32 %v1872, %v1820
        %v1874 = vmul.f32 %v1873, %v1872
        %v1875 = vmul.f32 0.5, %v1874
        %v1876 = vsub.f32 1.5, %v1875
        %v1877 = vmul.f32 %v1872, %v1876
        %vm1878 = vweird.f32 %v1820
        %vm1879 = vweird.f32 %v1872
        %vm1880 = vmor %vm1878, %vm1879
        %v1881 = vsel %vm1880, %v1872, %v1877
        %v1882 = vrsqrt.pop %v1821
        %v1883 = vmul.f32 %v1882, %v1821
        %v1884 = vmul.f32 %v1883, %v1882
        %v1885 = vmul.f32 0.5, %v1884
        %v1886 = vsub.f32 1.5, %v1885
        %v1887 = vmul.f32 %v1882, %v1886
        %vm1888 = vweird.f32 %v1821
        %vm1889 = vweird.f32 %v1882
        %vm1890 = vmor %vm1888, %vm1889
        %v1891 = vsel %vm1890, %v1882, %v1887
        %v1892 = vrsqrt.pop %v1822
        %v1893 = vmul.f32 %v1892, %v1822
        %v1894 = vmul.f32 %v1893, %v1892
        %v1895 = vmul.f32 0.5, %v1894
        %v1896 = vsub.f32 1.5, %v1895
        %v1897 = vmul.f32 %v1892, %v1896
        %vm1898 = vweird.f32 %v1822
        %vm1899 = vweird.f32 %v1892
        %vm1900 = vmor %vm1898, %vm1899
        %v1901 = vsel %vm1900, %v1892, %v1897
        %v1902 = vrsqrt.pop %v1823
        %v1903 = vmul.f32 %v1902, %v1823
        %v1904 = vmul.f32 %v1903, %v1902
        %v1905 = vmul.f32 0.5, %v1904
        %v1906 = vsub.f32 1.5, %v1905
        %v1907 = vmul.f32 %v1902, %v1906
        %vm1908 = vweird.f32 %v1823
        %vm1909 = vweird.f32 %v1902
        %vm1910 = vmor %vm1908, %vm1909
        %v1911 = vsel %vm1910, %v1902, %v1907
        %v1912 = vrsqrt.pop %v1824
        %v1913 = vmul.f32 %v1912, %v1824
        %v1914 = vmul.f32 %v1913, %v1912
        %v1915 = vmul.f32 0.5, %v1914
        %v1916 = vsub.f32 1.5, %v1915
        %v1917 = vmul.f32 %v1912, %v1916
        %vm1918 = vweird.f32 %v1824
        %vm1919 = vweird.f32 %v1912
        %vm1920 = vmor %vm1918, %vm1919
        %v1921 = vsel %vm1920, %v1912, %v1917
        %v1922 = vrsqrt.pop %v1825
        %v1923 = vmul.f32 %v1922, %v1825
        %v1924 = vmul.f32 %v1923, %v1922
        %v1925 = vmul.f32 0.5, %v1924
        %v1926 = vsub.f32 1.5, %v1925
        %v1927 = vmul.f32 %v1922, %v1926
        %vm1928 = vweird.f32 %v1825
        %vm1929 = vweird.f32 %v1922
        %vm1930 = vmor %vm1928, %vm1929
        %v1931 = vsel %vm1930, %v1922, %v1927
        %v1932 = vrsqrt.pop %v1826
        %v1933 = vmul.f32 %v1932, %v1826
        %v1934 = vmul.f32 %v1933, %v1932
        %v1935 = vmul.f32 0.5, %v1934
        %v1936 = vsub.f32 1.5, %v1935
        %v1937 = vmul.f32 %v1932, %v1936
        %vm1938 = vweird.f32 %v1826
        %vm1939 = vweird.f32 %v1932
        %vm1940 = vmor %vm1938, %vm1939
        %v1941 = vsel %vm1940, %v1932, %v1937
        %v1942 = vrsqrt.pop %v1827
        %v1943 = vmul.f32 %v1942, %v1827
        %v1944 = vmul.f32 %v1943, %v1942
        %v1945 = vmul.f32 0.5, %v1944
        %v1946 = vsub.f32 1.5, %v1945
        %v1947 = vmul.f32 %v1942, %v1946
        %vm1948 = vweird.f32 %v1827
        %vm1949 = vweird.f32 %v1942
        %vm1950 = vmor %vm1948, %vm1949
        %v1951 = vsel %vm1950, %v1942, %v1947
        %v1952 = vrsqrt.pop %v1828
        %v1953 = vmul.f32 %v1952, %v1828
        %v1954 = vmul.f32 %v1953, %v1952
        %v1955 = vmul.f32 0.5, %v1954
        %v1956 = vsub.f32 1.5, %v1955
        %v1957 = vmul.f32 %v1952, %v1956
        %vm1958 = vweird.f32 %v1828
        %vm1959 = vweird.f32 %v1952
        %vm1960 = vmor %vm1958, %vm1959
        %v1961 = vsel %vm1960, %v1952, %v1957
        %v1962 = vrsqrt.pop %v1829
        %v1963 = vmul.f32 %v1962, %v1829
        %v1964 = vmul.f32 %v1963, %v1962
        %v1965 = vmul.f32 0.5, %v1964
        %v1966 = vsub.f32 1.5, %v1965
        %v1967 = vmul.f32 %v1962, %v1966
        %vm1968 = vweird.f32 %v1829
        %vm1969 = vweird.f32 %v1962
        %vm1970 = vmor %vm1968, %vm1969
        %v1971 = vsel %vm1970, %v1962, %v1967
        %v1972 = vrsqrt.pop %v1830
        %v1973 = vmul.f32 %v1972, %v1830
        %v1974 = vmul.f32 %v1973, %v1972
        %v1975 = vmul.f32 0.5, %v1974
        %v1976 = vsub.f32 1.5, %v1975
        %v1977 = vmul.f32 %v1972, %v1976
        %vm1978 = vweird.f32 %v1830
        %vm1979 = vweird.f32 %v1972
        %vm1980 = vmor %vm1978, %vm1979
        %v1981 = vsel %vm1980, %v1972, %v1977
        %v1982 = vrsqrt.pop %v1831
        %v1983 = vmul.f32 %v1982, %v1831
        %v1984 = vmul.f32 %v1983, %v1982
        %v1985 = vmul.f32 0.5, %v1984
        %v1986 = vsub.f32 1.5, %v1985
        %v1987 = vmul.f32 %v1982, %v1986
        %vm1988 = vweird.f32 %v1831
        %vm1989 = vweird.f32 %v1982
        %vm1990 = vmor %vm1988, %vm1989
        %v1991 = vsel %vm1990, %v1982, %v1987
        %v1992 = vmul.f32 %v1721, %v1841
        %v1993 = vmul.f32 %v1724, %v1851
        %v1994 = vmul.f32 %v1727, %v1861
        %v1995 = vmul.f32 %v1730, %v1871
        %v1996 = vmul.f32 %v1733, %v1881
        %v1997 = vmul.f32 %v1736, %v1891
        %v1998 = vmul.f32 %v1739, %v1901
        %v1999 = vmul.f32 %v1742, %v1911
        %v2000 = vmul.f32 %v1745, %v1921
        %v2001 = vmul.f32 %v1748, %v1931
        %v2002 = vmul.f32 %v1751, %v1941
        %v2003 = vmul.f32 %v1754, %v1951
        %v2004 = vmul.f32 %v1757, %v1961
        %v2005 = vmul.f32 %v1760, %v1971
        %v2006 = vmul.f32 %v1763, %v1981
        %v2007 = vmul.f32 %v1766, %v1991
        %v2008 = vpack.c.bf16 %v1992, %v1992
        %v2009 = vpack.c.bf16 %v1993, %v1993
        %v2010 = vpack.c.bf16 %v1994, %v1994
        %v2011 = vpack.c.bf16 %v1995, %v1995
        %v2012 = vpack.c.bf16 %v1996, %v1996
        %v2013 = vpack.c.bf16 %v1997, %v1997
        %v2014 = vpack.c.bf16 %v1998, %v1998
        %v2015 = vpack.c.bf16 %v1999, %v1999
        %v2016 = vpack.c.bf16 %v2000, %v2000
        %v2017 = vpack.c.bf16 %v2001, %v2001
        %v2018 = vpack.c.bf16 %v2002, %v2002
        %v2019 = vpack.c.bf16 %v2003, %v2003
        %v2020 = vpack.c.bf16 %v2004, %v2004
        %v2021 = vpack.c.bf16 %v2005, %v2005
        %v2022 = vpack.c.bf16 %v2006, %v2006
        %v2023 = vpack.c.bf16 %v2007, %v2007
        %2024 = vst [vmem:[%s494] sm:$0xf] %v2008
        %2025 = vst [vmem:[%s494 + $0x4] sm:$0xf] %v2009
        %2026 = vst [vmem:[%s494 + $0x8] sm:$0xf] %v2010
        %2027 = vst [vmem:[%s494 + $0xc] sm:$0xf] %v2011
        %2028 = vst [vmem:[%s494 + $0x10] sm:$0xf] %v2012
        %2029 = vst [vmem:[%s494 + $0x14] sm:$0xf] %v2013
        %2030 = vst [vmem:[%s494 + $0x18] sm:$0xf] %v2014
        %2031 = vst [vmem:[%s494 + $0x1c] sm:$0xf] %v2015
        %2032 = vst [vmem:[%s494 + $0x20] sm:$0xf] %v2016
        %2033 = vst [vmem:[%s494 + $0x24] sm:$0xf] %v2017
        %2034 = vst [vmem:[%s494 + $0x28] sm:$0xf] %v2018
        %2035 = vst [vmem:[%s494 + $0x2c] sm:$0xf] %v2019
        %2036 = vst [vmem:[%s494 + $0x30] sm:$0xf] %v2020
        %2037 = vst [vmem:[%s494 + $0x34] sm:$0xf] %v2021
        %2038 = vst [vmem:[%s494 + $0x38] sm:$0xf] %v2022
        %2039 = vst [vmem:[%s494 + $0x3c] sm:$0xf] %v2023
        %v2040 = vld [vmem:[#allocation8] sm:$0xff]
        %v2041 = vld [vmem:[#allocation8 + $0x8] sm:$0xff]
        %v2042 = vld [vmem:[#allocation8 + $0x10] sm:$0xff]
        %v2043 = vld [vmem:[#allocation8 + $0x18] sm:$0xff]
        %v2044 = vld [vmem:[#allocation8 + $0x20] sm:$0xff]
        %v2045 = vld [vmem:[#allocation8 + $0x28] sm:$0xff]
        %v2046 = vld [vmem:[#allocation8 + $0x30] sm:$0xff]
        %v2047 = vld [vmem:[#allocation8 + $0x38] sm:$0xff]
        %v2048 = vld [vmem:[#allocation8 + $0x40] sm:$0xff]
        %v2049 = vld [vmem:[#allocation8 + $0x48] sm:$0xff]
        %v2050 = vld [vmem:[#allocation8 + $0x50] sm:$0xff]
        %v2051 = vld [vmem:[#allocation8 + $0x58] sm:$0xff]
        %v2052 = vld [vmem:[#allocation8 + $0x60] sm:$0xff]
        %v2053 = vld [vmem:[#allocation8 + $0x68] sm:$0xff]
        %v2054 = vld [vmem:[#allocation8 + $0x70] sm:$0xff]
        %v2055 = vld [vmem:[#allocation8 + $0x78] sm:$0xff]
        %v2056 = vld [vmem:[%s8] sm:$0x1]
        %v2058 = vperm.slane %v2056, 0
        %2060 = vmatpush.msra.mxu0 %v2055
        %2061 = vmatpush.msra.mxu0 %v2054
        %2062 = vmatpush.msra.mxu0 %v2053
        %2063 = vmatpush.msra.mxu0 %v2052
        %2064 = vmatpush.msra.mxu0 %v2051
        %2065 = vmatpush.msra.mxu0 %v2050
        %2066 = vmatpush.msra.mxu0 %v2049
        %2067 = vmatpush.msra.mxu0 %v2048
        %2068 = vmatpush.msra.mxu0 %v2047
        %2069 = vmatpush.msra.mxu0 %v2046
        %2070 = vmatpush.msra.mxu0 %v2045
        %2071 = vmatpush.msra.mxu0 %v2044
        %2072 = vmatpush.msra.mxu0 %v2043
        %2073 = vmatpush.msra.mxu0 %v2042
        %2074 = vmatpush.msra.mxu0 %v2041
        %2075 = vmatpush.msra.mxu0 %v2040
        %2076 = vmatmul.f32.gmra.mxu0 %v1721
        %v2077 = vpop.f32.mrf.mxu0
        %v2078 = vadd.f32 %v2058, %v2077
        %2079 = vmatmul.f32.gmra.mxu0 %v1724
        %v2080 = vpop.f32.mrf.mxu0
        %v2081 = vadd.f32 %v2058, %v2080
        %2082 = vmatmul.f32.gmra.mxu0 %v1727
        %v2083 = vpop.f32.mrf.mxu0
        %v2084 = vadd.f32 %v2058, %v2083
        %2085 = vmatmul.f32.gmra.mxu0 %v1730
        %v2086 = vpop.f32.mrf.mxu0
        %v2087 = vadd.f32 %v2058, %v2086
        %2088 = vmatmul.f32.gmra.mxu0 %v1733
        %v2089 = vpop.f32.mrf.mxu0
        %v2090 = vadd.f32 %v2058, %v2089
        %2091 = vmatmul.f32.gmra.mxu0 %v1736
        %v2092 = vpop.f32.mrf.mxu0
        %v2093 = vadd.f32 %v2058, %v2092
        %2094 = vmatmul.f32.gmra.mxu0 %v1739
        %v2095 = vpop.f32.mrf.mxu0
        %v2096 = vadd.f32 %v2058, %v2095
        %2097 = vmatmul.f32.gmra.mxu0 %v1742
        %v2098 = vpop.f32.mrf.mxu0
        %v2099 = vadd.f32 %v2058, %v2098
        %2100 = vmatmul.f32.gmra.mxu0 %v1745
        %v2101 = vpop.f32.mrf.mxu0
        %v2102 = vadd.f32 %v2058, %v2101
        %2103 = vmatmul.f32.gmra.mxu0 %v1748
        %v2104 = vpop.f32.mrf.mxu0
        %v2105 = vadd.f32 %v2058, %v2104
        %2106 = vmatmul.f32.gmra.mxu0 %v1751
        %v2107 = vpop.f32.mrf.mxu0
        %v2108 = vadd.f32 %v2058, %v2107
        %2109 = vmatmul.f32.gmra.mxu0 %v1754
        %v2110 = vpop.f32.mrf.mxu0
        %v2111 = vadd.f32 %v2058, %v2110
        %2112 = vmatmul.f32.gmra.mxu0 %v1757
        %v2113 = vpop.f32.mrf.mxu0
        %v2114 = vadd.f32 %v2058, %v2113
        %2115 = vmatmul.f32.gmra.mxu0 %v1760
        %v2116 = vpop.f32.mrf.mxu0
        %v2117 = vadd.f32 %v2058, %v2116
        %2118 = vmatmul.f32.gmra.mxu0 %v1763
        %v2119 = vpop.f32.mrf.mxu0
        %v2120 = vadd.f32 %v2058, %v2119
        %2121 = vmatmul.f32.gmra.mxu0 %v1766
        %v2122 = vpop.f32.mrf.mxu0
        %v2123 = vadd.f32 %v2058, %v2122
        %2124 = vdwg.mxu0
        %v2125 = vld [vmem:[%s10] sm:$0x1]
        %v2127 = vperm.slane %v2125, 0
        %v2129 = vadd.f32 %v2078, %v2127
        %v2130 = vadd.f32 %v2081, %v2127
        %v2131 = vadd.f32 %v2084, %v2127
        %v2132 = vadd.f32 %v2087, %v2127
        %v2133 = vadd.f32 %v2090, %v2127
        %v2134 = vadd.f32 %v2093, %v2127
        %v2135 = vadd.f32 %v2096, %v2127
        %v2136 = vadd.f32 %v2099, %v2127
        %v2137 = vadd.f32 %v2102, %v2127
        %v2138 = vadd.f32 %v2105, %v2127
        %v2139 = vadd.f32 %v2108, %v2127
        %v2140 = vadd.f32 %v2111, %v2127
        %v2141 = vadd.f32 %v2114, %v2127
        %v2142 = vadd.f32 %v2117, %v2127
        %v2143 = vadd.f32 %v2120, %v2127
        %v2144 = vadd.f32 %v2123, %v2127
        %2145 = vmax.xlane.f32.xlu0 %v2129
        %v2146 = vpop.xlane.xlu0 %2145
        %2147 = vmax.xlane.f32.xlu0 %v2130
        %v2148 = vpop.xlane.xlu0 %2147
        %2149 = vmax.xlane.f32.xlu0 %v2131
        %v2150 = vpop.xlane.xlu0 %2149
        %2151 = vmax.xlane.f32.xlu0 %v2132
        %v2152 = vpop.xlane.xlu0 %2151
        %2153 = vmax.xlane.f32.xlu0 %v2133
        %v2154 = vpop.xlane.xlu0 %2153
        %2155 = vmax.xlane.f32.xlu0 %v2134
        %v2156 = vpop.xlane.xlu0 %2155
        %2157 = vmax.xlane.f32.xlu0 %v2135
        %v2158 = vpop.xlane.xlu0 %2157
        %2159 = vmax.xlane.f32.xlu0 %v2136
        %v2160 = vpop.xlane.xlu0 %2159
        %2161 = vmax.xlane.f32.xlu0 %v2137
        %v2162 = vpop.xlane.xlu0 %2161
        %2163 = vmax.xlane.f32.xlu0 %v2138
        %v2164 = vpop.xlane.xlu0 %2163
        %2165 = vmax.xlane.f32.xlu0 %v2139
        %v2166 = vpop.xlane.xlu0 %2165
        %2167 = vmax.xlane.f32.xlu0 %v2140
        %v2168 = vpop.xlane.xlu0 %2167
        %2169 = vmax.xlane.f32.xlu0 %v2141
        %v2170 = vpop.xlane.xlu0 %2169
        %2171 = vmax.xlane.f32.xlu0 %v2142
        %v2172 = vpop.xlane.xlu0 %2171
        %2173 = vmax.xlane.f32.xlu0 %v2143
        %v2174 = vpop.xlane.xlu0 %2173
        %2175 = vmax.xlane.f32.xlu0 %v2144
        %v2176 = vpop.xlane.xlu0 %2175
        %v2177 = vsub.f32 %v2129, %v2146
        %v2178 = vsub.f32 %v2130, %v2148
        %v2179 = vsub.f32 %v2131, %v2150
        %v2180 = vsub.f32 %v2132, %v2152
        %v2181 = vsub.f32 %v2133, %v2154
        %v2182 = vsub.f32 %v2134, %v2156
        %v2183 = vsub.f32 %v2135, %v2158
        %v2184 = vsub.f32 %v2136, %v2160
        %v2185 = vsub.f32 %v2137, %v2162
        %v2186 = vsub.f32 %v2138, %v2164
        %v2187 = vsub.f32 %v2139, %v2166
        %v2188 = vsub.f32 %v2140, %v2168
        %v2189 = vsub.f32 %v2141, %v2170
        %v2190 = vsub.f32 %v2142, %v2172
        %v2191 = vsub.f32 %v2143, %v2174
        %v2192 = vsub.f32 %v2144, %v2176
        %v2193 = vmul.f32 %v2177, 1.442695
        %v2194 = vpow.pop %v2193
        %v2195 = vmul.f32 %v2178, 1.442695
        %v2196 = vpow.pop %v2195
        %v2197 = vmul.f32 %v2179, 1.442695
        %v2198 = vpow.pop %v2197
        %v2199 = vmul.f32 %v2180, 1.442695
        %v2200 = vpow.pop %v2199
        %v2201 = vmul.f32 %v2181, 1.442695
        %v2202 = vpow.pop %v2201
        %v2203 = vmul.f32 %v2182, 1.442695
        %v2204 = vpow.pop %v2203
        %v2205 = vmul.f32 %v2183, 1.442695
        %v2206 = vpow.pop %v2205
        %v2207 = vmul.f32 %v2184, 1.442695
        %v2208 = vpow.pop %v2207
        %v2209 = vmul.f32 %v2185, 1.442695
        %v2210 = vpow.pop %v2209
        %v2211 = vmul.f32 %v2186, 1.442695
        %v2212 = vpow.pop %v2211
        %v2213 = vmul.f32 %v2187, 1.442695
        %v2214 = vpow.pop %v2213
        %v2215 = vmul.f32 %v2188, 1.442695
        %v2216 = vpow.pop %v2215
        %v2217 = vmul.f32 %v2189, 1.442695
        %v2218 = vpow.pop %v2217
        %v2219 = vmul.f32 %v2190, 1.442695
        %v2220 = vpow.pop %v2219
        %v2221 = vmul.f32 %v2191, 1.442695
        %v2222 = vpow.pop %v2221
        %v2223 = vmul.f32 %v2192, 1.442695
        %v2224 = vpow.pop %v2223
        %2225 = vadd.xlane.f32.xlu0 %v2194
        %v2226 = vpop.xlane.xlu0 %2225
        %2227 = vadd.xlane.f32.xlu0 %v2196
        %v2228 = vpop.xlane.xlu0 %2227
        %2229 = vadd.xlane.f32.xlu0 %v2198
        %v2230 = vpop.xlane.xlu0 %2229
        %2231 = vadd.xlane.f32.xlu0 %v2200
        %v2232 = vpop.xlane.xlu0 %2231
        %2233 = vadd.xlane.f32.xlu0 %v2202
        %v2234 = vpop.xlane.xlu0 %2233
        %2235 = vadd.xlane.f32.xlu0 %v2204
        %v2236 = vpop.xlane.xlu0 %2235
        %2237 = vadd.xlane.f32.xlu0 %v2206
        %v2238 = vpop.xlane.xlu0 %2237
        %2239 = vadd.xlane.f32.xlu0 %v2208
        %v2240 = vpop.xlane.xlu0 %2239
        %2241 = vadd.xlane.f32.xlu0 %v2210
        %v2242 = vpop.xlane.xlu0 %2241
        %2243 = vadd.xlane.f32.xlu0 %v2212
        %v2244 = vpop.xlane.xlu0 %2243
        %2245 = vadd.xlane.f32.xlu0 %v2214
        %v2246 = vpop.xlane.xlu0 %2245
        %2247 = vadd.xlane.f32.xlu0 %v2216
        %v2248 = vpop.xlane.xlu0 %2247
        %2249 = vadd.xlane.f32.xlu0 %v2218
        %v2250 = vpop.xlane.xlu0 %2249
        %2251 = vadd.xlane.f32.xlu0 %v2220
        %v2252 = vpop.xlane.xlu0 %2251
        %2253 = vadd.xlane.f32.xlu0 %v2222
        %v2254 = vpop.xlane.xlu0 %2253
        %2255 = vadd.xlane.f32.xlu0 %v2224
        %v2256 = vpop.xlane.xlu0 %2255
        %v2257 = vlog2.pop %v2226
        %v2258 = vmul.f32 %v2257, 0.6931472
        %v2259 = vlog2.pop %v2228
        %v2260 = vmul.f32 %v2259, 0.6931472
        %v2261 = vlog2.pop %v2230
        %v2262 = vmul.f32 %v2261, 0.6931472
        %v2263 = vlog2.pop %v2232
        %v2264 = vmul.f32 %v2263, 0.6931472
        %v2265 = vlog2.pop %v2234
        %v2266 = vmul.f32 %v2265, 0.6931472
        %v2267 = vlog2.pop %v2236
        %v2268 = vmul.f32 %v2267, 0.6931472
        %v2269 = vlog2.pop %v2238
        %v2270 = vmul.f32 %v2269, 0.6931472
        %v2271 = vlog2.pop %v2240
        %v2272 = vmul.f32 %v2271, 0.6931472
        %v2273 = vlog2.pop %v2242
        %v2274 = vmul.f32 %v2273, 0.6931472
        %v2275 = vlog2.pop %v2244
        %v2276 = vmul.f32 %v2275, 0.6931472
        %v2277 = vlog2.pop %v2246
        %v2278 = vmul.f32 %v2277, 0.6931472
        %v2279 = vlog2.pop %v2248
        %v2280 = vmul.f32 %v2279, 0.6931472
        %v2281 = vlog2.pop %v2250
        %v2282 = vmul.f32 %v2281, 0.6931472
        %v2283 = vlog2.pop %v2252
        %v2284 = vmul.f32 %v2283, 0.6931472
        %v2285 = vlog2.pop %v2254
        %v2286 = vmul.f32 %v2285, 0.6931472
        %v2287 = vlog2.pop %v2256
        %v2288 = vmul.f32 %v2287, 0.6931472
        %v2289 = vsub.f32 %v2177, %v2258
        %v2290 = vsub.f32 %v2178, %v2260
        %v2291 = vsub.f32 %v2179, %v2262
        %v2292 = vsub.f32 %v2180, %v2264
        %v2293 = vsub.f32 %v2181, %v2266
        %v2294 = vsub.f32 %v2182, %v2268
        %v2295 = vsub.f32 %v2183, %v2270
        %v2296 = vsub.f32 %v2184, %v2272
        %v2297 = vsub.f32 %v2185, %v2274
        %v2298 = vsub.f32 %v2186, %v2276
        %v2299 = vsub.f32 %v2187, %v2278
        %v2300 = vsub.f32 %v2188, %v2280
        %v2301 = vsub.f32 %v2189, %v2282
        %v2302 = vsub.f32 %v2190, %v2284
        %v2303 = vsub.f32 %v2191, %v2286
        %v2304 = vsub.f32 %v2192, %v2288
        %2305 = vst [vmem:[%s487] sm:$0xff] %v2289
        %2306 = vst [vmem:[%s487 + $0x8] sm:$0xff] %v2290
        %2307 = vst [vmem:[%s487 + $0x10] sm:$0xff] %v2291
        %2308 = vst [vmem:[%s487 + $0x18] sm:$0xff] %v2292
        %2309 = vst [vmem:[%s487 + $0x20] sm:$0xff] %v2293
        %2310 = vst [vmem:[%s487 + $0x28] sm:$0xff] %v2294
        %2311 = vst [vmem:[%s487 + $0x30] sm:$0xff] %v2295
        %2312 = vst [vmem:[%s487 + $0x38] sm:$0xff] %v2296
        %2313 = vst [vmem:[%s487 + $0x40] sm:$0xff] %v2297
        %2314 = vst [vmem:[%s487 + $0x48] sm:$0xff] %v2298
        %2315 = vst [vmem:[%s487 + $0x50] sm:$0xff] %v2299
        %2316 = vst [vmem:[%s487 + $0x58] sm:$0xff] %v2300
        %2317 = vst [vmem:[%s487 + $0x60] sm:$0xff] %v2301
        %2318 = vst [vmem:[%s487 + $0x68] sm:$0xff] %v2302
        %2319 = vst [vmem:[%s487 + $0x70] sm:$0xff] %v2303
        %2320 = vst [vmem:[%s487 + $0x78] sm:$0xff] %v2304
        %s2321 = sand.u32 %s279, 1
        %s2322 = scalar_lea.sflag [#allocation4], %s2321
        %s2323 = sand.u32 %s279, 1
        %s2324 = smul.addr %s2323, 128
        %s2325 = scalar_lea.vmem [#allocation10], %s2324
        %s2326 = sand.u32 %s305, 1
        %s2327 = scalar_lea.sflag [#allocation12], %s2326
        %s2328 = sand.u32 %s305, 1
        %s2329 = smul.addr %s2328, 64
        %s2330 = scalar_lea.vmem [#allocation11], %s2329
        // Predicated region
        $region81: #{tpu_custom_call.1} parent=63 // pred_check
          %p2331 = pneg %p289
        $region82: #{tpu_custom_call.1} parent=63 // pred_check_branch
          %2333 = sbr.rel (%p2331) target = $region84
        $region83: #{tpu_custom_call.1} parent=63 // pred_region
          %s2334 = smul.u32 16, %s35
          %2336 = vsyncadd %s2322, 0
          %s2337 = smul.addr %s2334, 8
          %s2338 = scalar_lea.hbm %s11, %s2337
          %s2339 = sshll.u32 %s2325, 4
          %s2340 = int_to_ptr.vmem [resolvable:$true] %s2339
          %s2341 = sshll.u32 %s2338, 4
          %s2342 = int_to_ptr.hbm [resolvable:$true] %s2341
          %2347 = dma.vmem_to_hbm [thread:$0]  %s2340, 2048, %s2342, %s2322, 128, 128, 8
        $region84: #{tpu_custom_call.1} parent=63 // pred_fallthru
          _
        // Predicated region
        $region85: #{tpu_custom_call.1} parent=63 // pred_check
          %p2348 = pneg %p315
        $region86: #{tpu_custom_call.1} parent=63 // pred_check_branch
          %2350 = sbr.rel (%p2348) target = $region88
        $region87: #{tpu_custom_call.1} parent=63 // pred_region
          %s2351 = smul.u32 16, %s35
          %2353 = vsyncadd %s2327, 0
          %s2354 = smul.addr %s2351, 4
          %s2355 = scalar_lea.hbm %s12, %s2354
          %s2356 = sshll.u32 %s2330, 4
          %s2357 = int_to_ptr.vmem [resolvable:$true] %s2356
          %s2358 = sshll.u32 %s2355, 4
          %s2359 = int_to_ptr.hbm [resolvable:$true] %s2358
          %2364 = dma.vmem_to_hbm [thread:$0]  %s2357, 1024, %s2359, %s2327, 64, 64, 4
        $region88: #{tpu_custom_call.1} parent=63 // pred_fallthru
          _
      $region64: #{tpu_custom_call.1} parent=5 // pred_fallthru
        _
      %p2365 = scmp.le.s32.totalorder 2, %s30
      // Predicated region
      $region89: #{tpu_custom_call.1} parent=5 // pred_check
        %p2366 = pneg %p2365
      $region90: #{tpu_custom_call.1} parent=5 // pred_check_branch
        %2368 = sbr.rel (%p2366) target = $region92
      $region91: #{tpu_custom_call.1} parent=5 // pred_region
        %s2369 = ssub.s32 %s30, 2
        // Predicated region
        $region93: #{tpu_custom_call.1} parent=91 // pred_check
          %p2370 = pneg %p295
        $region94: #{tpu_custom_call.1} parent=91 // pred_check_branch
          %2372 = sbr.rel (%p2370) target = $region96
        $region95: #{tpu_custom_call.1} parent=91 // pred_region
          %s2373 = sand.u32 %s280, 1
          %s2374 = scalar_lea.sflag [#allocation4], %s2373
          %s2375 = sand.u32 %s280, 1
          %s2376 = smul.addr %s2375, 128
          %s2377 = scalar_lea.vmem [#allocation10], %s2376
          %2379 = dma.done %s2374, 2048
        $region96: #{tpu_custom_call.1} parent=91 // pred_fallthru
          _
        // Predicated region
        $region97: #{tpu_custom_call.1} parent=91 // pred_check
          %p2380 = pneg %p321
        $region98: #{tpu_custom_call.1} parent=91 // pred_check_branch
          %2382 = sbr.rel (%p2380) target = $region100
        $region99: #{tpu_custom_call.1} parent=91 // pred_region
          %s2383 = sand.u32 %s306, 1
          %s2384 = scalar_lea.sflag [#allocation12], %s2383
          %s2385 = sand.u32 %s306, 1
          %s2386 = smul.addr %s2385, 64
          %s2387 = scalar_lea.vmem [#allocation11], %s2386
          %2389 = dma.done %s2384, 1024
        $region100: #{tpu_custom_call.1} parent=91 // pred_fallthru
          _
      $region92: #{tpu_custom_call.1} parent=5 // pred_fallthru
        _
    $region6: #{tpu_custom_call.1} parent=1 // loop_footer
      %s34 = sadd.s32 1, %s30
    $region7: #{tpu_custom_call.1} parent=1 // loop_footer_branch
      %29 = sbr.rel target = $region3
    $region8: #{tpu_custom_call.1} parent=1 // loop_exit
      _
    %2390 = vsyncpa [#allocation3], 1
    %s2391 = scalar_lea.sflag [#allocation3], 1
    %2392 = vsyncpa %s2391, 1
    %2393 = vsyncpa [#allocation6], 1
    %2394 = vsyncpa [#allocation9], 1
    %2395 = vsyncpa [#allocation4], 1
    %s2396 = scalar_lea.sflag [#allocation4], 1
    %2397 = vsyncpa %s2396, 1
    %2398 = vsyncpa [#allocation12], 1
    %s2399 = scalar_lea.sflag [#allocation12], 1
    %2400 = vsyncpa %s2399, 1

// kernel: tpu_custom_call.1
$region0: #{tpu_custom_call.1}
  #allocation0 [shape = 'u32[]', space=smem, size = 0x4, offset = 0x4, fixed_abs, tag = 'smem constant byte address 0x4 - core index']
  #allocation1 [shape = 'u32[72,128]{1,0:T(1,128)}', space=vmem, size = 0x9000, scoped, tag = 'internal scratch']
  %s0 = inlined_call_operand.hbm [shape: f32[384,128], index: 0, kind: input, shape index: {}]
  %s1 = inlined_call_operand.hbm [shape: f32[128,128], index: 1, kind: input, shape index: {}]
  %s2 = inlined_call_operand.vmem [shape: f32[1,128], index: 2, kind: input, shape index: {}]
  %s3 = inlined_call_operand.vmem [shape: f32[1,128], index: 3, kind: input, shape index: {}]
  %s4 = inlined_call_operand.vmem [shape: f32[1,128], index: 4, kind: input, shape index: {}]
  %s5 = inlined_call_operand.hbm [shape: f32[128,128], index: 5, kind: input, shape index: {}]
  %s6 = inlined_call_operand.vmem [shape: f32[1,128], index: 6, kind: input, shape index: {}]
  %s7 = inlined_call_operand.hbm [shape: f32[128,128], index: 7, kind: input, shape index: {}]
  %s8 = inlined_call_operand.vmem [shape: f32[1,128], index: 8, kind: input, shape index: {}]
  %s9 = inlined_call_operand.vmem [shape: f32[1,128], index: 9, kind: input, shape index: {}]
  %s10 = inlined_call_operand.vmem [shape: f32[1,128], index: 10, kind: input, shape index: {}]
  %s11 = inlined_call_operand.hbm [shape: f32[384,128], index: 11, kind: output, shape index: {0}]
  %s12 = inlined_call_operand.hbm [shape: bf16[384,128], index: 12, kind: output, shape index: {1}]
  %13 = xla_tuple %s11, %s12
  %s14 = sld [smem:[#allocation0]]
  $region101: #{tpu_custom_call.1} parent=0
    _
  %s16 = ssub.s32 1, %s14
  %s17 = scalar_select 0, %s16, %s14
  $region1: #{tpu_custom_call.1} parent=0
    #allocation2 [shape = 'u8[131072]{0}', space=vmem, size = 0x20000, scoped, tag = 'input window, operand 0']
    #allocation3 [shape = 's32[2]{0}', space=sflag, size = 0x8, scoped, tag = 'scoped memory for tpu_custom_call.1']
    #allocation4 [shape = 's32[2]{0}', space=sflag, size = 0x8, scoped, tag = 'scoped memory for tpu_custom_call.1']
    #allocation5 [shape = 'u8[65536]{0}', space=vmem, size = 0x10000, scoped, tag = 'input window, operand 1, single buffered']
    #allocation6 [shape = 's32[1]{0}', space=sflag, size = 0x4, scoped, tag = 'scoped memory for tpu_custom_call.1']
    #allocation7 [shape = 'u8[65536]{0}', space=vmem, size = 0x10000, scoped, tag = 'input window, operand 5, single buffered']
    #allocation8 [shape = 'u8[65536]{0}', space=vmem, size = 0x10000, scoped, tag = 'input window, operand 7, single buffered']
    #allocation9 [shape = 's32[1]{0}', space=sflag, size = 0x4, scoped, tag = 'scoped memory for tpu_custom_call.1']
    #allocation10 [shape = 'u8[131072]{0}', space=vmem, size = 0x20000, scoped, tag = 'output window, operand 0']
    #allocation11 [shape = 'u8[65536]{0}', space=vmem, size = 0x10000, scoped, tag = 'output window, operand 1']
    #allocation12 [shape = 's32[2]{0}', space=sflag, size = 0x8, scoped, tag = 'scoped memory for tpu_custom_call.1']
    %18 = vsyncpa [#allocation3], 0
    %s19 = scalar_lea.sflag [#allocation3], 1
    %20 = vsyncpa %s19, 0
    %21 = vsyncpa [#allocation6], 0
    %22 = vsyncpa [#allocation9], 0
    %23 = vsyncpa [#allocation4], 0
    %s24 = scalar_lea.sflag [#allocation4], 1
    %25 = vsyncpa %s24, 0
    %26 = vsyncpa [#allocation12], 0
    %s27 = scalar_lea.sflag [#allocation12], 1
    %28 = vsyncpa %s27, 0
    loop: start=0, step=1, limit=5
    $region2: #{tpu_custom_call.1} parent=1 // loop_pre_header
      _
    $region3: #{tpu_custom_call.1} parent=1 // loop_header
      %s30 = sphi 0, %s34
      %p31 = scmp.ge.s32.totalorder %s30, 5
      %s40 = sphi 0, %s42
      %s43 = sphi 0, %s40
      %s44 = sphi 0, %s43
      %s60 = sphi 0, %s44
      %s64 = sphi 0, %s64
      %s66 = sphi 0, %s64
      %s67 = sphi 0, %s66
      %s81 = sphi 0, %s67
      %s85 = sphi 0, %s85
      %s87 = sphi 0, %s85
      %s88 = sphi 0, %s87
      %s102 = sphi 0, %s88
      %s106 = sphi 0, %s106
      %s108 = sphi 0, %s106
      %s109 = sphi 0, %s108
      %s123 = sphi 0, %s109
      %s127 = sphi 0, %s127
      %s129 = sphi 0, %s127
      %s130 = sphi 0, %s129
      %s144 = sphi 0, %s130
      %s148 = sphi 0, %s148
      %s150 = sphi 0, %s148
      %s151 = sphi 0, %s150
      %s165 = sphi 0, %s151
      %s169 = sphi 0, %s169
      %s171 = sphi 0, %s169
      %s172 = sphi 0, %s171
      %s186 = sphi 0, %s172
      %s190 = sphi 0, %s190
      %s192 = sphi 0, %s190
      %s193 = sphi 0, %s192
      %s207 = sphi 0, %s193
      %s211 = sphi 0, %s211
      %s213 = sphi 0, %s211
      %s214 = sphi 0, %s213
      %s228 = sphi 0, %s214
      %s232 = sphi 0, %s232
      %s234 = sphi 0, %s232
      %s235 = sphi 0, %s234
      %s249 = sphi 0, %s235
      %s253 = sphi 0, %s253
      %s255 = sphi 0, %s253
      %s256 = sphi 0, %s255
      %s270 = sphi 0, %s256
      %s276 = sphi 0, %s278
      %s279 = sphi 0, %s276
      %s280 = sphi 0, %s279
      %s296 = sphi 0, %s280
      %s302 = sphi 0, %s304
      %s305 = sphi 0, %s302
      %s306 = sphi 0, %s305
      %s322 = sphi 0, %s306
    $region4: #{tpu_custom_call.1} parent=1 // loop_header_branch
      %33 = sbr.rel (%p31) target = $region8
    $region5: #{tpu_custom_call.1} parent=1 // loop_body
      %s35 = ssub.s32 %s30, 1
      %s36 = ssub.s32 %s30, 2
      %s37 = sadd.s32 %s30, 1
      %s38 = ssub.s32 %s30, %s37
      %p39 = scmp.eq.s32.totalorder %s38, 0
      %s41 = sadd.s32 %s40, 1
      %s42 = scalar_select %p39, %s40, %s41
      %p45 = pneg %p39
      %p46 = scmp.eq.s32.totalorder %s30, 2
      %p47 = por %p45, %p46
      %p48 = scmp.ne.s32.totalorder %s40, %s43
      %p49 = scmp.eq.s32.totalorder %s30, 0
      %p50 = por %p48, %p49
      %p51 = scmp.ne.s32.totalorder %s40, %s43
      %p52 = scmp.eq.s32.totalorder %s35, 2
      %p53 = por %p51, %p52
      %p54 = scmp.ne.s32.totalorder %s43, %s44
      %p55 = scmp.eq.s32.totalorder %s35, 0
      %p56 = por %p54, %p55
      %p57 = scmp.ne.s32.totalorder %s43, %s44
      %p58 = scmp.eq.s32.totalorder %s36, 2
      %p59 = por %p57, %p58
      %p61 = scmp.ne.s32.totalorder %s44, %s60
      %p62 = scmp.eq.s32.totalorder %s36, 0
      %p63 = por %p61, %p62
      %s65 = sadd.s32 %s64, 1
      %p68 = scmp.eq.s32.totalorder %s30, 2
      %p69 = scmp.ne.s32.totalorder %s64, %s66
      %p70 = scmp.eq.s32.totalorder %s30, 0
      %p71 = por %p69, %p70
      %p72 = scmp.ne.s32.totalorder %s64, %s66
      %p73 = scmp.eq.s32.totalorder %s35, 2
      %p74 = por %p72, %p73
      %p75 = scmp.ne.s32.totalorder %s66, %s67
      %p76 = scmp.eq.s32.totalorder %s35, 0
      %p77 = por %p75, %p76
      %p78 = scmp.ne.s32.totalorder %s66, %s67
      %p79 = scmp.eq.s32.totalorder %s36, 2
      %p80 = por %p78, %p79
      %p82 = scmp.ne.s32.totalorder %s67, %s81
      %p83 = scmp.eq.s32.totalorder %s36, 0
      %p84 = por %p82, %p83
      %s86 = sadd.s32 %s85, 1
      %p89 = scmp.eq.s32.totalorder %s30, 2
      %p90 = scmp.ne.s32.totalorder %s85, %s87
      %p91 = scmp.eq.s32.totalorder %s30, 0
      %p92 = por %p90, %p91
      %p93 = scmp.ne.s32.totalorder %s85, %s87
      %p94 = scmp.eq.s32.totalorder %s35, 2
      %p95 = por %p93, %p94
      %p96 = scmp.ne.s32.totalorder %s87, %s88
      %p97 = scmp.eq.s32.totalorder %s35, 0
      %p98 = por %p96, %p97
      %p99 = scmp.ne.s32.totalorder %s87, %s88
      %p100 = scmp.eq.s32.totalorder %s36, 2
      %p101 = por %p99, %p100
      %p103 = scmp.ne.s32.totalorder %s88, %s102
      %p104 = scmp.eq.s32.totalorder %s36, 0
      %p105 = por %p103, %p104
      %s107 = sadd.s32 %s106, 1
      %p110 = scmp.eq.s32.totalorder %s30, 2
      %p111 = scmp.ne.s32.totalorder %s106, %s108
      %p112 = scmp.eq.s32.totalorder %s30, 0
      %p113 = por %p111, %p112
      %p114 = scmp.ne.s32.totalorder %s106, %s108
      %p115 = scmp.eq.s32.totalorder %s35, 2
      %p116 = por %p114, %p115
      %p117 = scmp.ne.s32.totalorder %s108, %s109
      %p118 = scmp.eq.s32.totalorder %s35, 0
      %p119 = por %p117, %p118
      %p120 = scmp.ne.s32.totalorder %s108, %s109
      %p121 = scmp.eq.s32.totalorder %s36, 2
      %p122 = por %p120, %p121
      %p124 = scmp.ne.s32.totalorder %s109, %s123
      %p125 = scmp.eq.s32.totalorder %s36, 0
      %p126 = por %p124, %p125
      %s128 = sadd.s32 %s127, 1
      %p131 = scmp.eq.s32.totalorder %s30, 2
      %p132 = scmp.ne.s32.totalorder %s127, %s129
      %p133 = scmp.eq.s32.totalorder %s30, 0
      %p134 = por %p132, %p133
      %p135 = scmp.ne.s32.totalorder %s127, %s129
      %p136 = scmp.eq.s32.totalorder %s35, 2
      %p137 = por %p135, %p136
      %p138 = scmp.ne.s32.totalorder %s129, %s130
      %p139 = scmp.eq.s32.totalorder %s35, 0
      %p140 = por %p138, %p139
      %p141 = scmp.ne.s32.totalorder %s129, %s130
      %p142 = scmp.eq.s32.totalorder %s36, 2
      %p143 = por %p141, %p142
      %p145 = scmp.ne.s32.totalorder %s130, %s144
      %p146 = scmp.eq.s32.totalorder %s36, 0
      %p147 = por %p145, %p146
      %s149 = sadd.s32 %s148, 1
      %p152 = scmp.eq.s32.totalorder %s30, 2
      %p153 = scmp.ne.s32.totalorder %s148, %s150
      %p154 = scmp.eq.s32.totalorder %s30, 0
      %p155 = por %p153, %p154
      %p156 = scmp.ne.s32.totalorder %s148, %s150
      %p157 = scmp.eq.s32.totalorder %s35, 2
      %p158 = por %p156, %p157
      %p159 = scmp.ne.s32.totalorder %s150, %s151
      %p160 = scmp.eq.s32.totalorder %s35, 0
      %p161 = por %p159, %p160
      %p162 = scmp.ne.s32.totalorder %s150, %s151
      %p163 = scmp.eq.s32.totalorder %s36, 2
      %p164 = por %p162, %p163
      %p166 = scmp.ne.s32.totalorder %s151, %s165
      %p167 = scmp.eq.s32.totalorder %s36, 0
      %p168 = por %p166, %p167
      %s170 = sadd.s32 %s169, 1
      %p173 = scmp.eq.s32.totalorder %s30, 2
      %p174 = scmp.ne.s32.totalorder %s169, %s171
      %p175 = scmp.eq.s32.totalorder %s30, 0
      %p176 = por %p174, %p175
      %p177 = scmp.ne.s32.totalorder %s169, %s171
      %p178 = scmp.eq.s32.totalorder %s35, 2
      %p179 = por %p177, %p178
      %p180 = scmp.ne.s32.totalorder %s171, %s172
      %p181 = scmp.eq.s32.totalorder %s35, 0
      %p182 = por %p180, %p181
      %p183 = scmp.ne.s32.totalorder %s171, %s172
      %p184 = scmp.eq.s32.totalorder %s36, 2
      %p185 = por %p183, %p184
      %p187 = scmp.ne.s32.totalorder %s172, %s186
      %p188 = scmp.eq.s32.totalorder %s36, 0
      %p189 = por %p187, %p188
      %s191 = sadd.s32 %s190, 1
      %p194 = scmp.eq.s32.totalorder %s30, 2
      %p195 = scmp.ne.s32.totalorder %s190, %s192
      %p196 = scmp.eq.s32.totalorder %s30, 0
      %p197 = por %p195, %p196
      %p198 = scmp.ne.s32.totalorder %s190, %s192
      %p199 = scmp.eq.s32.totalorder %s35, 2
      %p200 = por %p198, %p199
      %p201 = scmp.ne.s32.totalorder %s192, %s193
      %p202 = scmp.eq.s32.totalorder %s35, 0
      %p203 = por %p201, %p202
      %p204 = scmp.ne.s32.totalorder %s192, %s193
      %p205 = scmp.eq.s32.totalorder %s36, 2
      %p206 = por %p204, %p205
      %p208 = scmp.ne.s32.totalorder %s193, %s207
      %p209 = scmp.eq.s32.totalorder %s36, 0
      %p210 = por %p208, %p209
      %s212 = sadd.s32 %s211, 1
      %p215 = scmp.eq.s32.totalorder %s30, 2
      %p216 = scmp.ne.s32.totalorder %s211, %s213
      %p217 = scmp.eq.s32.totalorder %s30, 0
      %p218 = por %p216, %p217
      %p219 = scmp.ne.s32.totalorder %s211, %s213
      %p220 = scmp.eq.s32.totalorder %s35, 2
      %p221 = por %p219, %p220
      %p222 = scmp.ne.s32.totalorder %s213, %s214
      %p223 = scmp.eq.s32.totalorder %s35, 0
      %p224 = por %p222, %p223
      %p225 = scmp.ne.s32.totalorder %s213, %s214
      %p226 = scmp.eq.s32.totalorder %s36, 2
      %p227 = por %p225, %p226
      %p229 = scmp.ne.s32.totalorder %s214, %s228
      %p230 = scmp.eq.s32.totalorder %s36, 0
      %p231 = por %p229, %p230
      %s233 = sadd.s32 %s232, 1
      %p236 = scmp.eq.s32.totalorder %s30, 2
      %p237 = scmp.ne.s32.totalorder %s232, %s234
      %p238 = scmp.eq.s32.totalorder %s30, 0
      %p239 = por %p237, %p238
      %p240 = scmp.ne.s32.totalorder %s232, %s234
      %p241 = scmp.eq.s32.totalorder %s35, 2
      %p242 = por %p240, %p241
      %p243 = scmp.ne.s32.totalorder %s234, %s235
      %p244 = scmp.eq.s32.totalorder %s35, 0
      %p245 = por %p243, %p244
      %p246 = scmp.ne.s32.totalorder %s234, %s235
      %p247 = scmp.eq.s32.totalorder %s36, 2
      %p248 = por %p246, %p247
      %p250 = scmp.ne.s32.totalorder %s235, %s249
      %p251 = scmp.eq.s32.totalorder %s36, 0
      %p252 = por %p250, %p251
      %s254 = sadd.s32 %s253, 1
      %p257 = scmp.eq.s32.totalorder %s30, 2
      %p258 = scmp.ne.s32.totalorder %s253, %s255
      %p259 = scmp.eq.s32.totalorder %s30, 0
      %p260 = por %p258, %p259
      %p261 = scmp.ne.s32.totalorder %s253, %s255
      %p262 = scmp.eq.s32.totalorder %s35, 2
      %p263 = por %p261, %p262
      %p264 = scmp.ne.s32.totalorder %s255, %s256
      %p265 = scmp.eq.s32.totalorder %s35, 0
      %p266 = por %p264, %p265
      %p267 = scmp.ne.s32.totalorder %s255, %s256
      %p268 = scmp.eq.s32.totalorder %s36, 2
      %p269 = por %p267, %p268
      %p271 = scmp.ne.s32.totalorder %s256, %s270
      %p272 = scmp.eq.s32.totalorder %s36, 0
      %p273 = por %p271, %p272
      %s274 = ssub.s32 %s30, %s37
      %p275 = scmp.eq.s32.totalorder %s274, 0
      %s277 = sadd.s32 %s276, 1
      %s278 = scalar_select %p275, %s276, %s277
      %p281 = pneg %p275
      %p282 = scmp.eq.s32.totalorder %s30, 2
      %p283 = por %p281, %p282
      %p284 = scmp.ne.s32.totalorder %s276, %s279
      %p285 = scmp.eq.s32.totalorder %s30, 0
      %p286 = por %p284, %p285
      %p287 = scmp.ne.s32.totalorder %s276, %s279
      %p288 = scmp.eq.s32.totalorder %s35, 2
      %p289 = por %p287, %p288
      %p290 = scmp.ne.s32.totalorder %s279, %s280
      %p291 = scmp.eq.s32.totalorder %s35, 0
      %p292 = por %p290, %p291
      %p293 = scmp.ne.s32.totalorder %s279, %s280
      %p294 = scmp.eq.s32.totalorder %s36, 2
      %p295 = por %p293, %p294
      %p297 = scmp.ne.s32.totalorder %s280, %s296
      %p298 = scmp.eq.s32.totalorder %s36, 0
      %p299 = por %p297, %p298
      %s300 = ssub.s32 %s30, %s37
      %p301 = scmp.eq.s32.totalorder %s300, 0
      %s303 = sadd.s32 %s302, 1
      %s304 = scalar_select %p301, %s302, %s303
      %p307 = pneg %p301
      %p308 = scmp.eq.s32.totalorder %s30, 2
      %p309 = por %p307, %p308
      %p310 = scmp.ne.s32.totalorder %s302, %s305
      %p311 = scmp.eq.s32.totalorder %s30, 0
      %p312 = por %p310, %p311
      %p313 = scmp.ne.s32.totalorder %s302, %s305
      %p314 = scmp.eq.s32.totalorder %s35, 2
      %p315 = por %p313, %p314
      %p316 = scmp.ne.s32.totalorder %s305, %s306
      %p317 = scmp.eq.s32.totalorder %s35, 0
      %p318 = por %p316, %p317
      %p319 = scmp.ne.s32.totalorder %s305, %s306
      %p320 = scmp.eq.s32.totalorder %s36, 2
      %p321 = por %p319, %p320
      %p323 = scmp.ne.s32.totalorder %s306, %s322
      %p324 = scmp.eq.s32.totalorder %s36, 0
      %p325 = por %p323, %p324
      %p326 = scmp.le.s32.totalorder 1, %s30
      %p327 = scmp.lt.s32.totalorder %s30, 4
      %p328 = pnand %p326, %p327
      %p329 = pneg %p328
      // Predicated region
      $region9: #{tpu_custom_call.1} parent=5 // pred_check
        _
      $region10: #{tpu_custom_call.1} parent=5 // pred_check_branch
        %331 = sbr.rel (%p328) target = $region12
      $region11: #{tpu_custom_call.1} parent=5 // pred_region
        %s332 = ssub.s32 %s30, 1
        // Predicated region
        $region13: #{tpu_custom_call.1} parent=11 // pred_check
          %p333 = pneg %p77
        $region14: #{tpu_custom_call.1} parent=11 // pred_check_branch
          %335 = sbr.rel (%p333) target = $region16
        $region15: #{tpu_custom_call.1} parent=11 // pred_region
          %337 = vsyncadd [#allocation6], 0
          %s338 = sshll.u32 %s1, 4
          %s339 = int_to_ptr.hbm [resolvable:$true] %s338
          %s340 = sshll.u32 [#allocation5], 4
          %s341 = int_to_ptr.vmem [resolvable:$true] %s340
          %346 = dma.hbm_to_vmem [thread:$0]  %s339, 2048, %s341, [#allocation6], 128, 128, 8
        $region16: #{tpu_custom_call.1} parent=11 // pred_fallthru
          _
        // Predicated region
        $region17: #{tpu_custom_call.1} parent=11 // pred_check
          %p347 = pneg %p98
        $region18: #{tpu_custom_call.1} parent=11 // pred_check_branch
          %349 = sbr.rel (%p347) target = $region20
        $region19: #{tpu_custom_call.1} parent=11 // pred_region
          _
        $region20: #{tpu_custom_call.1} parent=11 // pred_fallthru
          _
        // Predicated region
        $region21: #{tpu_custom_call.1} parent=11 // pred_check
          %p350 = pneg %p119
        $region22: #{tpu_custom_call.1} parent=11 // pred_check_branch
          %352 = sbr.rel (%p350) target = $region24
        $region23: #{tpu_custom_call.1} parent=11 // pred_region
          _
        $region24: #{tpu_custom_call.1} parent=11 // pred_fallthru
          _
        // Predicated region
        $region25: #{tpu_custom_call.1} parent=11 // pred_check
          %p353 = pneg %p140
        $region26: #{tpu_custom_call.1} parent=11 // pred_check_branch
          %355 = sbr.rel (%p353) target = $region28
        $region27: #{tpu_custom_call.1} parent=11 // pred_region
          _
        $region28: #{tpu_custom_call.1} parent=11 // pred_fallthru
          _
        // Predicated region
        $region29: #{tpu_custom_call.1} parent=11 // pred_check
          %p356 = pneg %p161
        $region30: #{tpu_custom_call.1} parent=11 // pred_check_branch
          %358 = sbr.rel (%p356) target = $region32
        $region31: #{tpu_custom_call.1} parent=11 // pred_region
          %360 = vsyncadd [#allocation6], 0
          %s361 = sshll.u32 %s5, 4
          %s362 = int_to_ptr.hbm [resolvable:$true] %s361
          %s363 = sshll.u32 [#allocation7], 4
          %s364 = int_to_ptr.vmem [resolvable:$true] %s363
          %369 = dma.hbm_to_vmem [thread:$0]  %s362, 2048, %s364, [#allocation6], 128, 128, 8
        $region32: #{tpu_custom_call.1} parent=11 // pred_fallthru
          _
        // Predicated region
        $region33: #{tpu_custom_call.1} parent=11 // pred_check
          %p370 = pneg %p182
        $region34: #{tpu_custom_call.1} parent=11 // pred_check_branch
          %372 = sbr.rel (%p370) target = $region36
        $region35: #{tpu_custom_call.1} parent=11 // pred_region
          _
        $region36: #{tpu_custom_call.1} parent=11 // pred_fallthru
          _
        // Predicated region
        $region37: #{tpu_custom_call.1} parent=11 // pred_check
          %p373 = pneg %p203
        $region38: #{tpu_custom_call.1} parent=11 // pred_check_branch
          %375 = sbr.rel (%p373) target = $region40
        $region39: #{tpu_custom_call.1} parent=11 // pred_region
          %377 = vsyncadd [#allocation9], 0
          %s378 = sshll.u32 %s7, 4
          %s379 = int_to_ptr.hbm [resolvable:$true] %s378
          %s380 = sshll.u32 [#allocation8], 4
          %s381 = int_to_ptr.vmem [resolvable:$true] %s380
          %386 = dma.hbm_to_vmem [thread:$0]  %s379, 2048, %s381, [#allocation9], 128, 128, 8
        $region40: #{tpu_custom_call.1} parent=11 // pred_fallthru
          _
        // Predicated region
        $region41: #{tpu_custom_call.1} parent=11 // pred_check
          %p387 = pneg %p224
        $region42: #{tpu_custom_call.1} parent=11 // pred_check_branch
          %389 = sbr.rel (%p387) target = $region44
        $region43: #{tpu_custom_call.1} parent=11 // pred_region
          _
        $region44: #{tpu_custom_call.1} parent=11 // pred_fallthru
          _
        // Predicated region
        $region45: #{tpu_custom_call.1} parent=11 // pred_check
          %p390 = pneg %p245
        $region46: #{tpu_custom_call.1} parent=11 // pred_check_branch
          %392 = sbr.rel (%p390) target = $region48
        $region47: #{tpu_custom_call.1} parent=11 // pred_region
          _
        $region48: #{tpu_custom_call.1} parent=11 // pred_fallthru
          _
        // Predicated region
        $region49: #{tpu_custom_call.1} parent=11 // pred_check
          %p393 = pneg %p266
        $region50: #{tpu_custom_call.1} parent=11 // pred_check_branch
          %395 = sbr.rel (%p393) target = $region52
        $region51: #{tpu_custom_call.1} parent=11 // pred_region
          _
        $region52: #{tpu_custom_call.1} parent=11 // pred_fallthru
          _
      $region12: #{tpu_custom_call.1} parent=5 // pred_fallthru
        _
      %p396 = scmp.lt.s32.totalorder %s30, 3
      // Predicated region
      $region53: #{tpu_custom_call.1} parent=5 // pred_check
        %p397 = pneg %p396
      $region54: #{tpu_custom_call.1} parent=5 // pred_check_branch
        %399 = sbr.rel (%p397) target = $region56
      $region55: #{tpu_custom_call.1} parent=5 // pred_region
        // Predicated region
        $region57: #{tpu_custom_call.1} parent=55 // pred_check
          %p400 = pneg %p50
        $region58: #{tpu_custom_call.1} parent=55 // pred_check_branch
          %402 = sbr.rel (%p400) target = $region60
        $region59: #{tpu_custom_call.1} parent=55 // pred_region
          %s403 = sand.u32 %s40, 1
          %s404 = scalar_lea.sflag [#allocation3], %s403
          %s405 = sand.u32 %s40, 1
          %s406 = smul.addr %s405, 128
          %s407 = scalar_lea.vmem [#allocation2], %s406
          %s408 = smul.u32 16, %s30
          %410 = vsyncadd %s404, 0
          %s411 = smul.addr %s408, 8
          %s412 = scalar_lea.hbm %s0, %s411
          %s413 = sshll.u32 %s412, 4
          %s414 = int_to_ptr.hbm [resolvable:$true] %s413
          %s415 = sshll.u32 %s407, 4
          %s416 = int_to_ptr.vmem [resolvable:$true] %s415
          %421 = dma.hbm_to_vmem [thread:$0]  %s414, 2048, %s416, %s404, 128, 128, 8
        $region60: #{tpu_custom_call.1} parent=55 // pred_fallthru
          _
      $region56: #{tpu_custom_call.1} parent=5 // pred_fallthru
        _
      %p422 = scmp.le.s32.totalorder 1, %s30
      %p423 = scmp.lt.s32.totalorder %s30, 4
      %p424 = pnand %p422, %p423
      %p425 = pneg %p424
      // Predicated region
      $region61: #{tpu_custom_call.1} parent=5 // pred_check
        _
      $region62: #{tpu_custom_call.1} parent=5 // pred_check_branch
        %427 = sbr.rel (%p424) target = $region64
      $region63: #{tpu_custom_call.1} parent=5 // pred_region
        %s428 = ssub.s32 %s30, 1
        %s429 = sand.u32 %s43, 1
        %s430 = scalar_lea.sflag [#allocation3], %s429
        %s431 = sand.u32 %s43, 1
        %s432 = smul.addr %s431, 128
        %s433 = scalar_lea.vmem [#allocation2], %s432
        // Predicated region
        $region65: #{tpu_custom_call.1} parent=63 // pred_check
          %p434 = pneg %p56
        $region66: #{tpu_custom_call.1} parent=63 // pred_check_branch
          %436 = sbr.rel (%p434) target = $region68
        $region67: #{tpu_custom_call.1} parent=63 // pred_region
          %438 = dma.done %s430, 2048
        $region68: #{tpu_custom_call.1} parent=63 // pred_fallthru
          _
        // Predicated region
        $region69: #{tpu_custom_call.1} parent=63 // pred_check
          %p439 = pneg %p77
        $region70: #{tpu_custom_call.1} parent=63 // pred_check_branch
          %441 = sbr.rel (%p439) target = $region72
        $region71: #{tpu_custom_call.1} parent=63 // pred_region
          %443 = dma.done [#allocation6], 2048
        $region72: #{tpu_custom_call.1} parent=63 // pred_fallthru
          _
        // Predicated region
        $region73: #{tpu_custom_call.1} parent=63 // pred_check
          %p444 = pneg %p161
        $region74: #{tpu_custom_call.1} parent=63 // pred_check_branch
          %446 = sbr.rel (%p444) target = $region76
        $region75: #{tpu_custom_call.1} parent=63 // pred_region
          %448 = dma.done [#allocation6], 2048
        $region76: #{tpu_custom_call.1} parent=63 // pred_fallthru
          _
        // Predicated region
        $region77: #{tpu_custom_call.1} parent=63 // pred_check
          %p449 = pneg %p203
        $region78: #{tpu_custom_call.1} parent=63 // pred_check_branch
          %451 = sbr.rel (%p449) target = $region80
        $region79: #{tpu_custom_call.1} parent=63 // pred_region
          %453 = dma.done [#allocation9], 2048
        $region80: #{tpu_custom_call.1} parent=63 // pred_fallthru
          _
        %s454 = sand.u32 %s43, 1
        %s455 = scalar_lea.sflag [#allocation3], %s454
        %s456 = sand.u32 %s43, 1
        %s457 = smul.addr %s456, 128
        %s458 = scalar_lea.vmem [#allocation2], %s457
        %p459 = pneg %p56
        %p460 = pneg %p53
        %p461 = pneg %p77
        %p462 = pneg %p74
        %p463 = pneg %p98
        %p464 = pneg %p95
        %p465 = pneg %p119
        %p466 = pneg %p116
        %p467 = pneg %p140
        %p468 = pneg %p137
        %p469 = pneg %p161
        %p470 = pneg %p158
        %p471 = pneg %p182
        %p472 = pneg %p179
        %p473 = pneg %p203
        %p474 = pneg %p200
        %p475 = pneg %p224
        %p476 = pneg %p221
        %p477 = pneg %p245
        %p478 = pneg %p242
        %p479 = pneg %p266
        %p480 = pneg %p263
        %p481 = pneg %p292
        %p482 = pneg %p289
        %s483 = sand.u32 %s279, 1
        %s484 = scalar_lea.sflag [#allocation4], %s483
        %s485 = sand.u32 %s279, 1
        %s486 = smul.addr %s485, 128
        %s487 = scalar_lea.vmem [#allocation10], %s486
        %p488 = pneg %p318
        %p489 = pneg %p315
        %s490 = sand.u32 %s305, 1
        %s491 = scalar_lea.sflag [#allocation12], %s490
        %s492 = sand.u32 %s305, 1
        %s493 = smul.addr %s492, 64
        %s494 = scalar_lea.vmem [#allocation11], %s493
        %s495 = smul.u32 16, %s35
        %s496 = smul.u32 16, %s35
        %s497 = smul.u32 16, %s35
        %v498 = vld [vmem:[%s433] sm:$0xff]
        %v499 = vld [vmem:[%s433 + $0x8] sm:$0xff]
        %v500 = vld [vmem:[%s433 + $0x10] sm:$0xff]
        %v501 = vld [vmem:[%s433 + $0x18] sm:$0xff]
        %v502 = vld [vmem:[%s433 + $0x20] sm:$0xff]
        %v503 = vld [vmem:[%s433 + $0x28] sm:$0xff]
        %v504 = vld [vmem:[%s433 + $0x30] sm:$0xff]
        %v505 = vld [vmem:[%s433 + $0x38] sm:$0xff]
        %v506 = vld [vmem:[%s433 + $0x40] sm:$0xff]
        %v507 = vld [vmem:[%s433 + $0x48] sm:$0xff]
        %v508 = vld [vmem:[%s433 + $0x50] sm:$0xff]
        %v509 = vld [vmem:[%s433 + $0x58] sm:$0xff]
        %v510 = vld [vmem:[%s433 + $0x60] sm:$0xff]
        %v511 = vld [vmem:[%s433 + $0x68] sm:$0xff]
        %v512 = vld [vmem:[%s433 + $0x70] sm:$0xff]
        %v513 = vld [vmem:[%s433 + $0x78] sm:$0xff]
        %v514 = vld [vmem:[#allocation5] sm:$0xff]
        %v515 = vld [vmem:[#allocation5 + $0x8] sm:$0xff]
        %v516 = vld [vmem:[#allocation5 + $0x10] sm:$0xff]
        %v517 = vld [vmem:[#allocation5 + $0x18] sm:$0xff]
        %v518 = vld [vmem:[#allocation5 + $0x20] sm:$0xff]
        %v519 = vld [vmem:[#allocation5 + $0x28] sm:$0xff]
        %v520 = vld [vmem:[#allocation5 + $0x30] sm:$0xff]
        %v521 = vld [vmem:[#allocation5 + $0x38] sm:$0xff]
        %v522 = vld [vmem:[#allocation5 + $0x40] sm:$0xff]
        %v523 = vld [vmem:[#allocation5 + $0x48] sm:$0xff]
        %v524 = vld [vmem:[#allocation5 + $0x50] sm:$0xff]
        %v525 = vld [vmem:[#allocation5 + $0x58] sm:$0xff]
        %v526 = vld [vmem:[#allocation5 + $0x60] sm:$0xff]
        %v527 = vld [vmem:[#allocation5 + $0x68] sm:$0xff]
        %v528 = vld [vmem:[#allocation5 + $0x70] sm:$0xff]
        %v529 = vld [vmem:[#allocation5 + $0x78] sm:$0xff]
        %v530 = vld [vmem:[%s2] sm:$0x1]
        %v532 = vperm.slane %v530, 0
        %534 = vmatpush.msra.mxu0 %v529
        %535 = vmatpush.msra.mxu0 %v528
        %536 = vmatpush.msra.mxu0 %v527
        %537 = vmatpush.msra.mxu0 %v526
        %538 = vmatpush.msra.mxu0 %v525
        %539 = vmatpush.msra.mxu0 %v524
        %540 = vmatpush.msra.mxu0 %v523
        %541 = vmatpush.msra.mxu0 %v522
        %542 = vmatpush.msra.mxu0 %v521
        %543 = vmatpush.msra.mxu0 %v520
        %544 = vmatpush.msra.mxu0 %v519
        %545 = vmatpush.msra.mxu0 %v518
        %546 = vmatpush.msra.mxu0 %v517
        %547 = vmatpush.msra.mxu0 %v516
        %548 = vmatpush.msra.mxu0 %v515
        %549 = vmatpush.msra.mxu0 %v514
        %550 = vmatmul.f32.gmra.mxu0 %v498
        %v551 = vpop.f32.mrf.mxu0
        %v552 = vadd.f32 %v532, %v551
        %553 = vmatmul.f32.gmra.mxu0 %v499
        %v554 = vpop.f32.mrf.mxu0
        %v555 = vadd.f32 %v532, %v554
        %556 = vmatmul.f32.gmra.mxu0 %v500
        %v557 = vpop.f32.mrf.mxu0
        %v558 = vadd.f32 %v532, %v557
        %559 = vmatmul.f32.gmra.mxu0 %v501
        %v560 = vpop.f32.mrf.mxu0
        %v561 = vadd.f32 %v532, %v560
        %562 = vmatmul.f32.gmra.mxu0 %v502
        %v563 = vpop.f32.mrf.mxu0
        %v564 = vadd.f32 %v532, %v563
        %565 = vmatmul.f32.gmra.mxu0 %v503
        %v566 = vpop.f32.mrf.mxu0
        %v567 = vadd.f32 %v532, %v566
        %568 = vmatmul.f32.gmra.mxu0 %v504
        %v569 = vpop.f32.mrf.mxu0
        %v570 = vadd.f32 %v532, %v569
        %571 = vmatmul.f32.gmra.mxu0 %v505
        %v572 = vpop.f32.mrf.mxu0
        %v573 = vadd.f32 %v532, %v572
        %574 = vmatmul.f32.gmra.mxu0 %v506
        %v575 = vpop.f32.mrf.mxu0
        %v576 = vadd.f32 %v532, %v575
        %577 = vmatmul.f32.gmra.mxu0 %v507
        %v578 = vpop.f32.mrf.mxu0
        %v579 = vadd.f32 %v532, %v578
        %580 = vmatmul.f32.gmra.mxu0 %v508
        %v581 = vpop.f32.mrf.mxu0
        %v582 = vadd.f32 %v532, %v581
        %583 = vmatmul.f32.gmra.mxu0 %v509
        %v584 = vpop.f32.mrf.mxu0
        %v585 = vadd.f32 %v532, %v584
        %586 = vmatmul.f32.gmra.mxu0 %v510
        %v587 = vpop.f32.mrf.mxu0
        %v588 = vadd.f32 %v532, %v587
        %589 = vmatmul.f32.gmra.mxu0 %v511
        %v590 = vpop.f32.mrf.mxu0
        %v591 = vadd.f32 %v532, %v590
        %592 = vmatmul.f32.gmra.mxu0 %v512
        %v593 = vpop.f32.mrf.mxu0
        %v594 = vadd.f32 %v532, %v593
        %595 = vmatmul.f32.gmra.mxu0 %v513
        %v596 = vpop.f32.mrf.mxu0
        %v597 = vadd.f32 %v532, %v596
        %598 = vdwg.mxu0
        %v599 = vmul.f32 %v552, 0.5
        %v600 = vmul.f32 %v555, 0.5
        %v601 = vmul.f32 %v558, 0.5
        %v602 = vmul.f32 %v561, 0.5
        %v603 = vmul.f32 %v564, 0.5
        %v604 = vmul.f32 %v567, 0.5
        %v605 = vmul.f32 %v570, 0.5
        %v606 = vmul.f32 %v573, 0.5
        %v607 = vmul.f32 %v576, 0.5
        %v608 = vmul.f32 %v579, 0.5
        %v609 = vmul.f32 %v582, 0.5
        %v610 = vmul.f32 %v585, 0.5
        %v611 = vmul.f32 %v588, 0.5
        %v612 = vmul.f32 %v591, 0.5
        %v613 = vmul.f32 %v594, 0.5
        %v614 = vmul.f32 %v597, 0.5
        %v615 = vmul.f32 %v552, 0.70710677
        %v616 = vmul.f32 %v555, 0.70710677
        %v617 = vmul.f32 %v558, 0.70710677
        %v618 = vmul.f32 %v561, 0.70710677
        %v619 = vmul.f32 %v564, 0.70710677
        %v620 = vmul.f32 %v567, 0.70710677
        %v621 = vmul.f32 %v570, 0.70710677
        %v622 = vmul.f32 %v573, 0.70710677
        %v623 = vmul.f32 %v576, 0.70710677
        %v624 = vmul.f32 %v579, 0.70710677
        %v625 = vmul.f32 %v582, 0.70710677
        %v626 = vmul.f32 %v585, 0.70710677
        %v627 = vmul.f32 %v588, 0.70710677
        %v628 = vmul.f32 %v591, 0.70710677
        %v629 = vmul.f32 %v594, 0.70710677
        %v630 = vmul.f32 %v597, 0.70710677
        %v631 = vmul.f32 %v615, %v615
        %v632 = vmin.f32 16.0, %v631
        %v633 = vmul.f32 %v632, 2.1237322e-06
        %v634 = vadd.f32 %v633, 0.00028619796
        %v635 = vmul.f32 %v632, %v634
        %v636 = vadd.f32 %v635, 0.0036580483
        %v637 = vmul.f32 %v632, %v636
        %v638 = vadd.f32 %v637, 0.05243302
        %v639 = vmul.f32 %v632, %v638
        %v640 = vadd.f32 %v639, 0.18741608
        %v641 = vmul.f32 %v632, %v640
        %v642 = vadd.f32 %v641, 1.1283791
        %v643 = vmul.f32 %v615, %v642
        %v644 = vmul.f32 %v632, 3.8918573e-05
        %v645 = vadd.f32 %v644, 0.001143296
        %v646 = vmul.f32 %v632, %v645
        %v647 = vadd.f32 %v646, 0.014752088
        %v648 = vmul.f32 %v632, %v647
        %v649 = vadd.f32 %v648, 0.112945676
        %v650 = vmul.f32 %v632, %v649
        %v651 = vadd.f32 %v650, 0.4994258
        %v652 = vmul.f32 %v632, %v651
        %v653 = vadd.f32 %v652, 1.0
        %v654 = vrcp.pop %v653
        %v655 = vmul.f32 %v653, %v654
        %v656 = vsub.f32 1.0, %v655
        %v657 = vmul.f32 %v654, %v656
        %v658 = vadd.f32 %v654, %v657
        %vm659 = vweird.f32 %v653
        %vm660 = vweird.f32 %v654
        %vm661 = vmor %vm659, %vm660
        %v662 = vsel %vm661, %v654, %v658
        %v663 = vand.u32 2147483647, %v653
        %vm664 = vcmp.eq.f32.partialorder %v663, 8.507059e+37
        %v665 = vand.u32 %v653, 2147483648
        %v666 = vor.u32 1.1754944e-38, %v665
        %v667 = vsel %vm664, %v666, %v662
        %v668 = vmul.f32 %v643, %v667
        %v669 = vmin.f32 %v668, 1.0
        %v670 = vmax.f32 %v669, -1.0
        %v671 = vmul.f32 %v616, %v616
        %v672 = vmin.f32 16.0, %v671
        %v673 = vmul.f32 %v672, 2.1237322e-06
        %v674 = vadd.f32 %v673, 0.00028619796
        %v675 = vmul.f32 %v672, %v674
        %v676 = vadd.f32 %v675, 0.0036580483
        %v677 = vmul.f32 %v672, %v676
        %v678 = vadd.f32 %v677, 0.05243302
        %v679 = vmul.f32 %v672, %v678
        %v680 = vadd.f32 %v679, 0.18741608
        %v681 = vmul.f32 %v672, %v680
        %v682 = vadd.f32 %v681, 1.1283791
        %v683 = vmul.f32 %v616, %v682
        %v684 = vmul.f32 %v672, 3.8918573e-05
        %v685 = vadd.f32 %v684, 0.001143296
        %v686 = vmul.f32 %v672, %v685
        %v687 = vadd.f32 %v686, 0.014752088
        %v688 = vmul.f32 %v672, %v687
        %v689 = vadd.f32 %v688, 0.112945676
        %v690 = vmul.f32 %v672, %v689
        %v691 = vadd.f32 %v690, 0.4994258
        %v692 = vmul.f32 %v672, %v691
        %v693 = vadd.f32 %v692, 1.0
        %v694 = vrcp.pop %v693
        %v695 = vmul.f32 %v693, %v694
        %v696 = vsub.f32 1.0, %v695
        %v697 = vmul.f32 %v694, %v696
        %v698 = vadd.f32 %v694, %v697
        %vm699 = vweird.f32 %v693
        %vm700 = vweird.f32 %v694
        %vm701 = vmor %vm699, %vm700
        %v702 = vsel %vm701, %v694, %v698
        %v703 = vand.u32 2147483647, %v693
        %vm704 = vcmp.eq.f32.partialorder %v703, 8.507059e+37
        %v705 = vand.u32 %v693, 2147483648
        %v706 = vor.u32 1.1754944e-38, %v705
        %v707 = vsel %vm704, %v706, %v702
        %v708 = vmul.f32 %v683, %v707
        %v709 = vmin.f32 %v708, 1.0
        %v710 = vmax.f32 %v709, -1.0
        %v711 = vmul.f32 %v617, %v617
        %v712 = vmin.f32 16.0, %v711
        %v713 = vmul.f32 %v712, 2.1237322e-06
        %v714 = vadd.f32 %v713, 0.00028619796
        %v715 = vmul.f32 %v712, %v714
        %v716 = vadd.f32 %v715, 0.0036580483
        %v717 = vmul.f32 %v712, %v716
        %v718 = vadd.f32 %v717, 0.05243302
        %v719 = vmul.f32 %v712, %v718
        %v720 = vadd.f32 %v719, 0.18741608
        %v721 = vmul.f32 %v712, %v720
        %v722 = vadd.f32 %v721, 1.1283791
        %v723 = vmul.f32 %v617, %v722
        %v724 = vmul.f32 %v712, 3.8918573e-05
        %v725 = vadd.f32 %v724, 0.001143296
        %v726 = vmul.f32 %v712, %v725
        %v727 = vadd.f32 %v726, 0.014752088
        %v728 = vmul.f32 %v712, %v727
        %v729 = vadd.f32 %v728, 0.112945676
        %v730 = vmul.f32 %v712, %v729
        %v731 = vadd.f32 %v730, 0.4994258
        %v732 = vmul.f32 %v712, %v731
        %v733 = vadd.f32 %v732, 1.0
        %v734 = vrcp.pop %v733
        %v735 = vmul.f32 %v733, %v734
        %v736 = vsub.f32 1.0, %v735
        %v737 = vmul.f32 %v734, %v736
        %v738 = vadd.f32 %v734, %v737
        %vm739 = vweird.f32 %v733
        %vm740 = vweird.f32 %v734
        %vm741 = vmor %vm739, %vm740
        %v742 = vsel %vm741, %v734, %v738
        %v743 = vand.u32 2147483647, %v733
        %vm744 = vcmp.eq.f32.partialorder %v743, 8.507059e+37
        %v745 = vand.u32 %v733, 2147483648
        %v746 = vor.u32 1.1754944e-38, %v745
        %v747 = vsel %vm744, %v746, %v742
        %v748 = vmul.f32 %v723, %v747
        %v749 = vmin.f32 %v748, 1.0
        %v750 = vmax.f32 %v749, -1.0
        %v751 = vmul.f32 %v618, %v618
        %v752 = vmin.f32 16.0, %v751
        %v753 = vmul.f32 %v752, 2.1237322e-06
        %v754 = vadd.f32 %v753, 0.00028619796
        %v755 = vmul.f32 %v752, %v754
        %v756 = vadd.f32 %v755, 0.0036580483
        %v757 = vmul.f32 %v752, %v756
        %v758 = vadd.f32 %v757, 0.05243302
        %v759 = vmul.f32 %v752, %v758
        %v760 = vadd.f32 %v759, 0.18741608
        %v761 = vmul.f32 %v752, %v760
        %v762 = vadd.f32 %v761, 1.1283791
        %v763 = vmul.f32 %v618, %v762
        %v764 = vmul.f32 %v752, 3.8918573e-05
        %v765 = vadd.f32 %v764, 0.001143296
        %v766 = vmul.f32 %v752, %v765
        %v767 = vadd.f32 %v766, 0.014752088
        %v768 = vmul.f32 %v752, %v767
        %v769 = vadd.f32 %v768, 0.112945676
        %v770 = vmul.f32 %v752, %v769
        %v771 = vadd.f32 %v770, 0.4994258
        %v772 = vmul.f32 %v752, %v771
        %v773 = vadd.f32 %v772, 1.0
        %v774 = vrcp.pop %v773
        %v775 = vmul.f32 %v773, %v774
        %v776 = vsub.f32 1.0, %v775
        %v777 = vmul.f32 %v774, %v776
        %v778 = vadd.f32 %v774, %v777
        %vm779 = vweird.f32 %v773
        %vm780 = vweird.f32 %v774
        %vm781 = vmor %vm779, %vm780
        %v782 = vsel %vm781, %v774, %v778
        %v783 = vand.u32 2147483647, %v773
        %vm784 = vcmp.eq.f32.partialorder %v783, 8.507059e+37
        %v785 = vand.u32 %v773, 2147483648
        %v786 = vor.u32 1.1754944e-38, %v785
        %v787 = vsel %vm784, %v786, %v782
        %v788 = vmul.f32 %v763, %v787
        %v789 = vmin.f32 %v788, 1.0
        %v790 = vmax.f32 %v789, -1.0
        %v791 = vmul.f32 %v619, %v619
        %v792 = vmin.f32 16.0, %v791
        %v793 = vmul.f32 %v792, 2.1237322e-06
        %v794 = vadd.f32 %v793, 0.00028619796
        %v795 = vmul.f32 %v792, %v794
        %v796 = vadd.f32 %v795, 0.0036580483
        %v797 = vmul.f32 %v792, %v796
        %v798 = vadd.f32 %v797, 0.05243302
        %v799 = vmul.f32 %v792, %v798
        %v800 = vadd.f32 %v799, 0.18741608
        %v801 = vmul.f32 %v792, %v800
        %v802 = vadd.f32 %v801, 1.1283791
        %v803 = vmul.f32 %v619, %v802
        %v804 = vmul.f32 %v792, 3.8918573e-05
        %v805 = vadd.f32 %v804, 0.001143296
        %v806 = vmul.f32 %v792, %v805
        %v807 = vadd.f32 %v806, 0.014752088
        %v808 = vmul.f32 %v792, %v807
        %v809 = vadd.f32 %v808, 0.112945676
        %v810 = vmul.f32 %v792, %v809
        %v811 = vadd.f32 %v810, 0.4994258
        %v812 = vmul.f32 %v792, %v811
        %v813 = vadd.f32 %v812, 1.0
        %v814 = vrcp.pop %v813
        %v815 = vmul.f32 %v813, %v814
        %v816 = vsub.f32 1.0, %v815
        %v817 = vmul.f32 %v814, %v816
        %v818 = vadd.f32 %v814, %v817
        %vm819 = vweird.f32 %v813
        %vm820 = vweird.f32 %v814
        %vm821 = vmor %vm819, %vm820
        %v822 = vsel %vm821, %v814, %v818
        %v823 = vand.u32 2147483647, %v813
        %vm824 = vcmp.eq.f32.partialorder %v823, 8.507059e+37
        %v825 = vand.u32 %v813, 2147483648
        %v826 = vor.u32 1.1754944e-38, %v825
        %v827 = vsel %vm824, %v826, %v822
        %v828 = vmul.f32 %v803, %v827
        %v829 = vmin.f32 %v828, 1.0
        %v830 = vmax.f32 %v829, -1.0
        %v831 = vmul.f32 %v620, %v620
        %v832 = vmin.f32 16.0, %v831
        %v833 = vmul.f32 %v832, 2.1237322e-06
        %v834 = vadd.f32 %v833, 0.00028619796
        %v835 = vmul.f32 %v832, %v834
        %v836 = vadd.f32 %v835, 0.0036580483
        %v837 = vmul.f32 %v832, %v836
        %v838 = vadd.f32 %v837, 0.05243302
        %v839 = vmul.f32 %v832, %v838
        %v840 = vadd.f32 %v839, 0.18741608
        %v841 = vmul.f32 %v832, %v840
        %v842 = vadd.f32 %v841, 1.1283791
        %v843 = vmul.f32 %v620, %v842
        %v844 = vmul.f32 %v832, 3.8918573e-05
        %v845 = vadd.f32 %v844, 0.001143296
        %v846 = vmul.f32 %v832, %v845
        %v847 = vadd.f32 %v846, 0.014752088
        %v848 = vmul.f32 %v832, %v847
        %v849 = vadd.f32 %v848, 0.112945676
        %v850 = vmul.f32 %v832, %v849
        %v851 = vadd.f32 %v850, 0.4994258
        %v852 = vmul.f32 %v832, %v851
        %v853 = vadd.f32 %v852, 1.0
        %v854 = vrcp.pop %v853
        %v855 = vmul.f32 %v853, %v854
        %v856 = vsub.f32 1.0, %v855
        %v857 = vmul.f32 %v854, %v856
        %v858 = vadd.f32 %v854, %v857
        %vm859 = vweird.f32 %v853
        %vm860 = vweird.f32 %v854
        %vm861 = vmor %vm859, %vm860
        %v862 = vsel %vm861, %v854, %v858
        %v863 = vand.u32 2147483647, %v853
        %vm864 = vcmp.eq.f32.partialorder %v863, 8.507059e+37
        %v865 = vand.u32 %v853, 2147483648
        %v866 = vor.u32 1.1754944e-38, %v865
        %v867 = vsel %vm864, %v866, %v862
        %v868 = vmul.f32 %v843, %v867
        %v869 = vmin.f32 %v868, 1.0
        %v870 = vmax.f32 %v869, -1.0
        %v871 = vmul.f32 %v621, %v621
        %v872 = vmin.f32 16.0, %v871
        %v873 = vmul.f32 %v872, 2.1237322e-06
        %v874 = vadd.f32 %v873, 0.00028619796
        %v875 = vmul.f32 %v872, %v874
        %v876 = vadd.f32 %v875, 0.0036580483
        %v877 = vmul.f32 %v872, %v876
        %v878 = vadd.f32 %v877, 0.05243302
        %v879 = vmul.f32 %v872, %v878
        %v880 = vadd.f32 %v879, 0.18741608
        %v881 = vmul.f32 %v872, %v880
        %v882 = vadd.f32 %v881, 1.1283791
        %v883 = vmul.f32 %v621, %v882
        %v884 = vmul.f32 %v872, 3.8918573e-05
        %v885 = vadd.f32 %v884, 0.001143296
        %v886 = vmul.f32 %v872, %v885
        %v887 = vadd.f32 %v886, 0.014752088
        %v888 = vmul.f32 %v872, %v887
        %v889 = vadd.f32 %v888, 0.112945676
        %v890 = vmul.f32 %v872, %v889
        %v891 = vadd.f32 %v890, 0.4994258
        %v892 = vmul.f32 %v872, %v891
        %v893 = vadd.f32 %v892, 1.0
        %v894 = vrcp.pop %v893
        %v895 = vmul.f32 %v893, %v894
        %v896 = vsub.f32 1.0, %v895
        %v897 = vmul.f32 %v894, %v896
        %v898 = vadd.f32 %v894, %v897
        %vm899 = vweird.f32 %v893
        %vm900 = vweird.f32 %v894
        %vm901 = vmor %vm899, %vm900
        %v902 = vsel %vm901, %v894, %v898
        %v903 = vand.u32 2147483647, %v893
        %vm904 = vcmp.eq.f32.partialorder %v903, 8.507059e+37
        %v905 = vand.u32 %v893, 2147483648
        %v906 = vor.u32 1.1754944e-38, %v905
        %v907 = vsel %vm904, %v906, %v902
        %v908 = vmul.f32 %v883, %v907
        %v909 = vmin.f32 %v908, 1.0
        %v910 = vmax.f32 %v909, -1.0
        %v911 = vmul.f32 %v622, %v622
        %v912 = vmin.f32 16.0, %v911
        %v913 = vmul.f32 %v912, 2.1237322e-06
        %v914 = vadd.f32 %v913, 0.00028619796
        %v915 = vmul.f32 %v912, %v914
        %v916 = vadd.f32 %v915, 0.0036580483
        %v917 = vmul.f32 %v912, %v916
        %v918 = vadd.f32 %v917, 0.05243302
        %v919 = vmul.f32 %v912, %v918
        %v920 = vadd.f32 %v919, 0.18741608
        %v921 = vmul.f32 %v912, %v920
        %v922 = vadd.f32 %v921, 1.1283791
        %v923 = vmul.f32 %v622, %v922
        %v924 = vmul.f32 %v912, 3.8918573e-05
        %v925 = vadd.f32 %v924, 0.001143296
        %v926 = vmul.f32 %v912, %v925
        %v927 = vadd.f32 %v926, 0.014752088
        %v928 = vmul.f32 %v912, %v927
        %v929 = vadd.f32 %v928, 0.112945676
        %v930 = vmul.f32 %v912, %v929
        %v931 = vadd.f32 %v930, 0.4994258
        %v932 = vmul.f32 %v912, %v931
        %v933 = vadd.f32 %v932, 1.0
        %v934 = vrcp.pop %v933
        %v935 = vmul.f32 %v933, %v934
        %v936 = vsub.f32 1.0, %v935
        %v937 = vmul.f32 %v934, %v936
        %v938 = vadd.f32 %v934, %v937
        %vm939 = vweird.f32 %v933
        %vm940 = vweird.f32 %v934
        %vm941 = vmor %vm939, %vm940
        %v942 = vsel %vm941, %v934, %v938
        %v943 = vand.u32 2147483647, %v933
        %vm944 = vcmp.eq.f32.partialorder %v943, 8.507059e+37
        %v945 = vand.u32 %v933, 2147483648
        %v946 = vor.u32 1.1754944e-38, %v945
        %v947 = vsel %vm944, %v946, %v942
        %v948 = vmul.f32 %v923, %v947
        %v949 = vmin.f32 %v948, 1.0
        %v950 = vmax.f32 %v949, -1.0
        %v951 = vmul.f32 %v623, %v623
        %v952 = vmin.f32 16.0, %v951
        %v953 = vmul.f32 %v952, 2.1237322e-06
        %v954 = vadd.f32 %v953, 0.00028619796
        %v955 = vmul.f32 %v952, %v954
        %v956 = vadd.f32 %v955, 0.0036580483
        %v957 = vmul.f32 %v952, %v956
        %v958 = vadd.f32 %v957, 0.05243302
        %v959 = vmul.f32 %v952, %v958
        %v960 = vadd.f32 %v959, 0.18741608
        %v961 = vmul.f32 %v952, %v960
        %v962 = vadd.f32 %v961, 1.1283791
        %v963 = vmul.f32 %v623, %v962
        %v964 = vmul.f32 %v952, 3.8918573e-05
        %v965 = vadd.f32 %v964, 0.001143296
        %v966 = vmul.f32 %v952, %v965
        %v967 = vadd.f32 %v966, 0.014752088
        %v968 = vmul.f32 %v952, %v967
        %v969 = vadd.f32 %v968, 0.112945676
        %v970 = vmul.f32 %v952, %v969
        %v971 = vadd.f32 %v970, 0.4994258
        %v972 = vmul.f32 %v952, %v971
        %v973 = vadd.f32 %v972, 1.0
        %v974 = vrcp.pop %v973
        %v975 = vmul.f32 %v973, %v974
        %v976 = vsub.f32 1.0, %v975
        %v977 = vmul.f32 %v974, %v976
        %v978 = vadd.f32 %v974, %v977
        %vm979 = vweird.f32 %v973
        %vm980 = vweird.f32 %v974
        %vm981 = vmor %vm979, %vm980
        %v982 = vsel %vm981, %v974, %v978
        %v983 = vand.u32 2147483647, %v973
        %vm984 = vcmp.eq.f32.partialorder %v983, 8.507059e+37
        %v985 = vand.u32 %v973, 2147483648
        %v986 = vor.u32 1.1754944e-38, %v985
        %v987 = vsel %vm984, %v986, %v982
        %v988 = vmul.f32 %v963, %v987
        %v989 = vmin.f32 %v988, 1.0
        %v990 = vmax.f32 %v989, -1.0
        %v991 = vmul.f32 %v624, %v624
        %v992 = vmin.f32 16.0, %v991
        %v993 = vmul.f32 %v992, 2.1237322e-06
        %v994 = vadd.f32 %v993, 0.00028619796
        %v995 = vmul.f32 %v992, %v994
        %v996 = vadd.f32 %v995, 0.0036580483
        %v997 = vmul.f32 %v992, %v996
        %v998 = vadd.f32 %v997, 0.05243302
        %v999 = vmul.f32 %v992, %v998
        %v1000 = vadd.f32 %v999, 0.18741608
        %v1001 = vmul.f32 %v992, %v1000
        %v1002 = vadd.f32 %v1001, 1.1283791
        %v1003 = vmul.f32 %v624, %v1002
        %v1004 = vmul.f32 %v992, 3.8918573e-05
        %v1005 = vadd.f32 %v1004, 0.001143296
        %v1006 = vmul.f32 %v992, %v1005
        %v1007 = vadd.f32 %v1006, 0.014752088
        %v1008 = vmul.f32 %v992, %v1007
        %v1009 = vadd.f32 %v1008, 0.112945676
        %v1010 = vmul.f32 %v992, %v1009
        %v1011 = vadd.f32 %v1010, 0.4994258
        %v1012 = vmul.f32 %v992, %v1011
        %v1013 = vadd.f32 %v1012, 1.0
        %v1014 = vrcp.pop %v1013
        %v1015 = vmul.f32 %v1013, %v1014
        %v1016 = vsub.f32 1.0, %v1015
        %v1017 = vmul.f32 %v1014, %v1016
        %v1018 = vadd.f32 %v1014, %v1017
        %vm1019 = vweird.f32 %v1013
        %vm1020 = vweird.f32 %v1014
        %vm1021 = vmor %vm1019, %vm1020
        %v1022 = vsel %vm1021, %v1014, %v1018
        %v1023 = vand.u32 2147483647, %v1013
        %vm1024 = vcmp.eq.f32.partialorder %v1023, 8.507059e+37
        %v1025 = vand.u32 %v1013, 2147483648
        %v1026 = vor.u32 1.1754944e-38, %v1025
        %v1027 = vsel %vm1024, %v1026, %v1022
        %v1028 = vmul.f32 %v1003, %v1027
        %v1029 = vmin.f32 %v1028, 1.0
        %v1030 = vmax.f32 %v1029, -1.0
        %v1031 = vmul.f32 %v625, %v625
        %v1032 = vmin.f32 16.0, %v1031
        %v1033 = vmul.f32 %v1032, 2.1237322e-06
        %v1034 = vadd.f32 %v1033, 0.00028619796
        %v1035 = vmul.f32 %v1032, %v1034
        %v1036 = vadd.f32 %v1035, 0.0036580483
        %v1037 = vmul.f32 %v1032, %v1036
        %v1038 = vadd.f32 %v1037, 0.05243302
        %v1039 = vmul.f32 %v1032, %v1038
        %v1040 = vadd.f32 %v1039, 0.18741608
        %v1041 = vmul.f32 %v1032, %v1040
        %v1042 = vadd.f32 %v1041, 1.1283791
        %v1043 = vmul.f32 %v625, %v1042
        %v1044 = vmul.f32 %v1032, 3.8918573e-05
        %v1045 = vadd.f32 %v1044, 0.001143296
        %v1046 = vmul.f32 %v1032, %v1045
        %v1047 = vadd.f32 %v1046, 0.014752088
        %v1048 = vmul.f32 %v1032, %v1047
        %v1049 = vadd.f32 %v1048, 0.112945676
        %v1050 = vmul.f32 %v1032, %v1049
        %v1051 = vadd.f32 %v1050, 0.4994258
        %v1052 = vmul.f32 %v1032, %v1051
        %v1053 = vadd.f32 %v1052, 1.0
        %v1054 = vrcp.pop %v1053
        %v1055 = vmul.f32 %v1053, %v1054
        %v1056 = vsub.f32 1.0, %v1055
        %v1057 = vmul.f32 %v1054, %v1056
        %v1058 = vadd.f32 %v1054, %v1057
        %vm1059 = vweird.f32 %v1053
        %vm1060 = vweird.f32 %v1054
        %vm1061 = vmor %vm1059, %vm1060
        %v1062 = vsel %vm1061, %v1054, %v1058
        %v1063 = vand.u32 2147483647, %v1053
        %vm1064 = vcmp.eq.f32.partialorder %v1063, 8.507059e+37
        %v1065 = vand.u32 %v1053, 2147483648
        %v1066 = vor.u32 1.1754944e-38, %v1065
        %v1067 = vsel %vm1064, %v1066, %v1062
        %v1068 = vmul.f32 %v1043, %v1067
        %v1069 = vmin.f32 %v1068, 1.0
        %v1070 = vmax.f32 %v1069, -1.0
        %v1071 = vmul.f32 %v626, %v626
        %v1072 = vmin.f32 16.0, %v1071
        %v1073 = vmul.f32 %v1072, 2.1237322e-06
        %v1074 = vadd.f32 %v1073, 0.00028619796
        %v1075 = vmul.f32 %v1072, %v1074
        %v1076 = vadd.f32 %v1075, 0.0036580483
        %v1077 = vmul.f32 %v1072, %v1076
        %v1078 = vadd.f32 %v1077, 0.05243302
        %v1079 = vmul.f32 %v1072, %v1078
        %v1080 = vadd.f32 %v1079, 0.18741608
        %v1081 = vmul.f32 %v1072, %v1080
        %v1082 = vadd.f32 %v1081, 1.1283791
        %v1083 = vmul.f32 %v626, %v1082
        %v1084 = vmul.f32 %v1072, 3.8918573e-05
        %v1085 = vadd.f32 %v1084, 0.001143296
        %v1086 = vmul.f32 %v1072, %v1085
        %v1087 = vadd.f32 %v1086, 0.014752088
        %v1088 = vmul.f32 %v1072, %v1087
        %v1089 = vadd.f32 %v1088, 0.112945676
        %v1090 = vmul.f32 %v1072, %v1089
        %v1091 = vadd.f32 %v1090, 0.4994258
        %v1092 = vmul.f32 %v1072, %v1091
        %v1093 = vadd.f32 %v1092, 1.0
        %v1094 = vrcp.pop %v1093
        %v1095 = vmul.f32 %v1093, %v1094
        %v1096 = vsub.f32 1.0, %v1095
        %v1097 = vmul.f32 %v1094, %v1096
        %v1098 = vadd.f32 %v1094, %v1097
        %vm1099 = vweird.f32 %v1093
        %vm1100 = vweird.f32 %v1094
        %vm1101 = vmor %vm1099, %vm1100
        %v1102 = vsel %vm1101, %v1094, %v1098
        %v1103 = vand.u32 2147483647, %v1093
        %vm1104 = vcmp.eq.f32.partialorder %v1103, 8.507059e+37
        %v1105 = vand.u32 %v1093, 2147483648
        %v1106 = vor.u32 1.1754944e-38, %v1105
        %v1107 = vsel %vm1104, %v1106, %v1102
        %v1108 = vmul.f32 %v1083, %v1107
        %v1109 = vmin.f32 %v1108, 1.0
        %v1110 = vmax.f32 %v1109, -1.0
        %v1111 = vmul.f32 %v627, %v627
        %v1112 = vmin.f32 16.0, %v1111
        %v1113 = vmul.f32 %v1112, 2.1237322e-06
        %v1114 = vadd.f32 %v1113, 0.00028619796
        %v1115 = vmul.f32 %v1112, %v1114
        %v1116 = vadd.f32 %v1115, 0.0036580483
        %v1117 = vmul.f32 %v1112, %v1116
        %v1118 = vadd.f32 %v1117, 0.05243302
        %v1119 = vmul.f32 %v1112, %v1118
        %v1120 = vadd.f32 %v1119, 0.18741608
        %v1121 = vmul.f32 %v1112, %v1120
        %v1122 = vadd.f32 %v1121, 1.1283791
        %v1123 = vmul.f32 %v627, %v1122
        %v1124 = vmul.f32 %v1112, 3.8918573e-05
        %v1125 = vadd.f32 %v1124, 0.001143296
        %v1126 = vmul.f32 %v1112, %v1125
        %v1127 = vadd.f32 %v1126, 0.014752088
        %v1128 = vmul.f32 %v1112, %v1127
        %v1129 = vadd.f32 %v1128, 0.112945676
        %v1130 = vmul.f32 %v1112, %v1129
        %v1131 = vadd.f32 %v1130, 0.4994258
        %v1132 = vmul.f32 %v1112, %v1131
        %v1133 = vadd.f32 %v1132, 1.0
        %v1134 = vrcp.pop %v1133
        %v1135 = vmul.f32 %v1133, %v1134
        %v1136 = vsub.f32 1.0, %v1135
        %v1137 = vmul.f32 %v1134, %v1136
        %v1138 = vadd.f32 %v1134, %v1137
        %vm1139 = vweird.f32 %v1133
        %vm1140 = vweird.f32 %v1134
        %vm1141 = vmor %vm1139, %vm1140
        %v1142 = vsel %vm1141, %v1134, %v1138
        %v1143 = vand.u32 2147483647, %v1133
        %vm1144 = vcmp.eq.f32.partialorder %v1143, 8.507059e+37
        %v1145 = vand.u32 %v1133, 2147483648
        %v1146 = vor.u32 1.1754944e-38, %v1145
        %v1147 = vsel %vm1144, %v1146, %v1142
        %v1148 = vmul.f32 %v1123, %v1147
        %v1149 = vmin.f32 %v1148, 1.0
        %v1150 = vmax.f32 %v1149, -1.0
        %v1151 = vmul.f32 %v628, %v628
        %v1152 = vmin.f32 16.0, %v1151
        %v1153 = vmul.f32 %v1152, 2.1237322e-06
        %v1154 = vadd.f32 %v1153, 0.00028619796
        %v1155 = vmul.f32 %v1152, %v1154
        %v1156 = vadd.f32 %v1155, 0.0036580483
        %v1157 = vmul.f32 %v1152, %v1156
        %v1158 = vadd.f32 %v1157, 0.05243302
        %v1159 = vmul.f32 %v1152, %v1158
        %v1160 = vadd.f32 %v1159, 0.18741608
        %v1161 = vmul.f32 %v1152, %v1160
        %v1162 = vadd.f32 %v1161, 1.1283791
        %v1163 = vmul.f32 %v628, %v1162
        %v1164 = vmul.f32 %v1152, 3.8918573e-05
        %v1165 = vadd.f32 %v1164, 0.001143296
        %v1166 = vmul.f32 %v1152, %v1165
        %v1167 = vadd.f32 %v1166, 0.014752088
        %v1168 = vmul.f32 %v1152, %v1167
        %v1169 = vadd.f32 %v1168, 0.112945676
        %v1170 = vmul.f32 %v1152, %v1169
        %v1171 = vadd.f32 %v1170, 0.4994258
        %v1172 = vmul.f32 %v1152, %v1171
        %v1173 = vadd.f32 %v1172, 1.0
        %v1174 = vrcp.pop %v1173
        %v1175 = vmul.f32 %v1173, %v1174
        %v1176 = vsub.f32 1.0, %v1175
        %v1177 = vmul.f32 %v1174, %v1176
        %v1178 = vadd.f32 %v1174, %v1177
        %vm1179 = vweird.f32 %v1173
        %vm1180 = vweird.f32 %v1174
        %vm1181 = vmor %vm1179, %vm1180
        %v1182 = vsel %vm1181, %v1174, %v1178
        %v1183 = vand.u32 2147483647, %v1173
        %vm1184 = vcmp.eq.f32.partialorder %v1183, 8.507059e+37
        %v1185 = vand.u32 %v1173, 2147483648
        %v1186 = vor.u32 1.1754944e-38, %v1185
        %v1187 = vsel %vm1184, %v1186, %v1182
        %v1188 = vmul.f32 %v1163, %v1187
        %v1189 = vmin.f32 %v1188, 1.0
        %v1190 = vmax.f32 %v1189, -1.0
        %v1191 = vmul.f32 %v629, %v629
        %v1192 = vmin.f32 16.0, %v1191
        %v1193 = vmul.f32 %v1192, 2.1237322e-06
        %v1194 = vadd.f32 %v1193, 0.00028619796
        %v1195 = vmul.f32 %v1192, %v1194
        %v1196 = vadd.f32 %v1195, 0.0036580483
        %v1197 = vmul.f32 %v1192, %v1196
        %v1198 = vadd.f32 %v1197, 0.05243302
        %v1199 = vmul.f32 %v1192, %v1198
        %v1200 = vadd.f32 %v1199, 0.18741608
        %v1201 = vmul.f32 %v1192, %v1200
        %v1202 = vadd.f32 %v1201, 1.1283791
        %v1203 = vmul.f32 %v629, %v1202
        %v1204 = vmul.f32 %v1192, 3.8918573e-05
        %v1205 = vadd.f32 %v1204, 0.001143296
        %v1206 = vmul.f32 %v1192, %v1205
        %v1207 = vadd.f32 %v1206, 0.014752088
        %v1208 = vmul.f32 %v1192, %v1207
        %v1209 = vadd.f32 %v1208, 0.112945676
        %v1210 = vmul.f32 %v1192, %v1209
        %v1211 = vadd.f32 %v1210, 0.4994258
        %v1212 = vmul.f32 %v1192, %v1211
        %v1213 = vadd.f32 %v1212, 1.0
        %v1214 = vrcp.pop %v1213
        %v1215 = vmul.f32 %v1213, %v1214
        %v1216 = vsub.f32 1.0, %v1215
        %v1217 = vmul.f32 %v1214, %v1216
        %v1218 = vadd.f32 %v1214, %v1217
        %vm1219 = vweird.f32 %v1213
        %vm1220 = vweird.f32 %v1214
        %vm1221 = vmor %vm1219, %vm1220
        %v1222 = vsel %vm1221, %v1214, %v1218
        %v1223 = vand.u32 2147483647, %v1213
        %vm1224 = vcmp.eq.f32.partialorder %v1223, 8.507059e+37
        %v1225 = vand.u32 %v1213, 2147483648
        %v1226 = vor.u32 1.1754944e-38, %v1225
        %v1227 = vsel %vm1224, %v1226, %v1222
        %v1228 = vmul.f32 %v1203, %v1227
        %v1229 = vmin.f32 %v1228, 1.0
        %v1230 = vmax.f32 %v1229, -1.0
        %v1231 = vmul.f32 %v630, %v630
        %v1232 = vmin.f32 16.0, %v1231
        %v1233 = vmul.f32 %v1232, 2.1237322e-06
        %v1234 = vadd.f32 %v1233, 0.00028619796
        %v1235 = vmul.f32 %v1232, %v1234
        %v1236 = vadd.f32 %v1235, 0.0036580483
        %v1237 = vmul.f32 %v1232, %v1236
        %v1238 = vadd.f32 %v1237, 0.05243302
        %v1239 = vmul.f32 %v1232, %v1238
        %v1240 = vadd.f32 %v1239, 0.18741608
        %v1241 = vmul.f32 %v1232, %v1240
        %v1242 = vadd.f32 %v1241, 1.1283791
        %v1243 = vmul.f32 %v630, %v1242
        %v1244 = vmul.f32 %v1232, 3.8918573e-05
        %v1245 = vadd.f32 %v1244, 0.001143296
        %v1246 = vmul.f32 %v1232, %v1245
        %v1247 = vadd.f32 %v1246, 0.014752088
        %v1248 = vmul.f32 %v1232, %v1247
        %v1249 = vadd.f32 %v1248, 0.112945676
        %v1250 = vmul.f32 %v1232, %v1249
        %v1251 = vadd.f32 %v1250, 0.4994258
        %v1252 = vmul.f32 %v1232, %v1251
        %v1253 = vadd.f32 %v1252, 1.0
        %v1254 = vrcp.pop %v1253
        %v1255 = vmul.f32 %v1253, %v1254
        %v1256 = vsub.f32 1.0, %v1255
        %v1257 = vmul.f32 %v1254, %v1256
        %v1258 = vadd.f32 %v1254, %v1257
        %vm1259 = vweird.f32 %v1253
        %vm1260 = vweird.f32 %v1254
        %vm1261 = vmor %vm1259, %vm1260
        %v1262 = vsel %vm1261, %v1254, %v1258
        %v1263 = vand.u32 2147483647, %v1253
        %vm1264 = vcmp.eq.f32.partialorder %v1263, 8.507059e+37
        %v1265 = vand.u32 %v1253, 2147483648
        %v1266 = vor.u32 1.1754944e-38, %v1265
        %v1267 = vsel %vm1264, %v1266, %v1262
        %v1268 = vmul.f32 %v1243, %v1267
        %v1269 = vmin.f32 %v1268, 1.0
        %v1270 = vmax.f32 %v1269, -1.0
        %v1271 = vadd.f32 %v670, 1.0
        %v1272 = vadd.f32 %v710, 1.0
        %v1273 = vadd.f32 %v750, 1.0
        %v1274 = vadd.f32 %v790, 1.0
        %v1275 = vadd.f32 %v830, 1.0
        %v1276 = vadd.f32 %v870, 1.0
        %v1277 = vadd.f32 %v910, 1.0
        %v1278 = vadd.f32 %v950, 1.0
        %v1279 = vadd.f32 %v990, 1.0
        %v1280 = vadd.f32 %v1030, 1.0
        %v1281 = vadd.f32 %v1070, 1.0
        %v1282 = vadd.f32 %v1110, 1.0
        %v1283 = vadd.f32 %v1150, 1.0
        %v1284 = vadd.f32 %v1190, 1.0
        %v1285 = vadd.f32 %v1230, 1.0
        %v1286 = vadd.f32 %v1270, 1.0
        %v1287 = vmul.f32 %v599, %v1271
        %v1288 = vmul.f32 %v600, %v1272
        %v1289 = vmul.f32 %v601, %v1273
        %v1290 = vmul.f32 %v602, %v1274
        %v1291 = vmul.f32 %v603, %v1275
        %v1292 = vmul.f32 %v604, %v1276
        %v1293 = vmul.f32 %v605, %v1277
        %v1294 = vmul.f32 %v606, %v1278
        %v1295 = vmul.f32 %v607, %v1279
        %v1296 = vmul.f32 %v608, %v1280
        %v1297 = vmul.f32 %v609, %v1281
        %v1298 = vmul.f32 %v610, %v1282
        %v1299 = vmul.f32 %v611, %v1283
        %v1300 = vmul.f32 %v612, %v1284
        %v1301 = vmul.f32 %v613, %v1285
        %v1302 = vmul.f32 %v614, %v1286
        %1303 = vadd.xlane.f32.xlu0 %v1287
        %v1304 = vpop.xlane.xlu0 %1303
        %1305 = vadd.xlane.f32.xlu0 %v1288
        %v1306 = vpop.xlane.xlu0 %1305
        %1307 = vadd.xlane.f32.xlu0 %v1289
        %v1308 = vpop.xlane.xlu0 %1307
        %1309 = vadd.xlane.f32.xlu0 %v1290
        %v1310 = vpop.xlane.xlu0 %1309
        %1311 = vadd.xlane.f32.xlu0 %v1291
        %v1312 = vpop.xlane.xlu0 %1311
        %1313 = vadd.xlane.f32.xlu0 %v1292
        %v1314 = vpop.xlane.xlu0 %1313
        %1315 = vadd.xlane.f32.xlu0 %v1293
        %v1316 = vpop.xlane.xlu0 %1315
        %1317 = vadd.xlane.f32.xlu0 %v1294
        %v1318 = vpop.xlane.xlu0 %1317
        %1319 = vadd.xlane.f32.xlu0 %v1295
        %v1320 = vpop.xlane.xlu0 %1319
        %1321 = vadd.xlane.f32.xlu0 %v1296
        %v1322 = vpop.xlane.xlu0 %1321
        %1323 = vadd.xlane.f32.xlu0 %v1297
        %v1324 = vpop.xlane.xlu0 %1323
        %1325 = vadd.xlane.f32.xlu0 %v1298
        %v1326 = vpop.xlane.xlu0 %1325
        %1327 = vadd.xlane.f32.xlu0 %v1299
        %v1328 = vpop.xlane.xlu0 %1327
        %1329 = vadd.xlane.f32.xlu0 %v1300
        %v1330 = vpop.xlane.xlu0 %1329
        %1331 = vadd.xlane.f32.xlu0 %v1301
        %v1332 = vpop.xlane.xlu0 %1331
        %1333 = vadd.xlane.f32.xlu0 %v1302
        %v1334 = vpop.xlane.xlu0 %1333
        %v1335 = vmul.f32 %v1304, 0.015625
        %v1336 = vmul.f32 %v1306, 0.015625
        %v1337 = vmul.f32 %v1308, 0.015625
        %v1338 = vmul.f32 %v1310, 0.015625
        %v1339 = vmul.f32 %v1312, 0.015625
        %v1340 = vmul.f32 %v1314, 0.015625
        %v1341 = vmul.f32 %v1316, 0.015625
        %v1342 = vmul.f32 %v1318, 0.015625
        %v1343 = vmul.f32 %v1320, 0.015625
        %v1344 = vmul.f32 %v1322, 0.015625
        %v1345 = vmul.f32 %v1324, 0.015625
        %v1346 = vmul.f32 %v1326, 0.015625
        %v1347 = vmul.f32 %v1328, 0.015625
        %v1348 = vmul.f32 %v1330, 0.015625
        %v1349 = vmul.f32 %v1332, 0.015625
        %v1350 = vmul.f32 %v1334, 0.015625
        %v1351 = vsub.f32 %v1287, %v1335
        %v1352 = vsub.f32 %v1288, %v1336
        %v1353 = vsub.f32 %v1289, %v1337
        %v1354 = vsub.f32 %v1290, %v1338
        %v1355 = vsub.f32 %v1291, %v1339
        %v1356 = vsub.f32 %v1292, %v1340
        %v1357 = vsub.f32 %v1293, %v1341
        %v1358 = vsub.f32 %v1294, %v1342
        %v1359 = vsub.f32 %v1295, %v1343
        %v1360 = vsub.f32 %v1296, %v1344
        %v1361 = vsub.f32 %v1297, %v1345
        %v1362 = vsub.f32 %v1298, %v1346
        %v1363 = vsub.f32 %v1299, %v1347
        %v1364 = vsub.f32 %v1300, %v1348
        %v1365 = vsub.f32 %v1301, %v1349
        %v1366 = vsub.f32 %v1302, %v1350
        %v1367 = vld [vmem:[%s9] sm:$0x1]
        %v1369 = vperm.slane %v1367, 0
        %v1371 = vmul.f32 %v1351, %v1369
        %v1372 = vmul.f32 %v1352, %v1369
        %v1373 = vmul.f32 %v1353, %v1369
        %v1374 = vmul.f32 %v1354, %v1369
        %v1375 = vmul.f32 %v1355, %v1369
        %v1376 = vmul.f32 %v1356, %v1369
        %v1377 = vmul.f32 %v1357, %v1369
        %v1378 = vmul.f32 %v1358, %v1369
        %v1379 = vmul.f32 %v1359, %v1369
        %v1380 = vmul.f32 %v1360, %v1369
        %v1381 = vmul.f32 %v1361, %v1369
        %v1382 = vmul.f32 %v1362, %v1369
        %v1383 = vmul.f32 %v1363, %v1369
        %v1384 = vmul.f32 %v1364, %v1369
        %v1385 = vmul.f32 %v1365, %v1369
        %v1386 = vmul.f32 %v1366, %v1369
        %v1387 = vmul.f32 %v1371, %v1371
        %v1388 = vmul.f32 %v1372, %v1372
        %v1389 = vmul.f32 %v1373, %v1373
        %v1390 = vmul.f32 %v1374, %v1374
        %v1391 = vmul.f32 %v1375, %v1375
        %v1392 = vmul.f32 %v1376, %v1376
        %v1393 = vmul.f32 %v1377, %v1377
        %v1394 = vmul.f32 %v1378, %v1378
        %v1395 = vmul.f32 %v1379, %v1379
        %v1396 = vmul.f32 %v1380, %v1380
        %v1397 = vmul.f32 %v1381, %v1381
        %v1398 = vmul.f32 %v1382, %v1382
        %v1399 = vmul.f32 %v1383, %v1383
        %v1400 = vmul.f32 %v1384, %v1384
        %v1401 = vmul.f32 %v1385, %v1385
        %v1402 = vmul.f32 %v1386, %v1386
        %1403 = vadd.xlane.f32.xlu0 %v1387
        %v1404 = vpop.xlane.xlu0 %1403
        %1405 = vadd.xlane.f32.xlu0 %v1388
        %v1406 = vpop.xlane.xlu0 %1405
        %1407 = vadd.xlane.f32.xlu0 %v1389
        %v1408 = vpop.xlane.xlu0 %1407
        %1409 = vadd.xlane.f32.xlu0 %v1390
        %v1410 = vpop.xlane.xlu0 %1409
        %1411 = vadd.xlane.f32.xlu0 %v1391
        %v1412 = vpop.xlane.xlu0 %1411
        %1413 = vadd.xlane.f32.xlu0 %v1392
        %v1414 = vpop.xlane.xlu0 %1413
        %1415 = vadd.xlane.f32.xlu0 %v1393
        %v1416 = vpop.xlane.xlu0 %1415
        %1417 = vadd.xlane.f32.xlu0 %v1394
        %v1418 = vpop.xlane.xlu0 %1417
        %1419 = vadd.xlane.f32.xlu0 %v1395
        %v1420 = vpop.xlane.xlu0 %1419
        %1421 = vadd.xlane.f32.xlu0 %v1396
        %v1422 = vpop.xlane.xlu0 %1421
        %1423 = vadd.xlane.f32.xlu0 %v1397
        %v1424 = vpop.xlane.xlu0 %1423
        %1425 = vadd.xlane.f32.xlu0 %v1398
        %v1426 = vpop.xlane.xlu0 %1425
        %1427 = vadd.xlane.f32.xlu0 %v1399
        %v1428 = vpop.xlane.xlu0 %1427
        %1429 = vadd.xlane.f32.xlu0 %v1400
        %v1430 = vpop.xlane.xlu0 %1429
        %1431 = vadd.xlane.f32.xlu0 %v1401
        %v1432 = vpop.xlane.xlu0 %1431
        %1433 = vadd.xlane.f32.xlu0 %v1402
        %v1434 = vpop.xlane.xlu0 %1433
        %v1435 = vmul.f32 %v1404, 0.015625
        %v1436 = vmul.f32 %v1406, 0.015625
        %v1437 = vmul.f32 %v1408, 0.015625
        %v1438 = vmul.f32 %v1410, 0.015625
        %v1439 = vmul.f32 %v1412, 0.015625
        %v1440 = vmul.f32 %v1414, 0.015625
        %v1441 = vmul.f32 %v1416, 0.015625
        %v1442 = vmul.f32 %v1418, 0.015625
        %v1443 = vmul.f32 %v1420, 0.015625
        %v1444 = vmul.f32 %v1422, 0.015625
        %v1445 = vmul.f32 %v1424, 0.015625
        %v1446 = vmul.f32 %v1426, 0.015625
        %v1447 = vmul.f32 %v1428, 0.015625
        %v1448 = vmul.f32 %v1430, 0.015625
        %v1449 = vmul.f32 %v1432, 0.015625
        %v1450 = vmul.f32 %v1434, 0.015625
        %v1451 = vadd.f32 %v1435, 1e-06
        %v1452 = vadd.f32 %v1436, 1e-06
        %v1453 = vadd.f32 %v1437, 1e-06
        %v1454 = vadd.f32 %v1438, 1e-06
        %v1455 = vadd.f32 %v1439, 1e-06
        %v1456 = vadd.f32 %v1440, 1e-06
        %v1457 = vadd.f32 %v1441, 1e-06
        %v1458 = vadd.f32 %v1442, 1e-06
        %v1459 = vadd.f32 %v1443, 1e-06
        %v1460 = vadd.f32 %v1444, 1e-06
        %v1461 = vadd.f32 %v1445, 1e-06
        %v1462 = vadd.f32 %v1446, 1e-06
        %v1463 = vadd.f32 %v1447, 1e-06
        %v1464 = vadd.f32 %v1448, 1e-06
        %v1465 = vadd.f32 %v1449, 1e-06
        %v1466 = vadd.f32 %v1450, 1e-06
        %v1467 = vrsqrt.pop %v1451
        %v1468 = vmul.f32 %v1467, %v1451
        %v1469 = vmul.f32 %v1468, %v1467
        %v1470 = vmul.f32 0.5, %v1469
        %v1471 = vsub.f32 1.5, %v1470
        %v1472 = vmul.f32 %v1467, %v1471
        %vm1473 = vweird.f32 %v1451
        %vm1474 = vweird.f32 %v1467
        %vm1475 = vmor %vm1473, %vm1474
        %v1476 = vsel %vm1475, %v1467, %v1472
        %v1477 = vrsqrt.pop %v1452
        %v1478 = vmul.f32 %v1477, %v1452
        %v1479 = vmul.f32 %v1478, %v1477
        %v1480 = vmul.f32 0.5, %v1479
        %v1481 = vsub.f32 1.5, %v1480
        %v1482 = vmul.f32 %v1477, %v1481
        %vm1483 = vweird.f32 %v1452
        %vm1484 = vweird.f32 %v1477
        %vm1485 = vmor %vm1483, %vm1484
        %v1486 = vsel %vm1485, %v1477, %v1482
        %v1487 = vrsqrt.pop %v1453
        %v1488 = vmul.f32 %v1487, %v1453
        %v1489 = vmul.f32 %v1488, %v1487
        %v1490 = vmul.f32 0.5, %v1489
        %v1491 = vsub.f32 1.5, %v1490
        %v1492 = vmul.f32 %v1487, %v1491
        %vm1493 = vweird.f32 %v1453
        %vm1494 = vweird.f32 %v1487
        %vm1495 = vmor %vm1493, %vm1494
        %v1496 = vsel %vm1495, %v1487, %v1492
        %v1497 = vrsqrt.pop %v1454
        %v1498 = vmul.f32 %v1497, %v1454
        %v1499 = vmul.f32 %v1498, %v1497
        %v1500 = vmul.f32 0.5, %v1499
        %v1501 = vsub.f32 1.5, %v1500
        %v1502 = vmul.f32 %v1497, %v1501
        %vm1503 = vweird.f32 %v1454
        %vm1504 = vweird.f32 %v1497
        %vm1505 = vmor %vm1503, %vm1504
        %v1506 = vsel %vm1505, %v1497, %v1502
        %v1507 = vrsqrt.pop %v1455
        %v1508 = vmul.f32 %v1507, %v1455
        %v1509 = vmul.f32 %v1508, %v1507
        %v1510 = vmul.f32 0.5, %v1509
        %v1511 = vsub.f32 1.5, %v1510
        %v1512 = vmul.f32 %v1507, %v1511
        %vm1513 = vweird.f32 %v1455
        %vm1514 = vweird.f32 %v1507
        %vm1515 = vmor %vm1513, %vm1514
        %v1516 = vsel %vm1515, %v1507, %v1512
        %v1517 = vrsqrt.pop %v1456
        %v1518 = vmul.f32 %v1517, %v1456
        %v1519 = vmul.f32 %v1518, %v1517
        %v1520 = vmul.f32 0.5, %v1519
        %v1521 = vsub.f32 1.5, %v1520
        %v1522 = vmul.f32 %v1517, %v1521
        %vm1523 = vweird.f32 %v1456
        %vm1524 = vweird.f32 %v1517
        %vm1525 = vmor %vm1523, %vm1524
        %v1526 = vsel %vm1525, %v1517, %v1522
        %v1527 = vrsqrt.pop %v1457
        %v1528 = vmul.f32 %v1527, %v1457
        %v1529 = vmul.f32 %v1528, %v1527
        %v1530 = vmul.f32 0.5, %v1529
        %v1531 = vsub.f32 1.5, %v1530
        %v1532 = vmul.f32 %v1527, %v1531
        %vm1533 = vweird.f32 %v1457
        %vm1534 = vweird.f32 %v1527
        %vm1535 = vmor %vm1533, %vm1534
        %v1536 = vsel %vm1535, %v1527, %v1532
        %v1537 = vrsqrt.pop %v1458
        %v1538 = vmul.f32 %v1537, %v1458
        %v1539 = vmul.f32 %v1538, %v1537
        %v1540 = vmul.f32 0.5, %v1539
        %v1541 = vsub.f32 1.5, %v1540
        %v1542 = vmul.f32 %v1537, %v1541
        %vm1543 = vweird.f32 %v1458
        %vm1544 = vweird.f32 %v1537
        %vm1545 = vmor %vm1543, %vm1544
        %v1546 = vsel %vm1545, %v1537, %v1542
        %v1547 = vrsqrt.pop %v1459
        %v1548 = vmul.f32 %v1547, %v1459
        %v1549 = vmul.f32 %v1548, %v1547
        %v1550 = vmul.f32 0.5, %v1549
        %v1551 = vsub.f32 1.5, %v1550
        %v1552 = vmul.f32 %v1547, %v1551
        %vm1553 = vweird.f32 %v1459
        %vm1554 = vweird.f32 %v1547
        %vm1555 = vmor %vm1553, %vm1554
        %v1556 = vsel %vm1555, %v1547, %v1552
        %v1557 = vrsqrt.pop %v1460
        %v1558 = vmul.f32 %v1557, %v1460
        %v1559 = vmul.f32 %v1558, %v1557
        %v1560 = vmul.f32 0.5, %v1559
        %v1561 = vsub.f32 1.5, %v1560
        %v1562 = vmul.f32 %v1557, %v1561
        %vm1563 = vweird.f32 %v1460
        %vm1564 = vweird.f32 %v1557
        %vm1565 = vmor %vm1563, %vm1564
        %v1566 = vsel %vm1565, %v1557, %v1562
        %v1567 = vrsqrt.pop %v1461
        %v1568 = vmul.f32 %v1567, %v1461
        %v1569 = vmul.f32 %v1568, %v1567
        %v1570 = vmul.f32 0.5, %v1569
        %v1571 = vsub.f32 1.5, %v1570
        %v1572 = vmul.f32 %v1567, %v1571
        %vm1573 = vweird.f32 %v1461
        %vm1574 = vweird.f32 %v1567
        %vm1575 = vmor %vm1573, %vm1574
        %v1576 = vsel %vm1575, %v1567, %v1572
        %v1577 = vrsqrt.pop %v1462
        %v1578 = vmul.f32 %v1577, %v1462
        %v1579 = vmul.f32 %v1578, %v1577
        %v1580 = vmul.f32 0.5, %v1579
        %v1581 = vsub.f32 1.5, %v1580
        %v1582 = vmul.f32 %v1577, %v1581
        %vm1583 = vweird.f32 %v1462
        %vm1584 = vweird.f32 %v1577
        %vm1585 = vmor %vm1583, %vm1584
        %v1586 = vsel %vm1585, %v1577, %v1582
        %v1587 = vrsqrt.pop %v1463
        %v1588 = vmul.f32 %v1587, %v1463
        %v1589 = vmul.f32 %v1588, %v1587
        %v1590 = vmul.f32 0.5, %v1589
        %v1591 = vsub.f32 1.5, %v1590
        %v1592 = vmul.f32 %v1587, %v1591
        %vm1593 = vweird.f32 %v1463
        %vm1594 = vweird.f32 %v1587
        %vm1595 = vmor %vm1593, %vm1594
        %v1596 = vsel %vm1595, %v1587, %v1592
        %v1597 = vrsqrt.pop %v1464
        %v1598 = vmul.f32 %v1597, %v1464
        %v1599 = vmul.f32 %v1598, %v1597
        %v1600 = vmul.f32 0.5, %v1599
        %v1601 = vsub.f32 1.5, %v1600
        %v1602 = vmul.f32 %v1597, %v1601
        %vm1603 = vweird.f32 %v1464
        %vm1604 = vweird.f32 %v1597
        %vm1605 = vmor %vm1603, %vm1604
        %v1606 = vsel %vm1605, %v1597, %v1602
        %v1607 = vrsqrt.pop %v1465
        %v1608 = vmul.f32 %v1607, %v1465
        %v1609 = vmul.f32 %v1608, %v1607
        %v1610 = vmul.f32 0.5, %v1609
        %v1611 = vsub.f32 1.5, %v1610
        %v1612 = vmul.f32 %v1607, %v1611
        %vm1613 = vweird.f32 %v1465
        %vm1614 = vweird.f32 %v1607
        %vm1615 = vmor %vm1613, %vm1614
        %v1616 = vsel %vm1615, %v1607, %v1612
        %v1617 = vrsqrt.pop %v1466
        %v1618 = vmul.f32 %v1617, %v1466
        %v1619 = vmul.f32 %v1618, %v1617
        %v1620 = vmul.f32 0.5, %v1619
        %v1621 = vsub.f32 1.5, %v1620
        %v1622 = vmul.f32 %v1617, %v1621
        %vm1623 = vweird.f32 %v1466
        %vm1624 = vweird.f32 %v1617
        %vm1625 = vmor %vm1623, %vm1624
        %v1626 = vsel %vm1625, %v1617, %v1622
        %v1627 = vmul.f32 %v1371, %v1476
        %v1628 = vmul.f32 %v1372, %v1486
        %v1629 = vmul.f32 %v1373, %v1496
        %v1630 = vmul.f32 %v1374, %v1506
        %v1631 = vmul.f32 %v1375, %v1516
        %v1632 = vmul.f32 %v1376, %v1526
        %v1633 = vmul.f32 %v1377, %v1536
        %v1634 = vmul.f32 %v1378, %v1546
        %v1635 = vmul.f32 %v1379, %v1556
        %v1636 = vmul.f32 %v1380, %v1566
        %v1637 = vmul.f32 %v1381, %v1576
        %v1638 = vmul.f32 %v1382, %v1586
        %v1639 = vmul.f32 %v1383, %v1596
        %v1640 = vmul.f32 %v1384, %v1606
        %v1641 = vmul.f32 %v1385, %v1616
        %v1642 = vmul.f32 %v1386, %v1626
        %v1643 = vld [vmem:[%s3] sm:$0x1]
        %v1645 = vperm.slane %v1643, 0
        %v1647 = vmul.f32 %v1627, %v1645
        %v1648 = vmul.f32 %v1628, %v1645
        %v1649 = vmul.f32 %v1629, %v1645
        %v1650 = vmul.f32 %v1630, %v1645
        %v1651 = vmul.f32 %v1631, %v1645
        %v1652 = vmul.f32 %v1632, %v1645
        %v1653 = vmul.f32 %v1633, %v1645
        %v1654 = vmul.f32 %v1634, %v1645
        %v1655 = vmul.f32 %v1635, %v1645
        %v1656 = vmul.f32 %v1636, %v1645
        %v1657 = vmul.f32 %v1637, %v1645
        %v1658 = vmul.f32 %v1638, %v1645
        %v1659 = vmul.f32 %v1639, %v1645
        %v1660 = vmul.f32 %v1640, %v1645
        %v1661 = vmul.f32 %v1641, %v1645
        %v1662 = vmul.f32 %v1642, %v1645
        %v1663 = vld [vmem:[%s4] sm:$0x1]
        %v1665 = vperm.slane %v1663, 0
        %v1667 = vadd.f32 %v1647, %v1665
        %v1668 = vadd.f32 %v1648, %v1665
        %v1669 = vadd.f32 %v1649, %v1665
        %v1670 = vadd.f32 %v1650, %v1665
        %v1671 = vadd.f32 %v1651, %v1665
        %v1672 = vadd.f32 %v1652, %v1665
        %v1673 = vadd.f32 %v1653, %v1665
        %v1674 = vadd.f32 %v1654, %v1665
        %v1675 = vadd.f32 %v1655, %v1665
        %v1676 = vadd.f32 %v1656, %v1665
        %v1677 = vadd.f32 %v1657, %v1665
        %v1678 = vadd.f32 %v1658, %v1665
        %v1679 = vadd.f32 %v1659, %v1665
        %v1680 = vadd.f32 %v1660, %v1665
        %v1681 = vadd.f32 %v1661, %v1665
        %v1682 = vadd.f32 %v1662, %v1665
        %v1683 = vld [vmem:[#allocation7] sm:$0xff]
        %v1684 = vld [vmem:[#allocation7 + $0x8] sm:$0xff]
        %v1685 = vld [vmem:[#allocation7 + $0x10] sm:$0xff]
        %v1686 = vld [vmem:[#allocation7 + $0x18] sm:$0xff]
        %v1687 = vld [vmem:[#allocation7 + $0x20] sm:$0xff]
        %v1688 = vld [vmem:[#allocation7 + $0x28] sm:$0xff]
        %v1689 = vld [vmem:[#allocation7 + $0x30] sm:$0xff]
        %v1690 = vld [vmem:[#allocation7 + $0x38] sm:$0xff]
        %v1691 = vld [vmem:[#allocation7 + $0x40] sm:$0xff]
        %v1692 = vld [vmem:[#allocation7 + $0x48] sm:$0xff]
        %v1693 = vld [vmem:[#allocation7 + $0x50] sm:$0xff]
        %v1694 = vld [vmem:[#allocation7 + $0x58] sm:$0xff]
        %v1695 = vld [vmem:[#allocation7 + $0x60] sm:$0xff]
        %v1696 = vld [vmem:[#allocation7 + $0x68] sm:$0xff]
        %v1697 = vld [vmem:[#allocation7 + $0x70] sm:$0xff]
        %v1698 = vld [vmem:[#allocation7 + $0x78] sm:$0xff]
        %v1699 = vld [vmem:[%s6] sm:$0x1]
        %v1701 = vperm.slane %v1699, 0
        %1703 = vmatpush.msra.mxu0 %v1698
        %1704 = vmatpush.msra.mxu0 %v1697
        %1705 = vmatpush.msra.mxu0 %v1696
        %1706 = vmatpush.msra.mxu0 %v1695
        %1707 = vmatpush.msra.mxu0 %v1694
        %1708 = vmatpush.msra.mxu0 %v1693
        %1709 = vmatpush.msra.mxu0 %v1692
        %1710 = vmatpush.msra.mxu0 %v1691
        %1711 = vmatpush.msra.mxu0 %v1690
        %1712 = vmatpush.msra.mxu0 %v1689
        %1713 = vmatpush.msra.mxu0 %v1688
        %1714 = vmatpush.msra.mxu0 %v1687
        %1715 = vmatpush.msra.mxu0 %v1686
        %1716 = vmatpush.msra.mxu0 %v1685
        %1717 = vmatpush.msra.mxu0 %v1684
        %1718 = vmatpush.msra.mxu0 %v1683
        %1719 = vmatmul.f32.gmra.mxu0 %v1667
        %v1720 = vpop.f32.mrf.mxu0
        %v1721 = vadd.f32 %v1701, %v1720
        %1722 = vmatmul.f32.gmra.mxu0 %v1668
        %v1723 = vpop.f32.mrf.mxu0
        %v1724 = vadd.f32 %v1701, %v1723
        %1725 = vmatmul.f32.gmra.mxu0 %v1669
        %v1726 = vpop.f32.mrf.mxu0
        %v1727 = vadd.f32 %v1701, %v1726
        %1728 = vmatmul.f32.gmra.mxu0 %v1670
        %v1729 = vpop.f32.mrf.mxu0
        %v1730 = vadd.f32 %v1701, %v1729
        %1731 = vmatmul.f32.gmra.mxu0 %v1671
        %v1732 = vpop.f32.mrf.mxu0
        %v1733 = vadd.f32 %v1701, %v1732
        %1734 = vmatmul.f32.gmra.mxu0 %v1672
        %v1735 = vpop.f32.mrf.mxu0
        %v1736 = vadd.f32 %v1701, %v1735
        %1737 = vmatmul.f32.gmra.mxu0 %v1673
        %v1738 = vpop.f32.mrf.mxu0
        %v1739 = vadd.f32 %v1701, %v1738
        %1740 = vmatmul.f32.gmra.mxu0 %v1674
        %v1741 = vpop.f32.mrf.mxu0
        %v1742 = vadd.f32 %v1701, %v1741
        %1743 = vmatmul.f32.gmra.mxu0 %v1675
        %v1744 = vpop.f32.mrf.mxu0
        %v1745 = vadd.f32 %v1701, %v1744
        %1746 = vmatmul.f32.gmra.mxu0 %v1676
        %v1747 = vpop.f32.mrf.mxu0
        %v1748 = vadd.f32 %v1701, %v1747
        %1749 = vmatmul.f32.gmra.mxu0 %v1677
        %v1750 = vpop.f32.mrf.mxu0
        %v1751 = vadd.f32 %v1701, %v1750
        %1752 = vmatmul.f32.gmra.mxu0 %v1678
        %v1753 = vpop.f32.mrf.mxu0
        %v1754 = vadd.f32 %v1701, %v1753
        %1755 = vmatmul.f32.gmra.mxu0 %v1679
        %v1756 = vpop.f32.mrf.mxu0
        %v1757 = vadd.f32 %v1701, %v1756
        %1758 = vmatmul.f32.gmra.mxu0 %v1680
        %v1759 = vpop.f32.mrf.mxu0
        %v1760 = vadd.f32 %v1701, %v1759
        %1761 = vmatmul.f32.gmra.mxu0 %v1681
        %v1762 = vpop.f32.mrf.mxu0
        %v1763 = vadd.f32 %v1701, %v1762
        %1764 = vmatmul.f32.gmra.mxu0 %v1682
        %v1765 = vpop.f32.mrf.mxu0
        %v1766 = vadd.f32 %v1701, %v1765
        %1767 = vdwg.mxu0
        %v1768 = vmul.f32 %v1721, %v1721
        %v1769 = vmul.f32 %v1724, %v1724
        %v1770 = vmul.f32 %v1727, %v1727
        %v1771 = vmul.f32 %v1730, %v1730
        %v1772 = vmul.f32 %v1733, %v1733
        %v1773 = vmul.f32 %v1736, %v1736
        %v1774 = vmul.f32 %v1739, %v1739
        %v1775 = vmul.f32 %v1742, %v1742
        %v1776 = vmul.f32 %v1745, %v1745
        %v1777 = vmul.f32 %v1748, %v1748
        %v1778 = vmul.f32 %v1751, %v1751
        %v1779 = vmul.f32 %v1754, %v1754
        %v1780 = vmul.f32 %v1757, %v1757
        %v1781 = vmul.f32 %v1760, %v1760
        %v1782 = vmul.f32 %v1763, %v1763
        %v1783 = vmul.f32 %v1766, %v1766
        %1784 = vadd.xlane.f32.xlu0 %v1768
        %v1785 = vpop.xlane.xlu0 %1784
        %1786 = vadd.xlane.f32.xlu0 %v1769
        %v1787 = vpop.xlane.xlu0 %1786
        %1788 = vadd.xlane.f32.xlu0 %v1770
        %v1789 = vpop.xlane.xlu0 %1788
        %1790 = vadd.xlane.f32.xlu0 %v1771
        %v1791 = vpop.xlane.xlu0 %1790
        %1792 = vadd.xlane.f32.xlu0 %v1772
        %v1793 = vpop.xlane.xlu0 %1792
        %1794 = vadd.xlane.f32.xlu0 %v1773
        %v1795 = vpop.xlane.xlu0 %1794
        %1796 = vadd.xlane.f32.xlu0 %v1774
        %v1797 = vpop.xlane.xlu0 %1796
        %1798 = vadd.xlane.f32.xlu0 %v1775
        %v1799 = vpop.xlane.xlu0 %1798
        %1800 = vadd.xlane.f32.xlu0 %v1776
        %v1801 = vpop.xlane.xlu0 %1800
        %1802 = vadd.xlane.f32.xlu0 %v1777
        %v1803 = vpop.xlane.xlu0 %1802
        %1804 = vadd.xlane.f32.xlu0 %v1778
        %v1805 = vpop.xlane.xlu0 %1804
        %1806 = vadd.xlane.f32.xlu0 %v1779
        %v1807 = vpop.xlane.xlu0 %1806
        %1808 = vadd.xlane.f32.xlu0 %v1780
        %v1809 = vpop.xlane.xlu0 %1808
        %1810 = vadd.xlane.f32.xlu0 %v1781
        %v1811 = vpop.xlane.xlu0 %1810
        %1812 = vadd.xlane.f32.xlu0 %v1782
        %v1813 = vpop.xlane.xlu0 %1812
        %1814 = vadd.xlane.f32.xlu0 %v1783
        %v1815 = vpop.xlane.xlu0 %1814
        %v1816 = vmax.f32 %v1785, 1e-24
        %v1817 = vmax.f32 %v1787, 1e-24
        %v1818 = vmax.f32 %v1789, 1e-24
        %v1819 = vmax.f32 %v1791, 1e-24
        %v1820 = vmax.f32 %v1793, 1e-24
        %v1821 = vmax.f32 %v1795, 1e-24
        %v1822 = vmax.f32 %v1797, 1e-24
        %v1823 = vmax.f32 %v1799, 1e-24
        %v1824 = vmax.f32 %v1801, 1e-24
        %v1825 = vmax.f32 %v1803, 1e-24
        %v1826 = vmax.f32 %v1805, 1e-24
        %v1827 = vmax.f32 %v1807, 1e-24
        %v1828 = vmax.f32 %v1809, 1e-24
        %v1829 = vmax.f32 %v1811, 1e-24
        %v1830 = vmax.f32 %v1813, 1e-24
        %v1831 = vmax.f32 %v1815, 1e-24
        %v1832 = vrsqrt.pop %v1816
        %v1833 = vmul.f32 %v1832, %v1816
        %v1834 = vmul.f32 %v1833, %v1832
        %v1835 = vmul.f32 0.5, %v1834
        %v1836 = vsub.f32 1.5, %v1835
        %v1837 = vmul.f32 %v1832, %v1836
        %vm1838 = vweird.f32 %v1816
        %vm1839 = vweird.f32 %v1832
        %vm1840 = vmor %vm1838, %vm1839
        %v1841 = vsel %vm1840, %v1832, %v1837
        %v1842 = vrsqrt.pop %v1817
        %v1843 = vmul.f32 %v1842, %v1817
        %v1844 = vmul.f32 %v1843, %v1842
        %v1845 = vmul.f32 0.5, %v1844
        %v1846 = vsub.f32 1.5, %v1845
        %v1847 = vmul.f32 %v1842, %v1846
        %vm1848 = vweird.f32 %v1817
        %vm1849 = vweird.f32 %v1842
        %vm1850 = vmor %vm1848, %vm1849
        %v1851 = vsel %vm1850, %v1842, %v1847
        %v1852 = vrsqrt.pop %v1818
        %v1853 = vmul.f32 %v1852, %v1818
        %v1854 = vmul.f32 %v1853, %v1852
        %v1855 = vmul.f32 0.5, %v1854
        %v1856 = vsub.f32 1.5, %v1855
        %v1857 = vmul.f32 %v1852, %v1856
        %vm1858 = vweird.f32 %v1818
        %vm1859 = vweird.f32 %v1852
        %vm1860 = vmor %vm1858, %vm1859
        %v1861 = vsel %vm1860, %v1852, %v1857
        %v1862 = vrsqrt.pop %v1819
        %v1863 = vmul.f32 %v1862, %v1819
        %v1864 = vmul.f32 %v1863, %v1862
        %v1865 = vmul.f32 0.5, %v1864
        %v1866 = vsub.f32 1.5, %v1865
        %v1867 = vmul.f32 %v1862, %v1866
        %vm1868 = vweird.f32 %v1819
        %vm1869 = vweird.f32 %v1862
        %vm1870 = vmor %vm1868, %vm1869
        %v1871 = vsel %vm1870, %v1862, %v1867
        %v1872 = vrsqrt.pop %v1820
        %v1873 = vmul.f32 %v1872, %v1820
        %v1874 = vmul.f32 %v1873, %v1872
        %v1875 = vmul.f32 0.5, %v1874
        %v1876 = vsub.f32 1.5, %v1875
        %v1877 = vmul.f32 %v1872, %v1876
        %vm1878 = vweird.f32 %v1820
        %vm1879 = vweird.f32 %v1872
        %vm1880 = vmor %vm1878, %vm1879
        %v1881 = vsel %vm1880, %v1872, %v1877
        %v1882 = vrsqrt.pop %v1821
        %v1883 = vmul.f32 %v1882, %v1821
        %v1884 = vmul.f32 %v1883, %v1882
        %v1885 = vmul.f32 0.5, %v1884
        %v1886 = vsub.f32 1.5, %v1885
        %v1887 = vmul.f32 %v1882, %v1886
        %vm1888 = vweird.f32 %v1821
        %vm1889 = vweird.f32 %v1882
        %vm1890 = vmor %vm1888, %vm1889
        %v1891 = vsel %vm1890, %v1882, %v1887
        %v1892 = vrsqrt.pop %v1822
        %v1893 = vmul.f32 %v1892, %v1822
        %v1894 = vmul.f32 %v1893, %v1892
        %v1895 = vmul.f32 0.5, %v1894
        %v1896 = vsub.f32 1.5, %v1895
        %v1897 = vmul.f32 %v1892, %v1896
        %vm1898 = vweird.f32 %v1822
        %vm1899 = vweird.f32 %v1892
        %vm1900 = vmor %vm1898, %vm1899
        %v1901 = vsel %vm1900, %v1892, %v1897
        %v1902 = vrsqrt.pop %v1823
        %v1903 = vmul.f32 %v1902, %v1823
        %v1904 = vmul.f32 %v1903, %v1902
        %v1905 = vmul.f32 0.5, %v1904
        %v1906 = vsub.f32 1.5, %v1905
        %v1907 = vmul.f32 %v1902, %v1906
        %vm1908 = vweird.f32 %v1823
        %vm1909 = vweird.f32 %v1902
        %vm1910 = vmor %vm1908, %vm1909
        %v1911 = vsel %vm1910, %v1902, %v1907
        %v1912 = vrsqrt.pop %v1824
        %v1913 = vmul.f32 %v1912, %v1824
        %v1914 = vmul.f32 %v1913, %v1912
        %v1915 = vmul.f32 0.5, %v1914
        %v1916 = vsub.f32 1.5, %v1915
        %v1917 = vmul.f32 %v1912, %v1916
        %vm1918 = vweird.f32 %v1824
        %vm1919 = vweird.f32 %v1912
        %vm1920 = vmor %vm1918, %vm1919
        %v1921 = vsel %vm1920, %v1912, %v1917
        %v1922 = vrsqrt.pop %v1825
        %v1923 = vmul.f32 %v1922, %v1825
        %v1924 = vmul.f32 %v1923, %v1922
        %v1925 = vmul.f32 0.5, %v1924
        %v1926 = vsub.f32 1.5, %v1925
        %v1927 = vmul.f32 %v1922, %v1926
        %vm1928 = vweird.f32 %v1825
        %vm1929 = vweird.f32 %v1922
        %vm1930 = vmor %vm1928, %vm1929
        %v1931 = vsel %vm1930, %v1922, %v1927
        %v1932 = vrsqrt.pop %v1826
        %v1933 = vmul.f32 %v1932, %v1826
        %v1934 = vmul.f32 %v1933, %v1932
        %v1935 = vmul.f32 0.5, %v1934
        %v1936 = vsub.f32 1.5, %v1935
        %v1937 = vmul.f32 %v1932, %v1936
        %vm1938 = vweird.f32 %v1826
        %vm1939 = vweird.f32 %v1932
        %vm1940 = vmor %vm1938, %vm1939
        %v1941 = vsel %vm1940, %v1932, %v1937
        %v1942 = vrsqrt.pop %v1827
        %v1943 = vmul.f32 %v1942, %v1827
        %v1944 = vmul.f32 %v1943, %v1942
        %v1945 = vmul.f32 0.5, %v1944
        %v1946 = vsub.f32 1.5, %v1945
        %v1947 = vmul.f32 %v1942, %v1946
        %vm1948 = vweird.f32 %v1827
        %vm1949 = vweird.f32 %v1942
        %vm1950 = vmor %vm1948, %vm1949
        %v1951 = vsel %vm1950, %v1942, %v1947
        %v1952 = vrsqrt.pop %v1828
        %v1953 = vmul.f32 %v1952, %v1828
        %v1954 = vmul.f32 %v1953, %v1952
        %v1955 = vmul.f32 0.5, %v1954
        %v1956 = vsub.f32 1.5, %v1955
        %v1957 = vmul.f32 %v1952, %v1956
        %vm1958 = vweird.f32 %v1828
        %vm1959 = vweird.f32 %v1952
        %vm1960 = vmor %vm1958, %vm1959
        %v1961 = vsel %vm1960, %v1952, %v1957
        %v1962 = vrsqrt.pop %v1829
        %v1963 = vmul.f32 %v1962, %v1829
        %v1964 = vmul.f32 %v1963, %v1962
        %v1965 = vmul.f32 0.5, %v1964
        %v1966 = vsub.f32 1.5, %v1965
        %v1967 = vmul.f32 %v1962, %v1966
        %vm1968 = vweird.f32 %v1829
        %vm1969 = vweird.f32 %v1962
        %vm1970 = vmor %vm1968, %vm1969
        %v1971 = vsel %vm1970, %v1962, %v1967
        %v1972 = vrsqrt.pop %v1830
        %v1973 = vmul.f32 %v1972, %v1830
        %v1974 = vmul.f32 %v1973, %v1972
        %v1975 = vmul.f32 0.5, %v1974
        %v1976 = vsub.f32 1.5, %v1975
        %v1977 = vmul.f32 %v1972, %v1976
        %vm1978 = vweird.f32 %v1830
        %vm1979 = vweird.f32 %v1972
        %vm1980 = vmor %vm1978, %vm1979
        %v1981 = vsel %vm1980, %v1972, %v1977
        %v1982 = vrsqrt.pop %v1831
        %v1983 = vmul.f32 %v1982, %v1831
        %v1984 = vmul.f32 %v1983, %v1982
        %v1985 = vmul.f32 0.5, %v1984
        %v1986 = vsub.f32 1.5, %v1985
        %v1987 = vmul.f32 %v1982, %v1986
        %vm1988 = vweird.f32 %v1831
        %vm1989 = vweird.f32 %v1982
        %vm1990 = vmor %vm1988, %vm1989
        %v1991 = vsel %vm1990, %v1982, %v1987
        %v1992 = vmul.f32 %v1721, %v1841
        %v1993 = vmul.f32 %v1724, %v1851
        %v1994 = vmul.f32 %v1727, %v1861
        %v1995 = vmul.f32 %v1730, %v1871
        %v1996 = vmul.f32 %v1733, %v1881
        %v1997 = vmul.f32 %v1736, %v1891
        %v1998 = vmul.f32 %v1739, %v1901
        %v1999 = vmul.f32 %v1742, %v1911
        %v2000 = vmul.f32 %v1745, %v1921
        %v2001 = vmul.f32 %v1748, %v1931
        %v2002 = vmul.f32 %v1751, %v1941
        %v2003 = vmul.f32 %v1754, %v1951
        %v2004 = vmul.f32 %v1757, %v1961
        %v2005 = vmul.f32 %v1760, %v1971
        %v2006 = vmul.f32 %v1763, %v1981
        %v2007 = vmul.f32 %v1766, %v1991
        %v2008 = vpack.c.bf16 %v1992, %v1992
        %v2009 = vpack.c.bf16 %v1993, %v1993
        %v2010 = vpack.c.bf16 %v1994, %v1994
        %v2011 = vpack.c.bf16 %v1995, %v1995
        %v2012 = vpack.c.bf16 %v1996, %v1996
        %v2013 = vpack.c.bf16 %v1997, %v1997
        %v2014 = vpack.c.bf16 %v1998, %v1998
        %v2015 = vpack.c.bf16 %v1999, %v1999
        %v2016 = vpack.c.bf16 %v2000, %v2000
        %v2017 = vpack.c.bf16 %v2001, %v2001
        %v2018 = vpack.c.bf16 %v2002, %v2002
        %v2019 = vpack.c.bf16 %v2003, %v2003
        %v2020 = vpack.c.bf16 %v2004, %v2004
        %v2021 = vpack.c.bf16 %v2005, %v2005
        %v2022 = vpack.c.bf16 %v2006, %v2006
        %v2023 = vpack.c.bf16 %v2007, %v2007
        %2024 = vst [vmem:[%s494] sm:$0xf] %v2008
        %2025 = vst [vmem:[%s494 + $0x4] sm:$0xf] %v2009
        %2026 = vst [vmem:[%s494 + $0x8] sm:$0xf] %v2010
        %2027 = vst [vmem:[%s494 + $0xc] sm:$0xf] %v2011
        %2028 = vst [vmem:[%s494 + $0x10] sm:$0xf] %v2012
        %2029 = vst [vmem:[%s494 + $0x14] sm:$0xf] %v2013
        %2030 = vst [vmem:[%s494 + $0x18] sm:$0xf] %v2014
        %2031 = vst [vmem:[%s494 + $0x1c] sm:$0xf] %v2015
        %2032 = vst [vmem:[%s494 + $0x20] sm:$0xf] %v2016
        %2033 = vst [vmem:[%s494 + $0x24] sm:$0xf] %v2017
        %2034 = vst [vmem:[%s494 + $0x28] sm:$0xf] %v2018
        %2035 = vst [vmem:[%s494 + $0x2c] sm:$0xf] %v2019
        %2036 = vst [vmem:[%s494 + $0x30] sm:$0xf] %v2020
        %2037 = vst [vmem:[%s494 + $0x34] sm:$0xf] %v2021
        %2038 = vst [vmem:[%s494 + $0x38] sm:$0xf] %v2022
        %2039 = vst [vmem:[%s494 + $0x3c] sm:$0xf] %v2023
        %v2040 = vld [vmem:[#allocation8] sm:$0xff]
        %v2041 = vld [vmem:[#allocation8 + $0x8] sm:$0xff]
        %v2042 = vld [vmem:[#allocation8 + $0x10] sm:$0xff]
        %v2043 = vld [vmem:[#allocation8 + $0x18] sm:$0xff]
        %v2044 = vld [vmem:[#allocation8 + $0x20] sm:$0xff]
        %v2045 = vld [vmem:[#allocation8 + $0x28] sm:$0xff]
        %v2046 = vld [vmem:[#allocation8 + $0x30] sm:$0xff]
        %v2047 = vld [vmem:[#allocation8 + $0x38] sm:$0xff]
        %v2048 = vld [vmem:[#allocation8 + $0x40] sm:$0xff]
        %v2049 = vld [vmem:[#allocation8 + $0x48] sm:$0xff]
        %v2050 = vld [vmem:[#allocation8 + $0x50] sm:$0xff]
        %v2051 = vld [vmem:[#allocation8 + $0x58] sm:$0xff]
        %v2052 = vld [vmem:[#allocation8 + $0x60] sm:$0xff]
        %v2053 = vld [vmem:[#allocation8 + $0x68] sm:$0xff]
        %v2054 = vld [vmem:[#allocation8 + $0x70] sm:$0xff]
        %v2055 = vld [vmem:[#allocation8 + $0x78] sm:$0xff]
        %v2056 = vld [vmem:[%s8] sm:$0x1]
        %v2058 = vperm.slane %v2056, 0
        %2060 = vmatpush.msra.mxu0 %v2055
        %2061 = vmatpush.msra.mxu0 %v2054
        %2062 = vmatpush.msra.mxu0 %v2053
        %2063 = vmatpush.msra.mxu0 %v2052
        %2064 = vmatpush.msra.mxu0 %v2051
        %2065 = vmatpush.msra.mxu0 %v2050
        %2066 = vmatpush.msra.mxu0 %v2049
        %2067 = vmatpush.msra.mxu0 %v2048
        %2068 = vmatpush.msra.mxu0 %v2047
        %2069 = vmatpush.msra.mxu0 %v2046
        %2070 = vmatpush.msra.mxu0 %v2045
        %2071 = vmatpush.msra.mxu0 %v2044
        %2072 = vmatpush.msra.mxu0 %v2043
        %2073 = vmatpush.msra.mxu0 %v2042
        %2074 = vmatpush.msra.mxu0 %v2041
        %2075 = vmatpush.msra.mxu0 %v2040
        %2076 = vmatmul.f32.gmra.mxu0 %v1721
        %v2077 = vpop.f32.mrf.mxu0
        %v2078 = vadd.f32 %v2058, %v2077
        %2079 = vmatmul.f32.gmra.mxu0 %v1724
        %v2080 = vpop.f32.mrf.mxu0
        %v2081 = vadd.f32 %v2058, %v2080
        %2082 = vmatmul.f32.gmra.mxu0 %v1727
        %v2083 = vpop.f32.mrf.mxu0
        %v2084 = vadd.f32 %v2058, %v2083
        %2085 = vmatmul.f32.gmra.mxu0 %v1730
        %v2086 = vpop.f32.mrf.mxu0
        %v2087 = vadd.f32 %v2058, %v2086
        %2088 = vmatmul.f32.gmra.mxu0 %v1733
        %v2089 = vpop.f32.mrf.mxu0
        %v2090 = vadd.f32 %v2058, %v2089
        %2091 = vmatmul.f32.gmra.mxu0 %v1736
        %v2092 = vpop.f32.mrf.mxu0
        %v2093 = vadd.f32 %v2058, %v2092
        %2094 = vmatmul.f32.gmra.mxu0 %v1739
        %v2095 = vpop.f32.mrf.mxu0
        %v2096 = vadd.f32 %v2058, %v2095
        %2097 = vmatmul.f32.gmra.mxu0 %v1742
        %v2098 = vpop.f32.mrf.mxu0
        %v2099 = vadd.f32 %v2058, %v2098
        %2100 = vmatmul.f32.gmra.mxu0 %v1745
        %v2101 = vpop.f32.mrf.mxu0
        %v2102 = vadd.f32 %v2058, %v2101
        %2103 = vmatmul.f32.gmra.mxu0 %v1748
        %v2104 = vpop.f32.mrf.mxu0
        %v2105 = vadd.f32 %v2058, %v2104
        %2106 = vmatmul.f32.gmra.mxu0 %v1751
        %v2107 = vpop.f32.mrf.mxu0
        %v2108 = vadd.f32 %v2058, %v2107
        %2109 = vmatmul.f32.gmra.mxu0 %v1754
        %v2110 = vpop.f32.mrf.mxu0
        %v2111 = vadd.f32 %v2058, %v2110
        %2112 = vmatmul.f32.gmra.mxu0 %v1757
        %v2113 = vpop.f32.mrf.mxu0
        %v2114 = vadd.f32 %v2058, %v2113
        %2115 = vmatmul.f32.gmra.mxu0 %v1760
        %v2116 = vpop.f32.mrf.mxu0
        %v2117 = vadd.f32 %v2058, %v2116
        %2118 = vmatmul.f32.gmra.mxu0 %v1763
        %v2119 = vpop.f32.mrf.mxu0
        %v2120 = vadd.f32 %v2058, %v2119
        %2121 = vmatmul.f32.gmra.mxu0 %v1766
        %v2122 = vpop.f32.mrf.mxu0
        %v2123 = vadd.f32 %v2058, %v2122
        %2124 = vdwg.mxu0
        %v2125 = vld [vmem:[%s10] sm:$0x1]
        %v2127 = vperm.slane %v2125, 0
        %v2129 = vadd.f32 %v2078, %v2127
        %v2130 = vadd.f32 %v2081, %v2127
        %v2131 = vadd.f32 %v2084, %v2127
        %v2132 = vadd.f32 %v2087, %v2127
        %v2133 = vadd.f32 %v2090, %v2127
        %v2134 = vadd.f32 %v2093, %v2127
        %v2135 = vadd.f32 %v2096, %v2127
        %v2136 = vadd.f32 %v2099, %v2127
        %v2137 = vadd.f32 %v2102, %v2127
        %v2138 = vadd.f32 %v2105, %v2127
        %v2139 = vadd.f32 %v2108, %v2127
        %v2140 = vadd.f32 %v2111, %v2127
        %v2141 = vadd.f32 %v2114, %v2127
        %v2142 = vadd.f32 %v2117, %v2127
        %v2143 = vadd.f32 %v2120, %v2127
        %v2144 = vadd.f32 %v2123, %v2127
        %2145 = vmax.xlane.f32.xlu0 %v2129
        %v2146 = vpop.xlane.xlu0 %2145
        %2147 = vmax.xlane.f32.xlu0 %v2130
        %v2148 = vpop.xlane.xlu0 %2147
        %2149 = vmax.xlane.f32.xlu0 %v2131
        %v2150 = vpop.xlane.xlu0 %2149
        %2151 = vmax.xlane.f32.xlu0 %v2132
        %v2152 = vpop.xlane.xlu0 %2151
        %2153 = vmax.xlane.f32.xlu0 %v2133
        %v2154 = vpop.xlane.xlu0 %2153
        %2155 = vmax.xlane.f32.xlu0 %v2134
        %v2156 = vpop.xlane.xlu0 %2155
        %2157 = vmax.xlane.f32.xlu0 %v2135
        %v2158 = vpop.xlane.xlu0 %2157
        %2159 = vmax.xlane.f32.xlu0 %v2136
        %v2160 = vpop.xlane.xlu0 %2159
        %2161 = vmax.xlane.f32.xlu0 %v2137
        %v2162 = vpop.xlane.xlu0 %2161
        %2163 = vmax.xlane.f32.xlu0 %v2138
        %v2164 = vpop.xlane.xlu0 %2163
        %2165 = vmax.xlane.f32.xlu0 %v2139
        %v2166 = vpop.xlane.xlu0 %2165
        %2167 = vmax.xlane.f32.xlu0 %v2140
        %v2168 = vpop.xlane.xlu0 %2167
        %2169 = vmax.xlane.f32.xlu0 %v2141
        %v2170 = vpop.xlane.xlu0 %2169
        %2171 = vmax.xlane.f32.xlu0 %v2142
        %v2172 = vpop.xlane.xlu0 %2171
        %2173 = vmax.xlane.f32.xlu0 %v2143
        %v2174 = vpop.xlane.xlu0 %2173
        %2175 = vmax.xlane.f32.xlu0 %v2144
        %v2176 = vpop.xlane.xlu0 %2175
        %v2177 = vsub.f32 %v2129, %v2146
        %v2178 = vsub.f32 %v2130, %v2148
        %v2179 = vsub.f32 %v2131, %v2150
        %v2180 = vsub.f32 %v2132, %v2152
        %v2181 = vsub.f32 %v2133, %v2154
        %v2182 = vsub.f32 %v2134, %v2156
        %v2183 = vsub.f32 %v2135, %v2158
        %v2184 = vsub.f32 %v2136, %v2160
        %v2185 = vsub.f32 %v2137, %v2162
        %v2186 = vsub.f32 %v2138, %v2164
        %v2187 = vsub.f32 %v2139, %v2166
        %v2188 = vsub.f32 %v2140, %v2168
        %v2189 = vsub.f32 %v2141, %v2170
        %v2190 = vsub.f32 %v2142, %v2172
        %v2191 = vsub.f32 %v2143, %v2174
        %v2192 = vsub.f32 %v2144, %v2176
        %v2193 = vmul.f32 %v2177, 1.442695
        %v2194 = vpow.pop %v2193
        %v2195 = vmul.f32 %v2178, 1.442695
        %v2196 = vpow.pop %v2195
        %v2197 = vmul.f32 %v2179, 1.442695
        %v2198 = vpow.pop %v2197
        %v2199 = vmul.f32 %v2180, 1.442695
        %v2200 = vpow.pop %v2199
        %v2201 = vmul.f32 %v2181, 1.442695
        %v2202 = vpow.pop %v2201
        %v2203 = vmul.f32 %v2182, 1.442695
        %v2204 = vpow.pop %v2203
        %v2205 = vmul.f32 %v2183, 1.442695
        %v2206 = vpow.pop %v2205
        %v2207 = vmul.f32 %v2184, 1.442695
        %v2208 = vpow.pop %v2207
        %v2209 = vmul.f32 %v2185, 1.442695
        %v2210 = vpow.pop %v2209
        %v2211 = vmul.f32 %v2186, 1.442695
        %v2212 = vpow.pop %v2211
        %v2213 = vmul.f32 %v2187, 1.442695
        %v2214 = vpow.pop %v2213
        %v2215 = vmul.f32 %v2188, 1.442695
        %v2216 = vpow.pop %v2215
        %v2217 = vmul.f32 %v2189, 1.442695
        %v2218 = vpow.pop %v2217
        %v2219 = vmul.f32 %v2190, 1.442695
        %v2220 = vpow.pop %v2219
        %v2221 = vmul.f32 %v2191, 1.442695
        %v2222 = vpow.pop %v2221
        %v2223 = vmul.f32 %v2192, 1.442695
        %v2224 = vpow.pop %v2223
        %2225 = vadd.xlane.f32.xlu0 %v2194
        %v2226 = vpop.xlane.xlu0 %2225
        %2227 = vadd.xlane.f32.xlu0 %v2196
        %v2228 = vpop.xlane.xlu0 %2227
        %2229 = vadd.xlane.f32.xlu0 %v2198
        %v2230 = vpop.xlane.xlu0 %2229
        %2231 = vadd.xlane.f32.xlu0 %v2200
        %v2232 = vpop.xlane.xlu0 %2231
        %2233 = vadd.xlane.f32.xlu0 %v2202
        %v2234 = vpop.xlane.xlu0 %2233
        %2235 = vadd.xlane.f32.xlu0 %v2204
        %v2236 = vpop.xlane.xlu0 %2235
        %2237 = vadd.xlane.f32.xlu0 %v2206
        %v2238 = vpop.xlane.xlu0 %2237
        %2239 = vadd.xlane.f32.xlu0 %v2208
        %v2240 = vpop.xlane.xlu0 %2239
        %2241 = vadd.xlane.f32.xlu0 %v2210
        %v2242 = vpop.xlane.xlu0 %2241
        %2243 = vadd.xlane.f32.xlu0 %v2212
        %v2244 = vpop.xlane.xlu0 %2243
        %2245 = vadd.xlane.f32.xlu0 %v2214
        %v2246 = vpop.xlane.xlu0 %2245
        %2247 = vadd.xlane.f32.xlu0 %v2216
        %v2248 = vpop.xlane.xlu0 %2247
        %2249 = vadd.xlane.f32.xlu0 %v2218
        %v2250 = vpop.xlane.xlu0 %2249
        %2251 = vadd.xlane.f32.xlu0 %v2220
        %v2252 = vpop.xlane.xlu0 %2251
        %2253 = vadd.xlane.f32.xlu0 %v2222
        %v2254 = vpop.xlane.xlu0 %2253
        %2255 = vadd.xlane.f32.xlu0 %v2224
        %v2256 = vpop.xlane.xlu0 %2255
        %v2257 = vlog2.pop %v2226
        %v2258 = vmul.f32 %v2257, 0.6931472
        %v2259 = vlog2.pop %v2228
        %v2260 = vmul.f32 %v2259, 0.6931472
        %v2261 = vlog2.pop %v2230
        %v2262 = vmul.f32 %v2261, 0.6931472
        %v2263 = vlog2.pop %v2232
        %v2264 = vmul.f32 %v2263, 0.6931472
        %v2265 = vlog2.pop %v2234
        %v2266 = vmul.f32 %v2265, 0.6931472
        %v2267 = vlog2.pop %v2236
        %v2268 = vmul.f32 %v2267, 0.6931472
        %v2269 = vlog2.pop %v2238
        %v2270 = vmul.f32 %v2269, 0.6931472
        %v2271 = vlog2.pop %v2240
        %v2272 = vmul.f32 %v2271, 0.6931472
        %v2273 = vlog2.pop %v2242
        %v2274 = vmul.f32 %v2273, 0.6931472
        %v2275 = vlog2.pop %v2244
        %v2276 = vmul.f32 %v2275, 0.6931472
        %v2277 = vlog2.pop %v2246
        %v2278 = vmul.f32 %v2277, 0.6931472
        %v2279 = vlog2.pop %v2248
        %v2280 = vmul.f32 %v2279, 0.6931472
        %v2281 = vlog2.pop %v2250
        %v2282 = vmul.f32 %v2281, 0.6931472
        %v2283 = vlog2.pop %v2252
        %v2284 = vmul.f32 %v2283, 0.6931472
        %v2285 = vlog2.pop %v2254
        %v2286 = vmul.f32 %v2285, 0.6931472
        %v2287 = vlog2.pop %v2256
        %v2288 = vmul.f32 %v2287, 0.6931472
        %v2289 = vsub.f32 %v2177, %v2258
        %v2290 = vsub.f32 %v2178, %v2260
        %v2291 = vsub.f32 %v2179, %v2262
        %v2292 = vsub.f32 %v2180, %v2264
        %v2293 = vsub.f32 %v2181, %v2266
        %v2294 = vsub.f32 %v2182, %v2268
        %v2295 = vsub.f32 %v2183, %v2270
        %v2296 = vsub.f32 %v2184, %v2272
        %v2297 = vsub.f32 %v2185, %v2274
        %v2298 = vsub.f32 %v2186, %v2276
        %v2299 = vsub.f32 %v2187, %v2278
        %v2300 = vsub.f32 %v2188, %v2280
        %v2301 = vsub.f32 %v2189, %v2282
        %v2302 = vsub.f32 %v2190, %v2284
        %v2303 = vsub.f32 %v2191, %v2286
        %v2304 = vsub.f32 %v2192, %v2288
        %2305 = vst [vmem:[%s487] sm:$0xff] %v2289
        %2306 = vst [vmem:[%s487 + $0x8] sm:$0xff] %v2290
        %2307 = vst [vmem:[%s487 + $0x10] sm:$0xff] %v2291
        %2308 = vst [vmem:[%s487 + $0x18] sm:$0xff] %v2292
        %2309 = vst [vmem:[%s487 + $0x20] sm:$0xff] %v2293
        %2310 = vst [vmem:[%s487 + $0x28] sm:$0xff] %v2294
        %2311 = vst [vmem:[%s487 + $0x30] sm:$0xff] %v2295
        %2312 = vst [vmem:[%s487 + $0x38] sm:$0xff] %v2296
        %2313 = vst [vmem:[%s487 + $0x40] sm:$0xff] %v2297
        %2314 = vst [vmem:[%s487 + $0x48] sm:$0xff] %v2298
        %2315 = vst [vmem:[%s487 + $0x50] sm:$0xff] %v2299
        %2316 = vst [vmem:[%s487 + $0x58] sm:$0xff] %v2300
        %2317 = vst [vmem:[%s487 + $0x60] sm:$0xff] %v2301
        %2318 = vst [vmem:[%s487 + $0x68] sm:$0xff] %v2302
        %2319 = vst [vmem:[%s487 + $0x70] sm:$0xff] %v2303
        %2320 = vst [vmem:[%s487 + $0x78] sm:$0xff] %v2304
        %s2321 = sand.u32 %s279, 1
        %s2322 = scalar_lea.sflag [#allocation4], %s2321
        %s2323 = sand.u32 %s279, 1
        %s2324 = smul.addr %s2323, 128
        %s2325 = scalar_lea.vmem [#allocation10], %s2324
        %s2326 = sand.u32 %s305, 1
        %s2327 = scalar_lea.sflag [#allocation12], %s2326
        %s2328 = sand.u32 %s305, 1
        %s2329 = smul.addr %s2328, 64
        %s2330 = scalar_lea.vmem [#allocation11], %s2329
        // Predicated region
        $region81: #{tpu_custom_call.1} parent=63 // pred_check
          %p2331 = pneg %p289
        $region82: #{tpu_custom_call.1} parent=63 // pred_check_branch
          %2333 = sbr.rel (%p2331) target = $region84
        $region83: #{tpu_custom_call.1} parent=63 // pred_region
          %s2334 = smul.u32 16, %s35
          %2336 = vsyncadd %s2322, 0
          %s2337 = smul.addr %s2334, 8
          %s2338 = scalar_lea.hbm %s11, %s2337
          %s2339 = sshll.u32 %s2325, 4
          %s2340 = int_to_ptr.vmem [resolvable:$true] %s2339
          %s2341 = sshll.u32 %s2338, 4
          %s2342 = int_to_ptr.hbm [resolvable:$true] %s2341
          %2347 = dma.vmem_to_hbm [thread:$0]  %s2340, 2048, %s2342, %s2322, 128, 128, 8
        $region84: #{tpu_custom_call.1} parent=63 // pred_fallthru
          _
        // Predicated region
        $region85: #{tpu_custom_call.1} parent=63 // pred_check
          %p2348 = pneg %p315
        $region86: #{tpu_custom_call.1} parent=63 // pred_check_branch
          %2350 = sbr.rel (%p2348) target = $region88
        $region87: #{tpu_custom_call.1} parent=63 // pred_region
          %s2351 = smul.u32 16, %s35
          %2353 = vsyncadd %s2327, 0
          %s2354 = smul.addr %s2351, 4
          %s2355 = scalar_lea.hbm %s12, %s2354
          %s2356 = sshll.u32 %s2330, 4
          %s2357 = int_to_ptr.vmem [resolvable:$true] %s2356
          %s2358 = sshll.u32 %s2355, 4
          %s2359 = int_to_ptr.hbm [resolvable:$true] %s2358
          %2364 = dma.vmem_to_hbm [thread:$0]  %s2357, 1024, %s2359, %s2327, 64, 64, 4
        $region88: #{tpu_custom_call.1} parent=63 // pred_fallthru
          _
      $region64: #{tpu_custom_call.1} parent=5 // pred_fallthru
        _
      %p2365 = scmp.le.s32.totalorder 2, %s30
      // Predicated region
      $region89: #{tpu_custom_call.1} parent=5 // pred_check
        %p2366 = pneg %p2365
      $region90: #{tpu_custom_call.1} parent=5 // pred_check_branch
        %2368 = sbr.rel (%p2366) target = $region92
      $region91: #{tpu_custom_call.1} parent=5 // pred_region
        %s2369 = ssub.s32 %s30, 2
        // Predicated region
        $region93: #{tpu_custom_call.1} parent=91 // pred_check
          %p2370 = pneg %p295
        $region94: #{tpu_custom_call.1} parent=91 // pred_check_branch
          %2372 = sbr.rel (%p2370) target = $region96
        $region95: #{tpu_custom_call.1} parent=91 // pred_region
          %s2373 = sand.u32 %s280, 1
          %s2374 = scalar_lea.sflag [#allocation4], %s2373
          %s2375 = sand.u32 %s280, 1
          %s2376 = smul.addr %s2375, 128
          %s2377 = scalar_lea.vmem [#allocation10], %s2376
          %2379 = dma.done %s2374, 2048
        $region96: #{tpu_custom_call.1} parent=91 // pred_fallthru
          _
        // Predicated region
        $region97: #{tpu_custom_call.1} parent=91 // pred_check
          %p2380 = pneg %p321
        $region98: #{tpu_custom_call.1} parent=91 // pred_check_branch
          %2382 = sbr.rel (%p2380) target = $region100
        $region99: #{tpu_custom_call.1} parent=91 // pred_region
          %s2383 = sand.u32 %s306, 1
          %s2384 = scalar_lea.sflag [#allocation12], %s2383
          %s2385 = sand.u32 %s306, 1
          %s2386 = smul.addr %s2385, 64
          %s2387 = scalar_lea.vmem [#allocation11], %s2386
          %2389 = dma.done %s2384, 1024
        $region100: #{tpu_custom_call.1} parent=91 // pred_fallthru
          _
      $region92: #{tpu_custom_call.1} parent=5 // pred_fallthru
        _
    $region6: #{tpu_custom_call.1} parent=1 // loop_footer
      %s34 = sadd.s32 1, %s30
    $region7: #{tpu_custom_call.1} parent=1 // loop_footer_branch
      %29 = sbr.rel target = $region3
    $region8: #{tpu_custom_call.1} parent=1 // loop_exit
      _
    %2390 = vsyncpa [#allocation3], 1
    %s2391 = scalar_lea.sflag [#allocation3], 1
    %2392 = vsyncpa %s2391, 1
    %2393 = vsyncpa [#allocation6], 1
    %2394 = vsyncpa [#allocation9], 1
    %2395 = vsyncpa [#allocation4], 1
    %s2396 = scalar_lea.sflag [#allocation4], 1
    %2397 = vsyncpa %s2396, 1
    %2398 = vsyncpa [#allocation12], 1
    %s2399 = scalar_lea.sflag [#allocation12], 1
    %2400 = vsyncpa %s2399, 1

</llo_original>
